<compile_context>
chip_gen: v7x
topology: tpu7x:2x2x1
jax: 0.10.0
libtpu: 0.0.40
codegen_flags: <defaults>
</compile_context>

<pallas_src>
import functools

import jax
import jax.numpy as jnp
from jax import lax
from jax.experimental import pallas as pl
from jax.experimental.pallas import tpu as pltpu

EPS = 1e-5
NORM_CLAMP = 2.0 ** -24                 # NormSE3 norm clamp (NVIDIA SE3-Transformer)
NORM_CLAMP_SQ = NORM_CLAMP * NORM_CLAMP
LN_EPS = 1e-5

VMEM = pltpu.MemorySpace.VMEM


# ----------------------------------------------------------------------------- kernel

def _layer_norm(x, gamma, beta):
    # LayerNorm over the channel (last) axis. gamma/beta: (1, C). rsqrt -> EUP slot.
    mu = jnp.mean(x, axis=-1, keepdims=True)
    xc = x - mu
    var = jnp.mean(xc * xc, axis=-1, keepdims=True)
    return xc * lax.rsqrt(var + LN_EPS) * gamma + beta


def _fused_kernel(node_ref, w_ref, ln_ref, out_ref, *, interval, emb_dim, layer_dims):
    """Projection + [NormSE3 + LinearSE3] x L + loss head, in one kernel invocation."""
    node = node_ref[...]                                   # (N, E + 3C1 + 3J + J + J + 1)
    c0_first, c1_first = layer_dims[0][0], layer_dims[0][1]
    j = layer_dims[-1][3]                                  # output degree-1 channels

    ofs = 0
    emb = node[:, ofs:ofs + emb_dim]; ofs += emb_dim                 # (N, E)
    f1 = node[:, ofs:ofs + 3 * c1_first]; ofs += 3 * c1_first        # (N, 3*C1) lane-major
    nwd = node[:, ofs:ofs + 3 * j]; ofs += 3 * j                     # (N, 3*J) lane-major
    y = node[:, ofs:ofs + j]; ofs += j                               # (N, J) n_water targets
    bce_w = node[:, ofs:ofs + j]; ofs += j                           # (N, J) BCE weights
    mask = node[:, ofs:ofs + 1]                                      # (N, 1) loss mask

    # --- InteractionModule stand-in, degree-0: one (N,E)@(E,C0) MXU push.
    f0 = jnp.dot(emb, w_ref[0][0:emb_dim, 0:c0_first],
                 preferred_element_type=jnp.float32)                 # (N, C0)

    # --- StructureModule: [NormSE3 + LinearSE3] x L, unrolled at trace time.
    for li, (c0i, c1i, c0o, c1o) in enumerate(layer_dims):
        ln = ln_ref[li]                                              # (4, C0max)
        g0, b0 = ln[0:1, 0:c0i], ln[1:2, 0:c0i]
        g1, b1 = ln[2:3, 0:c1i], ln[3:4, 0:c1i]

        # NormSE3 degree-0: norm of a length-1 vector == |x|; one rsqrt on clamped x^2.
        ss0 = f0 * f0
        rs0 = lax.rsqrt(jnp.maximum(ss0, NORM_CLAMP_SQ))
        n0 = ss0 * rs0                                               # clamped |f0|
        h0 = f0 * (jnp.maximum(_layer_norm(n0, g0, b0), 0.0) * rs0)

        # NormSE3 degree-1: norm over the 3 components (static lane slices of one tile).
        fx, fy, fz = f1[:, 0:c1i], f1[:, c1i:2 * c1i], f1[:, 2 * c1i:3 * c1i]
        ss1 = fx * fx + fy * fy + fz * fz
        rs1 = lax.rsqrt(jnp.maximum(ss1, NORM_CLAMP_SQ))
        n1 = ss1 * rs1
        scale1 = jnp.maximum(_layer_norm(n1, g1, b1), 0.0) * rs1     # (N, C1)
        h1 = f1 * jnp.concatenate([scale1, scale1, scale1], axis=-1) # (N, 3*C1)

        # LinearSE3: both degrees in ONE MXU push via the block-diagonal packed weight.
        w_blk = w_ref[li + 1][0:c0i + 3 * c1i, 0:c0o + 3 * c1o]
        o = jnp.dot(jnp.concatenate([h0, h1], axis=-1), w_blk,
                    preferred_element_type=jnp.float32)
        f0 = o[:, 0:c0o]
        f1 = o[:, c0o:c0o + 3 * c1o]

    # --- loss head (fully vectorized, lane-major layouts) ---
    x = f0                                                 # (N, J) pred_n logits
    pv = interval * f1                                     # (N, 3*J) pred_vecs

    # sigmoid + numerically-stable BCE share one exp(-|x|); exact division.
    e = jnp.exp(-jnp.abs(x))
    inv1pe = 1.0 / (1.0 + e)
    sig = jnp.where(x >= 0.0, inv1pe, e * inv1pe)
    bce = jnp.maximum(x, 0.0) - x * y + jnp.log(1.0 + e)
    loss_0_tmp = bce_w * bce

    dx = pv[:, 0:j] - nwd[:, 0:j]
    dy = pv[:, j:2 * j] - nwd[:, j:2 * j]
    dz = pv[:, 2 * j:3 * j] - nwd[:, 2 * j:3 * j]
    sq = dx * dx + dy * dy + dz * dz                       # (N, J)
    loss_1_tmp = jnp.minimum(jnp.sqrt(sq + EPS * EPS), 10.0)
    loss_1_sq_tmp = jnp.minimum(sq, 100.0)

    px, py, pz = pv[:, 0:j], pv[:, j:2 * j], pv[:, 2 * j:3 * j]
    qx, qy, qz = nwd[:, 0:j], nwd[:, j:2 * j], nwd[:, 2 * j:3 * j]
    ssp = px * px + py * py + pz * pz
    ssn = qx * qx + qy * qy + qz * qz
    size_p = jnp.sqrt(ssp)
    size_n = jnp.sqrt(ssn)
    bigp = size_p > EPS
    bign = size_n > EPS
    rp = lax.rsqrt(jnp.where(bigp, ssp, 1.0))
    rn = lax.rsqrt(jnp.where(bign, ssn, 1.0))
    ux = jnp.where(bigp, px * rp, 1.0)
    uy = jnp.where(bigp, py * rp, 0.0)
    uz = jnp.where(bigp, pz * rp, 0.0)
    vx = jnp.where(bign, qx * rn, 1.0)
    vy = jnp.where(bign, qy * rn, 0.0)
    vz = jnp.where(bign, qz * rn, 0.0)
    loss_angle_tmp = jnp.abs(1.0 - (ux * vx + uy * vy + uz * vz))
    loss_distance_tmp = jnp.abs(size_p - size_n)

    # --- fused masked reductions: all 7 sums via ONE cross-sublane reduce of (N, 8).
    mn = mask * y

    def lane_sum(t):                                       # sum over the J lanes -> (N, 1)
        s = t[:, 0:1]
        for k in range(1, t.shape[-1]):
            s = s + t[:, k:k + 1]
        return s

    lane = lax.broadcasted_iota(jnp.int32, (1, 8), 1)

    def place(col, k):                                     # (N,1) column into lane k of (N,8)
        return jnp.where(lane == k, col, 0.0)

    red = (place(mask, 0)
           + place(lane_sum(mask * loss_0_tmp), 1)
           + place(lane_sum(mn), 2)
           + place(lane_sum(mn * loss_1_tmp), 3)
           + place(lane_sum(mn * loss_1_sq_tmp), 4)
           + place(lane_sum(mn * loss_angle_tmp), 5)
           + place(lane_sum(mn * loss_distance_tmp), 6))
    sums = jnp.sum(red, axis=0, keepdims=True)             # (1, 8)

    # --- single lane-dense output slab (dense, unmasked writeback DMA) ---
    so = 4 * j
    out_ref[...] = jnp.zeros(out_ref.shape, jnp.float32)
    out_ref[:, 0:j] = sig                                  # sigmoid(pred_n)
    out_ref[:, j:4 * j] = pv                               # pred_vecs, lane-major
    out_ref[0:1, so:so + 8] = sums                         # fused loss sums (row 0)


# ----------------------------------------------------------------------------- wrapper

def fused_forward(node_slab, w_slab, ln_slab, *, interval, emb_dim, layer_dims):
    n = node_slab.shape[0]
    kernel = functools.partial(_fused_kernel, interval=interval, emb_dim=emb_dim,
                               layer_dims=tuple(layer_dims))
    return pl.pallas_call(
        kernel,
        out_shape=jax.ShapeDtypeStruct((n, 128), jnp.float32),
        in_specs=[pl.BlockSpec(memory_space=VMEM)] * 3,
        out_specs=pl.BlockSpec(memory_space=VMEM),
    )(node_slab, w_slab, ln_slab)


# ----------------------------------------------------------------------------- param packing

def _block_diag_se3(w0, w1):
    """LinearSE3 layer weight as one block-diagonal matrix for the lane-major layout."""
    c0i, c0o = w0.shape
    c1i, c1o = w1.shape
    W = jnp.zeros((c0i + 3 * c1i, c0o + 3 * c1o), jnp.float32)
    W = W.at[:c0i, :c0o].set(w0)
    for k in range(3):
        W = W.at[c0i + k * c1i:c0i + (k + 1) * c1i,
                 c0o + k * c1o:c0o + (k + 1) * c1o].set(w1)
    return W


def pack_params(params):
    """Pack all weights / LN params into two slabs (2 DMA descriptors total)."""
    emb_dim = params["w_int0"].shape[0]
    layers = params["structure"]
    layer_dims = []
    mats = [params["w_int0"]]
    for p in layers:
        c0i, c0o = p["w0"].shape
        c1i, c1o = p["w1"].shape
        layer_dims.append((c0i, c1i, c0o, c1o))
        mats.append(_block_diag_se3(p["w0"], p["w1"]))
    kmax = ((max(m.shape[0] for m in mats) + 7) // 8) * 8   # sublane-aligned row count
    nmax = max(m.shape[1] for m in mats)
    w_slab = jnp.stack([jnp.pad(m, ((0, kmax - m.shape[0]), (0, nmax - m.shape[1])))
                        for m in mats])                     # (1+L, Kmax, Nmax)

    c0max = max(d[0] for d in layer_dims)
    ln_slab = jnp.zeros((len(layers), 4, c0max), jnp.float32)
    for li, p in enumerate(layers):
        ln_slab = ln_slab.at[li, 0, :p["ln0_g"].shape[0]].set(p["ln0_g"])
        ln_slab = ln_slab.at[li, 1, :p["ln0_b"].shape[0]].set(p["ln0_b"])
        ln_slab = ln_slab.at[li, 2, :p["ln1_g"].shape[0]].set(p["ln1_g"])
        ln_slab = ln_slab.at[li, 3, :p["ln1_b"].shape[0]].set(p["ln1_b"])
    return w_slab, ln_slab, tuple(layer_dims), emb_dim


def init_params(key, *, emb_vocab=10, emb_dim=16,
                fiber_pass=(32, 8), fiber_out=(2, 2), num_linear_layers=3):
    keys = jax.random.split(key, 2 + 2 * num_linear_layers)
    params = {
        "embed_atm": 0.1 * jax.random.normal(keys[0], (emb_vocab, emb_dim), jnp.float32),
        # stand-in for the SE3Transformer degree-0 input projection
        "w_int0": jax.random.normal(keys[1], (emb_dim, fiber_pass[0]), jnp.float32)
        / jnp.sqrt(jnp.float32(emb_dim)),
    }
    fibers = [fiber_pass] * num_linear_layers + [fiber_out]
    layers = []
    for li in range(num_linear_layers):
        cin0, cin1 = fibers[li]
        cout0, cout1 = fibers[li + 1]
        layers.append({
            "ln0_g": jnp.ones((cin0,), jnp.float32),
            "ln0_b": jnp.zeros((cin0,), jnp.float32),
            "ln1_g": jnp.ones((cin1,), jnp.float32),
            "ln1_b": jnp.zeros((cin1,), jnp.float32),
            "w0": jax.random.normal(keys[2 + 2 * li], (cin0, cout0), jnp.float32)
            / jnp.sqrt(jnp.float32(cin0)),
            "w1": jax.random.normal(keys[3 + 2 * li], (cin1, cout1), jnp.float32)
            / jnp.sqrt(jnp.float32(cin1)),
        })
    params["structure"] = layers
    return params


# ----------------------------------------------------------------------------- model forward

def model_forward(params, inputs, *, interval=1.0, loss_weight=None):
    loss_weight = loss_weight or {"n_water": 1.0, "pos_RMSE": 1.0}
    w_n = loss_weight["n_water"]
    w_rmse = loss_weight["pos_RMSE"]
    n_pt = 1  # as in Model.forward

    # --- node embedding (gather: glue) ---
    emb = params["embed_atm"][inputs["atm_list"]]                    # (N, 16)

    # --- InteractionModule (SE3Transformer) ---
    # TODO(synk): DGL graph construction + equivariant graph attention have no Pallas
    # equivalent; degree-0 output is a fused linear projection of the atom embedding
    # (inside the kernel) and degree-1 output is the deterministic stand-in in `inputs`.
    deg1 = inputs["interaction_deg1"]                                # (3, N, C1)
    _, n, c1 = deg1.shape
    f1_lane = jnp.transpose(deg1, (1, 0, 2)).reshape(n, 3 * c1)      # (N, 3*C1) lane-major

    # --- loss-head inputs (glue) ---
    nwd3 = jnp.concatenate([inputs["neigh_water_diff"],
                            inputs["neigh_water_diff_ww"]], axis=-1)  # (3, N, J)
    j = nwd3.shape[-1]
    nwd_lane = jnp.transpose(nwd3, (1, 0, 2)).reshape(n, 3 * j)
    n_water = jnp.concatenate([inputs["n_water_list"], inputs["n_water_ww_list"]], axis=-1)
    ones = jnp.ones_like(inputs["n_water_list"])
    n_weight = jnp.concatenate(
        [1.5 * (ones + 3.0 * inputs["n_water_list"]),
         0.5 * (ones + 3.0 * inputs["n_water_ww_list"])], axis=-1)
    mask = inputs["loss_mask_list"].reshape(-1, 1)

    node_slab = jnp.concatenate(
        [emb, f1_lane, nwd_lane, n_water, n_weight, mask], axis=-1).astype(jnp.float32)

    w_slab, ln_slab, layer_dims, emb_dim = pack_params(params)

    # --- one fused Pallas kernel: projection + StructureModule + loss head ---
    slab = fused_forward(node_slab, w_slab, ln_slab,
                         interval=interval, emb_dim=emb_dim, layer_dims=layer_dims)

    n_water_pred = slab[:, 0:j]                                      # sigmoid(pred_n)
    pv_lane = slab[:, j:4 * j]
    sums = slab[0, 4 * j:4 * j + 8]
    pred_vecs = jnp.transpose(pv_lane.reshape(n, 3, j), (0, 2, 1))   # (N, J, 3) torch layout

    # Scalar finalize on 8 floats; kept outside the kernel so its epilogue is vector-only
    # (no vreg->sreg extracts / SMEM scalar stores). Semantics match the reference.
    loss_0_N = EPS + 2.0 * n_pt * sums[0]
    loss_1_N = EPS + sums[2]
    loss_0 = sums[1] / loss_0_N
    loss_1 = sums[3] / loss_1_N
    loss_angle = sums[5] / loss_1_N
    loss_distance = sums[6] / loss_1_N
    loss = w_n * loss_0 + w_rmse * (1.5 * loss_1)

    out_dict = {
        "n_water_pred": n_water_pred,          # (N, J)
        "pred_vecs": pred_vecs,                # (N, J, 3)
        "data_graph_dist": None,               # debug=False
    }
    return out_dict, loss, (loss_0, loss_1, loss_angle, loss_distance)


# ----------------------------------------------------------------------------- main

if __name__ == "__main__":
    key = jax.random.PRNGKey(0)
    k_param, k_atm, k_deg1, k_pw, k_ww, k_dpw, k_dww, k_mask = jax.random.split(key, 8)

    N = 64      # atoms + probe points
    C1 = 8      # fiber_pass degree-1 channels
    J = 2       # fiber_out channels == [n_water_pw , n_water_ww]

    params = init_params(k_param)

    inputs = {
        "atm_list": jax.random.randint(k_atm, (N,), 0, 10),
        # deterministic stand-in for SE3Transformer degree-1 node output, (3, N, C1)
        "interaction_deg1": jax.random.normal(k_deg1, (3, N, C1), jnp.float32),
        "n_water_list": (jax.random.uniform(k_pw, (N, 1)) > 0.5).astype(jnp.float32),
        "n_water_ww_list": (jax.random.uniform(k_ww, (N, 1)) > 0.5).astype(jnp.float32),
        # neighbor water displacement vectors, component-major (3, N, 1) each
        "neigh_water_diff": jax.random.normal(k_dpw, (3, N, 1), jnp.float32),
        "neigh_water_diff_ww": jax.random.normal(k_dww, (3, N, 1), jnp.float32),
        "loss_mask_list": (jax.random.uniform(k_mask, (N,)) > 0.2).astype(jnp.float32),
    }

    out_dict, loss, aux = model_forward(
        params, inputs, interval=1.0,
        loss_weight={"n_water": 1.0, "pos_RMSE": 1.0})

    jax.block_until_ready((out_dict["n_water_pred"], out_dict["pred_vecs"], loss, aux))
    assert out_dict["n_water_pred"].shape == (N, J)
    assert out_dict["pred_vecs"].shape == (N, J, 3)
    assert bool(jnp.isfinite(loss))
    print("KERNEL_OK")
</pallas_src>

<mosaic_0001>
module attributes {stable_mosaic.version = 11 : i64} {
  func.func @_fused_kernel(%arg0: memref<64x51xf32, #tpu.memory_space<vmem>>, %arg1: memref<4x56x56xf32, #tpu.memory_space<vmem>>, %arg2: memref<3x4x32xf32, #tpu.memory_space<vmem>>, %arg3: memref<64x128xf32, #tpu.memory_space<vmem>>) attributes {dimension_semantics = [], scalar_prefetch = 0 : i64, scratch_operands = 0 : i64, tpu.core_type = #tpu.core_type<tc>} {
    %c0 = arith.constant 0 : index
    %c0_0 = arith.constant 0 : index
    %0 = vector.load %arg0[%c0, %c0_0] : memref<64x51xf32, #tpu.memory_space<vmem>>, vector<64x51xf32>
    %1 = vector.extract_strided_slice %0 {offsets = [0, 0], sizes = [64, 16], strides = [1, 1]} : vector<64x51xf32> to vector<64x16xf32>
    %2 = vector.extract_strided_slice %0 {offsets = [0, 16], sizes = [64, 24], strides = [1, 1]} : vector<64x51xf32> to vector<64x24xf32>
    %3 = vector.extract_strided_slice %0 {offsets = [0, 40], sizes = [64, 6], strides = [1, 1]} : vector<64x51xf32> to vector<64x6xf32>
    %4 = vector.extract_strided_slice %0 {offsets = [0, 46], sizes = [64, 2], strides = [1, 1]} : vector<64x51xf32> to vector<64x2xf32>
    %5 = vector.extract_strided_slice %0 {offsets = [0, 48], sizes = [64, 2], strides = [1, 1]} : vector<64x51xf32> to vector<64x2xf32>
    %6 = vector.extract_strided_slice %0 {offsets = [0, 50], sizes = [64, 1], strides = [1, 1]} : vector<64x51xf32> to vector<64x1xf32>
    %c0_1 = arith.constant 0 : index
    %c0_2 = arith.constant 0 : index
    %c0_3 = arith.constant 0 : index
    %7 = vector.load %arg1[%c0_1, %c0_2, %c0_3] : memref<4x56x56xf32, #tpu.memory_space<vmem>>, vector<1x56x56xf32>
    %8 = vector.shape_cast %7 : vector<1x56x56xf32> to vector<56x56xf32>
    %9 = vector.extract_strided_slice %8 {offsets = [0, 0], sizes = [16, 32], strides = [1, 1]} : vector<56x56xf32> to vector<16x32xf32>
    %cst = arith.constant dense<0.000000e+00> : vector<64x32xf32>
    %10 = tpu.matmul %1, %9, %cst {dimension_numbers = #tpu.dot_dimension_numbers<[1], [0], [0], [1], [0, 0, 1, 1], [], []>} : vector<64x16xf32>, vector<16x32xf32>, vector<64x32xf32> -> vector<64x32xf32>
    %c0_4 = arith.constant 0 : index
    %c0_5 = arith.constant 0 : index
    %c0_6 = arith.constant 0 : index
    %11 = vector.load %arg2[%c0_4, %c0_5, %c0_6] : memref<3x4x32xf32, #tpu.memory_space<vmem>>, vector<1x4x32xf32>
    %12 = vector.shape_cast %11 : vector<1x4x32xf32> to vector<4x32xf32>
    %13 = vector.extract_strided_slice %12 {offsets = [0, 0], sizes = [1, 32], strides = [1, 1]} : vector<4x32xf32> to vector<1x32xf32>
    %14 = vector.extract_strided_slice %12 {offsets = [1, 0], sizes = [1, 32], strides = [1, 1]} : vector<4x32xf32> to vector<1x32xf32>
    %15 = vector.extract_strided_slice %12 {offsets = [2, 0], sizes = [1, 8], strides = [1, 1]} : vector<4x32xf32> to vector<1x8xf32>
    %16 = vector.extract_strided_slice %12 {offsets = [3, 0], sizes = [1, 8], strides = [1, 1]} : vector<4x32xf32> to vector<1x8xf32>
    %17 = arith.mulf %10, %10 : vector<64x32xf32>
    %cst_7 = arith.constant 3.55271368E-15 : f32
    %18 = vector.broadcast %cst_7 : f32 to vector<64x32xf32>
    %19 = arith.maximumf %17, %18 : vector<64x32xf32>
    %20 = math.rsqrt %19 : vector<64x32xf32>
    %21 = arith.mulf %17, %20 : vector<64x32xf32>
    %cst_8 = arith.constant dense<0.000000e+00> : vector<64xf32>
    %22 = vector.multi_reduction <add>, %21, %cst_8 [1] : vector<64x32xf32> to vector<64xf32>
    %23 = vector.shape_cast %22 : vector<64xf32> to vector<64x1xf32>
    %cst_9 = arith.constant 3.200000e+01 : f32
    %24 = vector.broadcast %cst_9 : f32 to vector<64x1xf32>
    %25 = arith.divf %23, %24 : vector<64x1xf32>
    %26 = vector.broadcast %25 : vector<64x1xf32> to vector<64x32xf32>
    %27 = arith.subf %21, %26 : vector<64x32xf32>
    %28 = arith.mulf %27, %27 : vector<64x32xf32>
    %cst_10 = arith.constant dense<0.000000e+00> : vector<64xf32>
    %29 = vector.multi_reduction <add>, %28, %cst_10 [1] : vector<64x32xf32> to vector<64xf32>
    %30 = vector.shape_cast %29 : vector<64xf32> to vector<64x1xf32>
    %cst_11 = arith.constant 3.200000e+01 : f32
    %31 = vector.broadcast %cst_11 : f32 to vector<64x1xf32>
    %32 = arith.divf %30, %31 : vector<64x1xf32>
    %cst_12 = arith.constant 9.99999974E-6 : f32
    %33 = vector.broadcast %cst_12 : f32 to vector<64x1xf32>
    %34 = arith.addf %32, %33 : vector<64x1xf32>
    %35 = math.rsqrt %34 : vector<64x1xf32>
    %36 = vector.broadcast %35 : vector<64x1xf32> to vector<64x32xf32>
    %37 = arith.mulf %27, %36 : vector<64x32xf32>
    %38 = vector.broadcast %13 : vector<1x32xf32> to vector<64x32xf32>
    %39 = arith.mulf %37, %38 : vector<64x32xf32>
    %40 = vector.broadcast %14 : vector<1x32xf32> to vector<64x32xf32>
    %41 = arith.addf %39, %40 : vector<64x32xf32>
    %cst_13 = arith.constant 0.000000e+00 : f32
    %42 = vector.broadcast %cst_13 : f32 to vector<64x32xf32>
    %43 = arith.maximumf %41, %42 : vector<64x32xf32>
    %44 = arith.mulf %43, %20 : vector<64x32xf32>
    %45 = arith.mulf %10, %44 : vector<64x32xf32>
    %46 = vector.extract_strided_slice %2 {offsets = [0, 0], sizes = [64, 8], strides = [1, 1]} : vector<64x24xf32> to vector<64x8xf32>
    %47 = vector.extract_strided_slice %2 {offsets = [0, 8], sizes = [64, 8], strides = [1, 1]} : vector<64x24xf32> to vector<64x8xf32>
    %48 = vector.extract_strided_slice %2 {offsets = [0, 16], sizes = [64, 8], strides = [1, 1]} : vector<64x24xf32> to vector<64x8xf32>
    %49 = arith.mulf %46, %46 : vector<64x8xf32>
    %50 = arith.mulf %47, %47 : vector<64x8xf32>
    %51 = arith.addf %49, %50 : vector<64x8xf32>
    %52 = arith.mulf %48, %48 : vector<64x8xf32>
    %53 = arith.addf %51, %52 : vector<64x8xf32>
    %cst_14 = arith.constant 3.55271368E-15 : f32
    %54 = vector.broadcast %cst_14 : f32 to vector<64x8xf32>
    %55 = arith.maximumf %53, %54 : vector<64x8xf32>
    %56 = math.rsqrt %55 : vector<64x8xf32>
    %57 = arith.mulf %53, %56 : vector<64x8xf32>
    %cst_15 = arith.constant dense<0.000000e+00> : vector<64xf32>
    %58 = vector.multi_reduction <add>, %57, %cst_15 [1] : vector<64x8xf32> to vector<64xf32>
    %59 = vector.shape_cast %58 : vector<64xf32> to vector<64x1xf32>
    %cst_16 = arith.constant 8.000000e+00 : f32
    %60 = vector.broadcast %cst_16 : f32 to vector<64x1xf32>
    %61 = arith.divf %59, %60 : vector<64x1xf32>
    %62 = vector.broadcast %61 : vector<64x1xf32> to vector<64x8xf32>
    %63 = arith.subf %57, %62 : vector<64x8xf32>
    %64 = arith.mulf %63, %63 : vector<64x8xf32>
    %cst_17 = arith.constant dense<0.000000e+00> : vector<64xf32>
    %65 = vector.multi_reduction <add>, %64, %cst_17 [1] : vector<64x8xf32> to vector<64xf32>
    %66 = vector.shape_cast %65 : vector<64xf32> to vector<64x1xf32>
    %cst_18 = arith.constant 8.000000e+00 : f32
    %67 = vector.broadcast %cst_18 : f32 to vector<64x1xf32>
    %68 = arith.divf %66, %67 : vector<64x1xf32>
    %cst_19 = arith.constant 9.99999974E-6 : f32
    %69 = vector.broadcast %cst_19 : f32 to vector<64x1xf32>
    %70 = arith.addf %68, %69 : vector<64x1xf32>
    %71 = math.rsqrt %70 : vector<64x1xf32>
    %72 = vector.broadcast %71 : vector<64x1xf32> to vector<64x8xf32>
    %73 = arith.mulf %63, %72 : vector<64x8xf32>
    %74 = vector.broadcast %15 : vector<1x8xf32> to vector<64x8xf32>
    %75 = arith.mulf %73, %74 : vector<64x8xf32>
    %76 = vector.broadcast %16 : vector<1x8xf32> to vector<64x8xf32>
    %77 = arith.addf %75, %76 : vector<64x8xf32>
    %cst_20 = arith.constant 0.000000e+00 : f32
    %78 = vector.broadcast %cst_20 : f32 to vector<64x8xf32>
    %79 = arith.maximumf %77, %78 : vector<64x8xf32>
    %80 = arith.mulf %79, %56 : vector<64x8xf32>
    %81 = tpu.concatenate %80, %80, %80 in 1 : vector<64x8xf32>, vector<64x8xf32>, vector<64x8xf32> -> vector<64x24xf32>
    %82 = arith.mulf %2, %81 : vector<64x24xf32>
    %c1 = arith.constant 1 : index
    %c0_21 = arith.constant 0 : index
    %c0_22 = arith.constant 0 : index
    %83 = vector.load %arg1[%c1, %c0_21, %c0_22] : memref<4x56x56xf32, #tpu.memory_space<vmem>>, vector<1x56x56xf32>
    %84 = vector.shape_cast %83 : vector<1x56x56xf32> to vector<56x56xf32>
    %85 = tpu.concatenate %45, %82 in 1 : vector<64x32xf32>, vector<64x24xf32> -> vector<64x56xf32>
    %cst_23 = arith.constant dense<0.000000e+00> : vector<64x56xf32>
    %86 = tpu.matmul %85, %84, %cst_23 {dimension_numbers = #tpu.dot_dimension_numbers<[1], [0], [0], [1], [0, 0, 1, 1], [], []>} : vector<64x56xf32>, vector<56x56xf32>, vector<64x56xf32> -> vector<64x56xf32>
    %87 = vector.extract_strided_slice %86 {offsets = [0, 0], sizes = [64, 32], strides = [1, 1]} : vector<64x56xf32> to vector<64x32xf32>
    %88 = vector.extract_strided_slice %86 {offsets = [0, 32], sizes = [64, 24], strides = [1, 1]} : vector<64x56xf32> to vector<64x24xf32>
    %c1_24 = arith.constant 1 : index
    %c0_25 = arith.constant 0 : index
    %c0_26 = arith.constant 0 : index
    %89 = vector.load %arg2[%c1_24, %c0_25, %c0_26] : memref<3x4x32xf32, #tpu.memory_space<vmem>>, vector<1x4x32xf32>
    %90 = vector.shape_cast %89 : vector<1x4x32xf32> to vector<4x32xf32>
    %91 = vector.extract_strided_slice %90 {offsets = [0, 0], sizes = [1, 32], strides = [1, 1]} : vector<4x32xf32> to vector<1x32xf32>
    %92 = vector.extract_strided_slice %90 {offsets = [1, 0], sizes = [1, 32], strides = [1, 1]} : vector<4x32xf32> to vector<1x32xf32>
    %93 = vector.extract_strided_slice %90 {offsets = [2, 0], sizes = [1, 8], strides = [1, 1]} : vector<4x32xf32> to vector<1x8xf32>
    %94 = vector.extract_strided_slice %90 {offsets = [3, 0], sizes = [1, 8], strides = [1, 1]} : vector<4x32xf32> to vector<1x8xf32>
    %95 = arith.mulf %87, %87 : vector<64x32xf32>
    %cst_27 = arith.constant 3.55271368E-15 : f32
    %96 = vector.broadcast %cst_27 : f32 to vector<64x32xf32>
    %97 = arith.maximumf %95, %96 : vector<64x32xf32>
    %98 = math.rsqrt %97 : vector<64x32xf32>
    %99 = arith.mulf %95, %98 : vector<64x32xf32>
    %cst_28 = arith.constant dense<0.000000e+00> : vector<64xf32>
    %100 = vector.multi_reduction <add>, %99, %cst_28 [1] : vector<64x32xf32> to vector<64xf32>
    %101 = vector.shape_cast %100 : vector<64xf32> to vector<64x1xf32>
    %cst_29 = arith.constant 3.200000e+01 : f32
    %102 = vector.broadcast %cst_29 : f32 to vector<64x1xf32>
    %103 = arith.divf %101, %102 : vector<64x1xf32>
    %104 = vector.broadcast %103 : vector<64x1xf32> to vector<64x32xf32>
    %105 = arith.subf %99, %104 : vector<64x32xf32>
    %106 = arith.mulf %105, %105 : vector<64x32xf32>
    %cst_30 = arith.constant dense<0.000000e+00> : vector<64xf32>
    %107 = vector.multi_reduction <add>, %106, %cst_30 [1] : vector<64x32xf32> to vector<64xf32>
    %108 = vector.shape_cast %107 : vector<64xf32> to vector<64x1xf32>
    %cst_31 = arith.constant 3.200000e+01 : f32
    %109 = vector.broadcast %cst_31 : f32 to vector<64x1xf32>
    %110 = arith.divf %108, %109 : vector<64x1xf32>
    %cst_32 = arith.constant 9.99999974E-6 : f32
    %111 = vector.broadcast %cst_32 : f32 to vector<64x1xf32>
    %112 = arith.addf %110, %111 : vector<64x1xf32>
    %113 = math.rsqrt %112 : vector<64x1xf32>
    %114 = vector.broadcast %113 : vector<64x1xf32> to vector<64x32xf32>
    %115 = arith.mulf %105, %114 : vector<64x32xf32>
    %116 = vector.broadcast %91 : vector<1x32xf32> to vector<64x32xf32>
    %117 = arith.mulf %115, %116 : vector<64x32xf32>
    %118 = vector.broadcast %92 : vector<1x32xf32> to vector<64x32xf32>
    %119 = arith.addf %117, %118 : vector<64x32xf32>
    %cst_33 = arith.constant 0.000000e+00 : f32
    %120 = vector.broadcast %cst_33 : f32 to vector<64x32xf32>
    %121 = arith.maximumf %119, %120 : vector<64x32xf32>
    %122 = arith.mulf %121, %98 : vector<64x32xf32>
    %123 = arith.mulf %87, %122 : vector<64x32xf32>
    %124 = vector.extract_strided_slice %88 {offsets = [0, 0], sizes = [64, 8], strides = [1, 1]} : vector<64x24xf32> to vector<64x8xf32>
    %125 = vector.extract_strided_slice %88 {offsets = [0, 8], sizes = [64, 8], strides = [1, 1]} : vector<64x24xf32> to vector<64x8xf32>
    %126 = vector.extract_strided_slice %88 {offsets = [0, 16], sizes = [64, 8], strides = [1, 1]} : vector<64x24xf32> to vector<64x8xf32>
    %127 = arith.mulf %124, %124 : vector<64x8xf32>
    %128 = arith.mulf %125, %125 : vector<64x8xf32>
    %129 = arith.addf %127, %128 : vector<64x8xf32>
    %130 = arith.mulf %126, %126 : vector<64x8xf32>
    %131 = arith.addf %129, %130 : vector<64x8xf32>
    %cst_34 = arith.constant 3.55271368E-15 : f32
    %132 = vector.broadcast %cst_34 : f32 to vector<64x8xf32>
    %133 = arith.maximumf %131, %132 : vector<64x8xf32>
    %134 = math.rsqrt %133 : vector<64x8xf32>
    %135 = arith.mulf %131, %134 : vector<64x8xf32>
    %cst_35 = arith.constant dense<0.000000e+00> : vector<64xf32>
    %136 = vector.multi_reduction <add>, %135, %cst_35 [1] : vector<64x8xf32> to vector<64xf32>
    %137 = vector.shape_cast %136 : vector<64xf32> to vector<64x1xf32>
    %cst_36 = arith.constant 8.000000e+00 : f32
    %138 = vector.broadcast %cst_36 : f32 to vector<64x1xf32>
    %139 = arith.divf %137, %138 : vector<64x1xf32>
    %140 = vector.broadcast %139 : vector<64x1xf32> to vector<64x8xf32>
    %141 = arith.subf %135, %140 : vector<64x8xf32>
    %142 = arith.mulf %141, %141 : vector<64x8xf32>
    %cst_37 = arith.constant dense<0.000000e+00> : vector<64xf32>
    %143 = vector.multi_reduction <add>, %142, %cst_37 [1] : vector<64x8xf32> to vector<64xf32>
    %144 = vector.shape_cast %143 : vector<64xf32> to vector<64x1xf32>
    %cst_38 = arith.constant 8.000000e+00 : f32
    %145 = vector.broadcast %cst_38 : f32 to vector<64x1xf32>
    %146 = arith.divf %144, %145 : vector<64x1xf32>
    %cst_39 = arith.constant 9.99999974E-6 : f32
    %147 = vector.broadcast %cst_39 : f32 to vector<64x1xf32>
    %148 = arith.addf %146, %147 : vector<64x1xf32>
    %149 = math.rsqrt %148 : vector<64x1xf32>
    %150 = vector.broadcast %149 : vector<64x1xf32> to vector<64x8xf32>
    %151 = arith.mulf %141, %150 : vector<64x8xf32>
    %152 = vector.broadcast %93 : vector<1x8xf32> to vector<64x8xf32>
    %153 = arith.mulf %151, %152 : vector<64x8xf32>
    %154 = vector.broadcast %94 : vector<1x8xf32> to vector<64x8xf32>
    %155 = arith.addf %153, %154 : vector<64x8xf32>
    %cst_40 = arith.constant 0.000000e+00 : f32
    %156 = vector.broadcast %cst_40 : f32 to vector<64x8xf32>
    %157 = arith.maximumf %155, %156 : vector<64x8xf32>
    %158 = arith.mulf %157, %134 : vector<64x8xf32>
    %159 = tpu.concatenate %158, %158, %158 in 1 : vector<64x8xf32>, vector<64x8xf32>, vector<64x8xf32> -> vector<64x24xf32>
    %160 = arith.mulf %88, %159 : vector<64x24xf32>
    %c2 = arith.constant 2 : index
    %c0_41 = arith.constant 0 : index
    %c0_42 = arith.constant 0 : index
    %161 = vector.load %arg1[%c2, %c0_41, %c0_42] : memref<4x56x56xf32, #tpu.memory_space<vmem>>, vector<1x56x56xf32>
    %162 = vector.shape_cast %161 : vector<1x56x56xf32> to vector<56x56xf32>
    %163 = tpu.concatenate %123, %160 in 1 : vector<64x32xf32>, vector<64x24xf32> -> vector<64x56xf32>
    %cst_43 = arith.constant dense<0.000000e+00> : vector<64x56xf32>
    %164 = tpu.matmul %163, %162, %cst_43 {dimension_numbers = #tpu.dot_dimension_numbers<[1], [0], [0], [1], [0, 0, 1, 1], [], []>} : vector<64x56xf32>, vector<56x56xf32>, vector<64x56xf32> -> vector<64x56xf32>
    %165 = vector.extract_strided_slice %164 {offsets = [0, 0], sizes = [64, 32], strides = [1, 1]} : vector<64x56xf32> to vector<64x32xf32>
    %166 = vector.extract_strided_slice %164 {offsets = [0, 32], sizes = [64, 24], strides = [1, 1]} : vector<64x56xf32> to vector<64x24xf32>
    %c2_44 = arith.constant 2 : index
    %c0_45 = arith.constant 0 : index
    %c0_46 = arith.constant 0 : index
    %167 = vector.load %arg2[%c2_44, %c0_45, %c0_46] : memref<3x4x32xf32, #tpu.memory_space<vmem>>, vector<1x4x32xf32>
    %168 = vector.shape_cast %167 : vector<1x4x32xf32> to vector<4x32xf32>
    %169 = vector.extract_strided_slice %168 {offsets = [0, 0], sizes = [1, 32], strides = [1, 1]} : vector<4x32xf32> to vector<1x32xf32>
    %170 = vector.extract_strided_slice %168 {offsets = [1, 0], sizes = [1, 32], strides = [1, 1]} : vector<4x32xf32> to vector<1x32xf32>
    %171 = vector.extract_strided_slice %168 {offsets = [2, 0], sizes = [1, 8], strides = [1, 1]} : vector<4x32xf32> to vector<1x8xf32>
    %172 = vector.extract_strided_slice %168 {offsets = [3, 0], sizes = [1, 8], strides = [1, 1]} : vector<4x32xf32> to vector<1x8xf32>
    %173 = arith.mulf %165, %165 : vector<64x32xf32>
    %cst_47 = arith.constant 3.55271368E-15 : f32
    %174 = vector.broadcast %cst_47 : f32 to vector<64x32xf32>
    %175 = arith.maximumf %173, %174 : vector<64x32xf32>
    %176 = math.rsqrt %175 : vector<64x32xf32>
    %177 = arith.mulf %173, %176 : vector<64x32xf32>
    %cst_48 = arith.constant dense<0.000000e+00> : vector<64xf32>
    %178 = vector.multi_reduction <add>, %177, %cst_48 [1] : vector<64x32xf32> to vector<64xf32>
    %179 = vector.shape_cast %178 : vector<64xf32> to vector<64x1xf32>
    %cst_49 = arith.constant 3.200000e+01 : f32
    %180 = vector.broadcast %cst_49 : f32 to vector<64x1xf32>
    %181 = arith.divf %179, %180 : vector<64x1xf32>
    %182 = vector.broadcast %181 : vector<64x1xf32> to vector<64x32xf32>
    %183 = arith.subf %177, %182 : vector<64x32xf32>
    %184 = arith.mulf %183, %183 : vector<64x32xf32>
    %cst_50 = arith.constant dense<0.000000e+00> : vector<64xf32>
    %185 = vector.multi_reduction <add>, %184, %cst_50 [1] : vector<64x32xf32> to vector<64xf32>
    %186 = vector.shape_cast %185 : vector<64xf32> to vector<64x1xf32>
    %cst_51 = arith.constant 3.200000e+01 : f32
    %187 = vector.broadcast %cst_51 : f32 to vector<64x1xf32>
    %188 = arith.divf %186, %187 : vector<64x1xf32>
    %cst_52 = arith.constant 9.99999974E-6 : f32
    %189 = vector.broadcast %cst_52 : f32 to vector<64x1xf32>
    %190 = arith.addf %188, %189 : vector<64x1xf32>
    %191 = math.rsqrt %190 : vector<64x1xf32>
    %192 = vector.broadcast %191 : vector<64x1xf32> to vector<64x32xf32>
    %193 = arith.mulf %183, %192 : vector<64x32xf32>
    %194 = vector.broadcast %169 : vector<1x32xf32> to vector<64x32xf32>
    %195 = arith.mulf %193, %194 : vector<64x32xf32>
    %196 = vector.broadcast %170 : vector<1x32xf32> to vector<64x32xf32>
    %197 = arith.addf %195, %196 : vector<64x32xf32>
    %cst_53 = arith.constant 0.000000e+00 : f32
    %198 = vector.broadcast %cst_53 : f32 to vector<64x32xf32>
    %199 = arith.maximumf %197, %198 : vector<64x32xf32>
    %200 = arith.mulf %199, %176 : vector<64x32xf32>
    %201 = arith.mulf %165, %200 : vector<64x32xf32>
    %202 = vector.extract_strided_slice %166 {offsets = [0, 0], sizes = [64, 8], strides = [1, 1]} : vector<64x24xf32> to vector<64x8xf32>
    %203 = vector.extract_strided_slice %166 {offsets = [0, 8], sizes = [64, 8], strides = [1, 1]} : vector<64x24xf32> to vector<64x8xf32>
    %204 = vector.extract_strided_slice %166 {offsets = [0, 16], sizes = [64, 8], strides = [1, 1]} : vector<64x24xf32> to vector<64x8xf32>
    %205 = arith.mulf %202, %202 : vector<64x8xf32>
    %206 = arith.mulf %203, %203 : vector<64x8xf32>
    %207 = arith.addf %205, %206 : vector<64x8xf32>
    %208 = arith.mulf %204, %204 : vector<64x8xf32>
    %209 = arith.addf %207, %208 : vector<64x8xf32>
    %cst_54 = arith.constant 3.55271368E-15 : f32
    %210 = vector.broadcast %cst_54 : f32 to vector<64x8xf32>
    %211 = arith.maximumf %209, %210 : vector<64x8xf32>
    %212 = math.rsqrt %211 : vector<64x8xf32>
    %213 = arith.mulf %209, %212 : vector<64x8xf32>
    %cst_55 = arith.constant dense<0.000000e+00> : vector<64xf32>
    %214 = vector.multi_reduction <add>, %213, %cst_55 [1] : vector<64x8xf32> to vector<64xf32>
    %215 = vector.shape_cast %214 : vector<64xf32> to vector<64x1xf32>
    %cst_56 = arith.constant 8.000000e+00 : f32
    %216 = vector.broadcast %cst_56 : f32 to vector<64x1xf32>
    %217 = arith.divf %215, %216 : vector<64x1xf32>
    %218 = vector.broadcast %217 : vector<64x1xf32> to vector<64x8xf32>
    %219 = arith.subf %213, %218 : vector<64x8xf32>
    %220 = arith.mulf %219, %219 : vector<64x8xf32>
    %cst_57 = arith.constant dense<0.000000e+00> : vector<64xf32>
    %221 = vector.multi_reduction <add>, %220, %cst_57 [1] : vector<64x8xf32> to vector<64xf32>
    %222 = vector.shape_cast %221 : vector<64xf32> to vector<64x1xf32>
    %cst_58 = arith.constant 8.000000e+00 : f32
    %223 = vector.broadcast %cst_58 : f32 to vector<64x1xf32>
    %224 = arith.divf %222, %223 : vector<64x1xf32>
    %cst_59 = arith.constant 9.99999974E-6 : f32
    %225 = vector.broadcast %cst_59 : f32 to vector<64x1xf32>
    %226 = arith.addf %224, %225 : vector<64x1xf32>
    %227 = math.rsqrt %226 : vector<64x1xf32>
    %228 = vector.broadcast %227 : vector<64x1xf32> to vector<64x8xf32>
    %229 = arith.mulf %219, %228 : vector<64x8xf32>
    %230 = vector.broadcast %171 : vector<1x8xf32> to vector<64x8xf32>
    %231 = arith.mulf %229, %230 : vector<64x8xf32>
    %232 = vector.broadcast %172 : vector<1x8xf32> to vector<64x8xf32>
    %233 = arith.addf %231, %232 : vector<64x8xf32>
    %cst_60 = arith.constant 0.000000e+00 : f32
    %234 = vector.broadcast %cst_60 : f32 to vector<64x8xf32>
    %235 = arith.maximumf %233, %234 : vector<64x8xf32>
    %236 = arith.mulf %235, %212 : vector<64x8xf32>
    %237 = tpu.concatenate %236, %236, %236 in 1 : vector<64x8xf32>, vector<64x8xf32>, vector<64x8xf32> -> vector<64x24xf32>
    %238 = arith.mulf %166, %237 : vector<64x24xf32>
    %c3 = arith.constant 3 : index
    %c0_61 = arith.constant 0 : index
    %c0_62 = arith.constant 0 : index
    %239 = vector.load %arg1[%c3, %c0_61, %c0_62] : memref<4x56x56xf32, #tpu.memory_space<vmem>>, vector<1x56x56xf32>
    %240 = vector.shape_cast %239 : vector<1x56x56xf32> to vector<56x56xf32>
    %241 = vector.extract_strided_slice %240 {offsets = [0, 0], sizes = [56, 8], strides = [1, 1]} : vector<56x56xf32> to vector<56x8xf32>
    %242 = tpu.concatenate %201, %238 in 1 : vector<64x32xf32>, vector<64x24xf32> -> vector<64x56xf32>
    %cst_63 = arith.constant dense<0.000000e+00> : vector<64x8xf32>
    %243 = tpu.matmul %242, %241, %cst_63 {dimension_numbers = #tpu.dot_dimension_numbers<[1], [0], [0], [1], [0, 0, 1, 1], [], []>} : vector<64x56xf32>, vector<56x8xf32>, vector<64x8xf32> -> vector<64x8xf32>
    %244 = vector.extract_strided_slice %243 {offsets = [0, 0], sizes = [64, 2], strides = [1, 1]} : vector<64x8xf32> to vector<64x2xf32>
    %245 = vector.extract_strided_slice %243 {offsets = [0, 2], sizes = [64, 6], strides = [1, 1]} : vector<64x8xf32> to vector<64x6xf32>
    %cst_64 = arith.constant 1.000000e+00 : f32
    %246 = vector.broadcast %cst_64 : f32 to vector<64x6xf32>
    %247 = arith.mulf %246, %245 : vector<64x6xf32>
    %248 = math.absf %244 : vector<64x2xf32>
    %cst_65 = arith.constant 0.000000e+00 : f32
    %249 = vector.broadcast %cst_65 : f32 to vector<64x2xf32>
    %250 = arith.subf %249, %248 : vector<64x2xf32>
    %251 = math.exp %250 : vector<64x2xf32>
    %cst_66 = arith.constant 1.000000e+00 : f32
    %252 = vector.broadcast %cst_66 : f32 to vector<64x2xf32>
    %253 = arith.addf %252, %251 : vector<64x2xf32>
    %cst_67 = arith.constant 1.000000e+00 : f32
    %254 = vector.broadcast %cst_67 : f32 to vector<64x2xf32>
    %255 = arith.divf %254, %253 : vector<64x2xf32>
    %cst_68 = arith.constant 0.000000e+00 : f32
    %256 = vector.broadcast %cst_68 : f32 to vector<64x2xf32>
    %257 = arith.cmpf oge, %244, %256 : vector<64x2xf32>
    %258 = arith.mulf %251, %255 : vector<64x2xf32>
    %259 = arith.select %257, %255, %258 : vector<64x2xi1>, vector<64x2xf32>
    %cst_69 = arith.constant 0.000000e+00 : f32
    %260 = vector.broadcast %cst_69 : f32 to vector<64x2xf32>
    %261 = arith.maximumf %244, %260 : vector<64x2xf32>
    %262 = arith.mulf %244, %4 : vector<64x2xf32>
    %263 = arith.subf %261, %262 : vector<64x2xf32>
    %cst_70 = arith.constant 1.000000e+00 : f32
    %264 = vector.broadcast %cst_70 : f32 to vector<64x2xf32>
    %265 = arith.addf %264, %251 : vector<64x2xf32>
    %266 = math.log %265 : vector<64x2xf32>
    %267 = arith.addf %263, %266 : vector<64x2xf32>
    %268 = arith.mulf %5, %267 : vector<64x2xf32>
    %269 = vector.extract_strided_slice %247 {offsets = [0, 0], sizes = [64, 2], strides = [1, 1]} : vector<64x6xf32> to vector<64x2xf32>
    %270 = vector.extract_strided_slice %3 {offsets = [0, 0], sizes = [64, 2], strides = [1, 1]} : vector<64x6xf32> to vector<64x2xf32>
    %271 = arith.subf %269, %270 : vector<64x2xf32>
    %272 = vector.extract_strided_slice %247 {offsets = [0, 2], sizes = [64, 2], strides = [1, 1]} : vector<64x6xf32> to vector<64x2xf32>
    %273 = vector.extract_strided_slice %3 {offsets = [0, 2], sizes = [64, 2], strides = [1, 1]} : vector<64x6xf32> to vector<64x2xf32>
    %274 = arith.subf %272, %273 : vector<64x2xf32>
    %275 = vector.extract_strided_slice %247 {offsets = [0, 4], sizes = [64, 2], strides = [1, 1]} : vector<64x6xf32> to vector<64x2xf32>
    %276 = vector.extract_strided_slice %3 {offsets = [0, 4], sizes = [64, 2], strides = [1, 1]} : vector<64x6xf32> to vector<64x2xf32>
    %277 = arith.subf %275, %276 : vector<64x2xf32>
    %278 = arith.mulf %271, %271 : vector<64x2xf32>
    %279 = arith.mulf %274, %274 : vector<64x2xf32>
    %280 = arith.addf %278, %279 : vector<64x2xf32>
    %281 = arith.mulf %277, %277 : vector<64x2xf32>
    %282 = arith.addf %280, %281 : vector<64x2xf32>
    %cst_71 = arith.constant 1.000000e-10 : f32
    %283 = vector.broadcast %cst_71 : f32 to vector<64x2xf32>
    %284 = arith.addf %282, %283 : vector<64x2xf32>
    %285 = math.sqrt %284 : vector<64x2xf32>
    %cst_72 = arith.constant 1.000000e+01 : f32
    %286 = vector.broadcast %cst_72 : f32 to vector<64x2xf32>
    %287 = arith.minimumf %285, %286 : vector<64x2xf32>
    %cst_73 = arith.constant 1.000000e+02 : f32
    %288 = vector.broadcast %cst_73 : f32 to vector<64x2xf32>
    %289 = arith.minimumf %282, %288 : vector<64x2xf32>
    %290 = vector.extract_strided_slice %247 {offsets = [0, 0], sizes = [64, 2], strides = [1, 1]} : vector<64x6xf32> to vector<64x2xf32>
    %291 = vector.extract_strided_slice %247 {offsets = [0, 2], sizes = [64, 2], strides = [1, 1]} : vector<64x6xf32> to vector<64x2xf32>
    %292 = vector.extract_strided_slice %247 {offsets = [0, 4], sizes = [64, 2], strides = [1, 1]} : vector<64x6xf32> to vector<64x2xf32>
    %293 = vector.extract_strided_slice %3 {offsets = [0, 0], sizes = [64, 2], strides = [1, 1]} : vector<64x6xf32> to vector<64x2xf32>
    %294 = vector.extract_strided_slice %3 {offsets = [0, 2], sizes = [64, 2], strides = [1, 1]} : vector<64x6xf32> to vector<64x2xf32>
    %295 = vector.extract_strided_slice %3 {offsets = [0, 4], sizes = [64, 2], strides = [1, 1]} : vector<64x6xf32> to vector<64x2xf32>
    %296 = arith.mulf %290, %290 : vector<64x2xf32>
    %297 = arith.mulf %291, %291 : vector<64x2xf32>
    %298 = arith.addf %296, %297 : vector<64x2xf32>
    %299 = arith.mulf %292, %292 : vector<64x2xf32>
    %300 = arith.addf %298, %299 : vector<64x2xf32>
    %301 = arith.mulf %293, %293 : vector<64x2xf32>
    %302 = arith.mulf %294, %294 : vector<64x2xf32>
    %303 = arith.addf %301, %302 : vector<64x2xf32>
    %304 = arith.mulf %295, %295 : vector<64x2xf32>
    %305 = arith.addf %303, %304 : vector<64x2xf32>
    %306 = math.sqrt %300 : vector<64x2xf32>
    %307 = math.sqrt %305 : vector<64x2xf32>
    %cst_74 = arith.constant 9.99999974E-6 : f32
    %308 = vector.broadcast %cst_74 : f32 to vector<64x2xf32>
    %309 = arith.cmpf ogt, %306, %308 : vector<64x2xf32>
    %cst_75 = arith.constant 9.99999974E-6 : f32
    %310 = vector.broadcast %cst_75 : f32 to vector<64x2xf32>
    %311 = arith.cmpf ogt, %307, %310 : vector<64x2xf32>
    %cst_76 = arith.constant 1.000000e+00 : f32
    %312 = vector.broadcast %cst_76 : f32 to vector<64x2xf32>
    %313 = arith.select %309, %300, %312 : vector<64x2xi1>, vector<64x2xf32>
    %314 = math.rsqrt %313 : vector<64x2xf32>
    %cst_77 = arith.constant 1.000000e+00 : f32
    %315 = vector.broadcast %cst_77 : f32 to vector<64x2xf32>
    %316 = arith.select %311, %305, %315 : vector<64x2xi1>, vector<64x2xf32>
    %317 = math.rsqrt %316 : vector<64x2xf32>
    %318 = arith.mulf %290, %314 : vector<64x2xf32>
    %cst_78 = arith.constant 1.000000e+00 : f32
    %319 = vector.broadcast %cst_78 : f32 to vector<64x2xf32>
    %320 = arith.select %309, %318, %319 : vector<64x2xi1>, vector<64x2xf32>
    %321 = arith.mulf %291, %314 : vector<64x2xf32>
    %cst_79 = arith.constant 0.000000e+00 : f32
    %322 = vector.broadcast %cst_79 : f32 to vector<64x2xf32>
    %323 = arith.select %309, %321, %322 : vector<64x2xi1>, vector<64x2xf32>
    %324 = arith.mulf %292, %314 : vector<64x2xf32>
    %cst_80 = arith.constant 0.000000e+00 : f32
    %325 = vector.broadcast %cst_80 : f32 to vector<64x2xf32>
    %326 = arith.select %309, %324, %325 : vector<64x2xi1>, vector<64x2xf32>
    %327 = arith.mulf %293, %317 : vector<64x2xf32>
    %cst_81 = arith.constant 1.000000e+00 : f32
    %328 = vector.broadcast %cst_81 : f32 to vector<64x2xf32>
    %329 = arith.select %311, %327, %328 : vector<64x2xi1>, vector<64x2xf32>
    %330 = arith.mulf %294, %317 : vector<64x2xf32>
    %cst_82 = arith.constant 0.000000e+00 : f32
    %331 = vector.broadcast %cst_82 : f32 to vector<64x2xf32>
    %332 = arith.select %311, %330, %331 : vector<64x2xi1>, vector<64x2xf32>
    %333 = arith.mulf %295, %317 : vector<64x2xf32>
    %cst_83 = arith.constant 0.000000e+00 : f32
    %334 = vector.broadcast %cst_83 : f32 to vector<64x2xf32>
    %335 = arith.select %311, %333, %334 : vector<64x2xi1>, vector<64x2xf32>
    %336 = arith.mulf %320, %329 : vector<64x2xf32>
    %337 = arith.mulf %323, %332 : vector<64x2xf32>
    %338 = arith.addf %336, %337 : vector<64x2xf32>
    %339 = arith.mulf %326, %335 : vector<64x2xf32>
    %340 = arith.addf %338, %339 : vector<64x2xf32>
    %cst_84 = arith.constant 1.000000e+00 : f32
    %341 = vector.broadcast %cst_84 : f32 to vector<64x2xf32>
    %342 = arith.subf %341, %340 : vector<64x2xf32>
    %343 = math.absf %342 : vector<64x2xf32>
    %344 = arith.subf %306, %307 : vector<64x2xf32>
    %345 = math.absf %344 : vector<64x2xf32>
    %346 = vector.broadcast %6 : vector<64x1xf32> to vector<64x2xf32>
    %347 = arith.mulf %346, %4 : vector<64x2xf32>
    %348 = tpu.iota {dimensions = array<i32: 1>} : vector<1x8xi32>
    %c0_i32 = arith.constant 0 : i32
    %349 = vector.broadcast %c0_i32 : i32 to vector<1x8xi32>
    %350 = arith.cmpi eq, %348, %349 : vector<1x8xi32>
    %cst_85 = arith.constant 0.000000e+00 : f32
    %351 = vector.shape_cast %350 : vector<1x8xi1> to vector<1x8xi1>
    %352 = vector.broadcast %351 : vector<1x8xi1> to vector<64x8xi1>
    %353 = vector.shape_cast %6 : vector<64x1xf32> to vector<64x1xf32>
    %354 = vector.broadcast %353 : vector<64x1xf32> to vector<64x8xf32>
    %355 = vector.broadcast %cst_85 : f32 to vector<64x8xf32>
    %356 = arith.select %352, %354, %355 : vector<64x8xi1>, vector<64x8xf32>
    %357 = vector.broadcast %6 : vector<64x1xf32> to vector<64x2xf32>
    %358 = arith.mulf %357, %268 : vector<64x2xf32>
    %359 = vector.extract_strided_slice %358 {offsets = [0, 0], sizes = [64, 1], strides = [1, 1]} : vector<64x2xf32> to vector<64x1xf32>
    %360 = vector.extract_strided_slice %358 {offsets = [0, 1], sizes = [64, 1], strides = [1, 1]} : vector<64x2xf32> to vector<64x1xf32>
    %361 = arith.addf %359, %360 : vector<64x1xf32>
    %c1_i32 = arith.constant 1 : i32
    %362 = vector.broadcast %c1_i32 : i32 to vector<1x8xi32>
    %363 = arith.cmpi eq, %348, %362 : vector<1x8xi32>
    %cst_86 = arith.constant 0.000000e+00 : f32
    %364 = vector.shape_cast %363 : vector<1x8xi1> to vector<1x8xi1>
    %365 = vector.broadcast %364 : vector<1x8xi1> to vector<64x8xi1>
    %366 = vector.shape_cast %361 : vector<64x1xf32> to vector<64x1xf32>
    %367 = vector.broadcast %366 : vector<64x1xf32> to vector<64x8xf32>
    %368 = vector.broadcast %cst_86 : f32 to vector<64x8xf32>
    %369 = arith.select %365, %367, %368 : vector<64x8xi1>, vector<64x8xf32>
    %370 = arith.addf %356, %369 : vector<64x8xf32>
    %371 = vector.extract_strided_slice %347 {offsets = [0, 0], sizes = [64, 1], strides = [1, 1]} : vector<64x2xf32> to vector<64x1xf32>
    %372 = vector.extract_strided_slice %347 {offsets = [0, 1], sizes = [64, 1], strides = [1, 1]} : vector<64x2xf32> to vector<64x1xf32>
    %373 = arith.addf %371, %372 : vector<64x1xf32>
    %c2_i32 = arith.constant 2 : i32
    %374 = vector.broadcast %c2_i32 : i32 to vector<1x8xi32>
    %375 = arith.cmpi eq, %348, %374 : vector<1x8xi32>
    %cst_87 = arith.constant 0.000000e+00 : f32
    %376 = vector.shape_cast %375 : vector<1x8xi1> to vector<1x8xi1>
    %377 = vector.broadcast %376 : vector<1x8xi1> to vector<64x8xi1>
    %378 = vector.shape_cast %373 : vector<64x1xf32> to vector<64x1xf32>
    %379 = vector.broadcast %378 : vector<64x1xf32> to vector<64x8xf32>
    %380 = vector.broadcast %cst_87 : f32 to vector<64x8xf32>
    %381 = arith.select %377, %379, %380 : vector<64x8xi1>, vector<64x8xf32>
    %382 = arith.addf %370, %381 : vector<64x8xf32>
    %383 = arith.mulf %347, %287 : vector<64x2xf32>
    %384 = vector.extract_strided_slice %383 {offsets = [0, 0], sizes = [64, 1], strides = [1, 1]} : vector<64x2xf32> to vector<64x1xf32>
    %385 = vector.extract_strided_slice %383 {offsets = [0, 1], sizes = [64, 1], strides = [1, 1]} : vector<64x2xf32> to vector<64x1xf32>
    %386 = arith.addf %384, %385 : vector<64x1xf32>
    %c3_i32 = arith.constant 3 : i32
    %387 = vector.broadcast %c3_i32 : i32 to vector<1x8xi32>
    %388 = arith.cmpi eq, %348, %387 : vector<1x8xi32>
    %cst_88 = arith.constant 0.000000e+00 : f32
    %389 = vector.shape_cast %388 : vector<1x8xi1> to vector<1x8xi1>
    %390 = vector.broadcast %389 : vector<1x8xi1> to vector<64x8xi1>
    %391 = vector.shape_cast %386 : vector<64x1xf32> to vector<64x1xf32>
    %392 = vector.broadcast %391 : vector<64x1xf32> to vector<64x8xf32>
    %393 = vector.broadcast %cst_88 : f32 to vector<64x8xf32>
    %394 = arith.select %390, %392, %393 : vector<64x8xi1>, vector<64x8xf32>
    %395 = arith.addf %382, %394 : vector<64x8xf32>
    %396 = arith.mulf %347, %289 : vector<64x2xf32>
    %397 = vector.extract_strided_slice %396 {offsets = [0, 0], sizes = [64, 1], strides = [1, 1]} : vector<64x2xf32> to vector<64x1xf32>
    %398 = vector.extract_strided_slice %396 {offsets = [0, 1], sizes = [64, 1], strides = [1, 1]} : vector<64x2xf32> to vector<64x1xf32>
    %399 = arith.addf %397, %398 : vector<64x1xf32>
    %c4_i32 = arith.constant 4 : i32
    %400 = vector.broadcast %c4_i32 : i32 to vector<1x8xi32>
    %401 = arith.cmpi eq, %348, %400 : vector<1x8xi32>
    %cst_89 = arith.constant 0.000000e+00 : f32
    %402 = vector.shape_cast %401 : vector<1x8xi1> to vector<1x8xi1>
    %403 = vector.broadcast %402 : vector<1x8xi1> to vector<64x8xi1>
    %404 = vector.shape_cast %399 : vector<64x1xf32> to vector<64x1xf32>
    %405 = vector.broadcast %404 : vector<64x1xf32> to vector<64x8xf32>
    %406 = vector.broadcast %cst_89 : f32 to vector<64x8xf32>
    %407 = arith.select %403, %405, %406 : vector<64x8xi1>, vector<64x8xf32>
    %408 = arith.addf %395, %407 : vector<64x8xf32>
    %409 = arith.mulf %347, %343 : vector<64x2xf32>
    %410 = vector.extract_strided_slice %409 {offsets = [0, 0], sizes = [64, 1], strides = [1, 1]} : vector<64x2xf32> to vector<64x1xf32>
    %411 = vector.extract_strided_slice %409 {offsets = [0, 1], sizes = [64, 1], strides = [1, 1]} : vector<64x2xf32> to vector<64x1xf32>
    %412 = arith.addf %410, %411 : vector<64x1xf32>
    %c5_i32 = arith.constant 5 : i32
    %413 = vector.broadcast %c5_i32 : i32 to vector<1x8xi32>
    %414 = arith.cmpi eq, %348, %413 : vector<1x8xi32>
    %cst_90 = arith.constant 0.000000e+00 : f32
    %415 = vector.shape_cast %414 : vector<1x8xi1> to vector<1x8xi1>
    %416 = vector.broadcast %415 : vector<1x8xi1> to vector<64x8xi1>
    %417 = vector.shape_cast %412 : vector<64x1xf32> to vector<64x1xf32>
    %418 = vector.broadcast %417 : vector<64x1xf32> to vector<64x8xf32>
    %419 = vector.broadcast %cst_90 : f32 to vector<64x8xf32>
    %420 = arith.select %416, %418, %419 : vector<64x8xi1>, vector<64x8xf32>
    %421 = arith.addf %408, %420 : vector<64x8xf32>
    %422 = arith.mulf %347, %345 : vector<64x2xf32>
    %423 = vector.extract_strided_slice %422 {offsets = [0, 0], sizes = [64, 1], strides = [1, 1]} : vector<64x2xf32> to vector<64x1xf32>
    %424 = vector.extract_strided_slice %422 {offsets = [0, 1], sizes = [64, 1], strides = [1, 1]} : vector<64x2xf32> to vector<64x1xf32>
    %425 = arith.addf %423, %424 : vector<64x1xf32>
    %c6_i32 = arith.constant 6 : i32
    %426 = vector.broadcast %c6_i32 : i32 to vector<1x8xi32>
    %427 = arith.cmpi eq, %348, %426 : vector<1x8xi32>
    %cst_91 = arith.constant 0.000000e+00 : f32
    %428 = vector.shape_cast %427 : vector<1x8xi1> to vector<1x8xi1>
    %429 = vector.broadcast %428 : vector<1x8xi1> to vector<64x8xi1>
    %430 = vector.shape_cast %425 : vector<64x1xf32> to vector<64x1xf32>
    %431 = vector.broadcast %430 : vector<64x1xf32> to vector<64x8xf32>
    %432 = vector.broadcast %cst_91 : f32 to vector<64x8xf32>
    %433 = arith.select %429, %431, %432 : vector<64x8xi1>, vector<64x8xf32>
    %434 = arith.addf %421, %433 : vector<64x8xf32>
    %cst_92 = arith.constant dense<0.000000e+00> : vector<8xf32>
    %435 = vector.multi_reduction <add>, %434, %cst_92 [0] : vector<64x8xf32> to vector<8xf32>
    %436 = vector.shape_cast %435 : vector<8xf32> to vector<1x8xf32>
    %cst_93 = arith.constant 0.000000e+00 : f32
    %437 = vector.broadcast %cst_93 : f32 to vector<64x128xf32>
    %c0_94 = arith.constant 0 : index
    %c0_95 = arith.constant 0 : index
    %438 = vector.load %arg3[%c0_94, %c0_95] : memref<64x128xf32, #tpu.memory_space<vmem>>, vector<64x128xf32>
    tpu.vector_store %arg3[%c0_94, %c0_95], %437 {strides = array<i32>} : memref<64x128xf32, #tpu.memory_space<vmem>>, vector<64x128xf32>,
    %c0_96 = arith.constant 0 : index
    %c0_97 = arith.constant 0 : index
    %439 = vector.load %arg3[%c0_96, %c0_97] : memref<64x128xf32, #tpu.memory_space<vmem>>, vector<64x2xf32>
    tpu.vector_store %arg3[%c0_96, %c0_97], %259 {strides = array<i32>} : memref<64x128xf32, #tpu.memory_space<vmem>>, vector<64x2xf32>,
    %c0_98 = arith.constant 0 : index
    %c2_99 = arith.constant 2 : index
    %440 = vector.load %arg3[%c0_98, %c2_99] : memref<64x128xf32, #tpu.memory_space<vmem>>, vector<64x6xf32>
    tpu.vector_store %arg3[%c0_98, %c2_99], %247 {strides = array<i32>} : memref<64x128xf32, #tpu.memory_space<vmem>>, vector<64x6xf32>,
    %c0_100 = arith.constant 0 : index
    %c8 = arith.constant 8 : index
    %441 = vector.load %arg3[%c0_100, %c8] : memref<64x128xf32, #tpu.memory_space<vmem>>, vector<1x8xf32>
    tpu.vector_store %arg3[%c0_100, %c8], %436 {strides = array<i32>} : memref<64x128xf32, #tpu.memory_space<vmem>>, vector<1x8xf32>,
    return
  }
}

</mosaic_0001>

<llo_original>
// kernel: tpu_custom_call.1
$region0: #{tpu_custom_call.1}
  #allocation0 [shape = 'u32[]', space=smem, size = 0x4, offset = 0x4, fixed_abs, tag = 'smem constant byte address 0x4 - core index']
  #allocation1 [shape = 'u32[144,128]{1,0:T(1,128)}', space=vmem, size = 0x12000, scoped, tag = 'internal scratch']
  %s0 = inlined_call_operand.vmem [shape: f32[64,51], index: 0, kind: input, shape index: {}]
  %s1 = inlined_call_operand.hbm [shape: f32[4,56,56], index: 1, kind: input, shape index: {}]
  %s2 = inlined_call_operand.vmem [shape: f32[3,4,32], index: 2, kind: input, shape index: {}]
  %s3 = inlined_call_operand.hbm [shape: f32[64,128], index: 3, kind: output, shape index: {}]
  %s4 = sld [smem:[#allocation0]]
  $region26: #{tpu_custom_call.1} parent=0
    _
  %s6 = ssub.s32 1, %s4
  %s7 = scalar_select 0, %s6, %s4
  $region1: #{tpu_custom_call.1} parent=0
    #allocation2 [shape = 'u8[114688]{0}', space=vmem, size = 0x1c000, scoped, tag = 'input window, operand 1, single buffered']
    #allocation3 [shape = 's32[1]{0}', space=sflag, size = 0x4, scoped, tag = 'scoped memory for tpu_custom_call.1']
    #allocation4 [shape = 's32[1]{0}', space=sflag, size = 0x4, scoped, tag = 'scoped memory for tpu_custom_call.1']
    #allocation5 [shape = 'u8[32768]{0}', space=vmem, size = 0x8000, scoped, tag = 'output window, operand 0, single buffered']
    %8 = vsyncpa [#allocation3], 0
    %9 = vsyncpa [#allocation4], 0
    // Predicated region
    $region2: #{tpu_custom_call.1} parent=1 // pred_check
      _
    $region3: #{tpu_custom_call.1} parent=1 // pred_check_branch
      %11 = sbr.rel (0) target = $region5
    $region4: #{tpu_custom_call.1} parent=1 // pred_region
      _
    $region5: #{tpu_custom_call.1} parent=1 // pred_fallthru
      _
    // Predicated region
    $region6: #{tpu_custom_call.1} parent=1 // pred_check
      _
    $region7: #{tpu_custom_call.1} parent=1 // pred_check_branch
      %13 = sbr.rel (0) target = $region9
    $region8: #{tpu_custom_call.1} parent=1 // pred_region
      %s15 = ssub.s32 3584, 3584
      %16 = vsyncadd [#allocation3], %s15
      %s17 = sshll.u32 [#allocation2], 4
      %s18 = int_to_ptr.vmem [resolvable:$true] %s17
      %23 = dma.hbm_to_vmem [thread:$0]  %s1, 3584, %s18, [#allocation3], 128, 128, 8
    $region9: #{tpu_custom_call.1} parent=1 // pred_fallthru
      _
    // Predicated region
    $region10: #{tpu_custom_call.1} parent=1 // pred_check
      _
    $region11: #{tpu_custom_call.1} parent=1 // pred_check_branch
      %25 = sbr.rel (0) target = $region13
    $region12: #{tpu_custom_call.1} parent=1 // pred_region
      _
    $region13: #{tpu_custom_call.1} parent=1 // pred_fallthru
      _
    // Predicated region
    $region14: #{tpu_custom_call.1} parent=1 // pred_check
      _
    $region15: #{tpu_custom_call.1} parent=1 // pred_check_branch
      %27 = sbr.rel (0) target = $region17
    $region16: #{tpu_custom_call.1} parent=1 // pred_region
      %28 = dma.done [#allocation3], 3584
    $region17: #{tpu_custom_call.1} parent=1 // pred_fallthru
      _
    %v29 = vld [vmem:[%s0] sm:$0xff]
    %v30 = vld [vmem:[%s0 + $0x8] sm:$0xff]
    %v31 = vld [vmem:[%s0 + $0x10] sm:$0xff]
    %v32 = vld [vmem:[%s0 + $0x18] sm:$0xff]
    %v33 = vld [vmem:[%s0 + $0x20] sm:$0xff]
    %v34 = vld [vmem:[%s0 + $0x28] sm:$0xff]
    %v35 = vld [vmem:[%s0 + $0x30] sm:$0xff]
    %v36 = vld [vmem:[%s0 + $0x38] sm:$0xff]
    %v37 = vld [vmem:[#allocation2] sm:$0xff]
    %v38 = vld [vmem:[#allocation2 + $0x8] sm:$0xff]
    %vm39 = vcmask 130048
    %v41 = vsel %vm39, %v29, 0
    %v44 = vsel %vm39, %v30, 0
    %v47 = vsel %vm39, %v31, 0
    %v50 = vsel %vm39, %v32, 0
    %v53 = vsel %vm39, %v33, 0
    %v56 = vsel %vm39, %v34, 0
    %v59 = vsel %vm39, %v35, 0
    %v62 = vsel %vm39, %v36, 0
    %64 = vmatprep.subr.mxu0 0.0
    %65 = vmatpush1.msra.mxu0 %v37
    %66 = vmatprep.subr.mxu0 0.0
    %67 = vmatpush1.msra.mxu0 %v38
    %68 = vmatprep.subr.mxu0 0.0
    %69 = vmatpush1.msra.mxu0 0.0
    %70 = vmatprep.subr.mxu0 0.0
    %71 = vmatpush1.msra.mxu0 0.0
    %72 = vmatprep.subr.mxu0 0.0
    %73 = vmatpush1.msra.mxu0 0.0
    %74 = vmatprep.subr.mxu0 0.0
    %75 = vmatpush1.msra.mxu0 0.0
    %76 = vmatprep.subr.mxu0 0.0
    %77 = vmatpush1.msra.mxu0 0.0
    %78 = vmatprep.subr.mxu0 0.0
    %79 = vmatpush1.msra.mxu0 0.0
    %80 = vmatprep.subr.mxu0 0.0
    %81 = vmatpush1.msra.mxu0 0.0
    %82 = vmatprep.subr.mxu0 0.0
    %83 = vmatpush1.msra.mxu0 0.0
    %84 = vmatprep.subr.mxu0 0.0
    %85 = vmatpush1.msra.mxu0 0.0
    %86 = vmatprep.subr.mxu0 0.0
    %87 = vmatpush1.msra.mxu0 0.0
    %88 = vmatprep.subr.mxu0 0.0
    %89 = vmatpush1.msra.mxu0 0.0
    %90 = vmatprep.subr.mxu0 0.0
    %91 = vmatpush1.msra.mxu0 0.0
    %92 = vmatprep.subr.mxu0 0.0
    %93 = vmatpush1.msra.mxu0 0.0
    %94 = vmatprep.subr.mxu0 0.0
    %95 = vmatpush1.msra.mxu0 0.0
    %96 = vmatprep.subr.mxu0 0.0
    %97 = vmatpush1.msra.mxu0 0.0
    %98 = vmatprep.subr.mxu0 0.0
    %99 = vmatpush1.msra.mxu0 0.0
    %100 = vmatprep.subr.mxu0 0.0
    %101 = vmatpush1.msra.mxu0 0.0
    %102 = vmatprep.subr.mxu0 0.0
    %103 = vmatpush1.msra.mxu0 0.0
    %104 = vmatprep.subr.mxu0 0.0
    %105 = vmatpush1.msra.mxu0 0.0
    %106 = vmatprep.subr.mxu0 0.0
    %107 = vmatpush1.msra.mxu0 0.0
    %108 = vmatprep.subr.mxu0 0.0
    %109 = vmatpush1.msra.mxu0 0.0
    %110 = vmatprep.subr.mxu0 0.0
    %111 = vmatpush1.msra.mxu0 0.0
    %112 = vmatprep.subr.mxu0 0.0
    %113 = vmatpush1.msra.mxu0 0.0
    %114 = vmatprep.subr.mxu0 0.0
    %115 = vmatpush1.msra.mxu0 0.0
    %116 = vmatprep.subr.mxu0 0.0
    %117 = vmatpush1.msra.mxu0 0.0
    %118 = vmatprep.subr.mxu0 0.0
    %119 = vmatpush1.msra.mxu0 0.0
    %120 = vmatprep.subr.mxu0 0.0
    %121 = vmatpush1.msra.mxu0 0.0
    %122 = vmatprep.subr.mxu0 0.0
    %123 = vmatpush1.msra.mxu0 0.0
    %124 = vmatprep.subr.mxu0 0.0
    %125 = vmatpush1.msra.mxu0 0.0
    %126 = vmatprep.subr.mxu0 0.0
    %127 = vmatpush1.msra.mxu0 0.0
    %128 = vmatprep.mubr.f32.mxu0 0.0
    %129 = vmatmul.mubr.f32.gmra.mrb[0].mxu0 %v41
    %v130 = vpop.f32.mrb[0].mxu0
    %v131 = vadd.f32 0.0, %v130
    %v132 = vpop.f32.mrb[0].mxu0
    %133 = vmatprep.mubr.f32.mxu0 0.0
    %134 = vmatmul.mubr.f32.gmra.mrb[0].mxu0 %v44
    %v135 = vpop.f32.mrb[0].mxu0
    %v136 = vadd.f32 0.0, %v135
    %v137 = vpop.f32.mrb[0].mxu0
    %138 = vmatprep.mubr.f32.mxu0 0.0
    %139 = vmatmul.mubr.f32.gmra.mrb[0].mxu0 %v47
    %v140 = vpop.f32.mrb[0].mxu0
    %v141 = vadd.f32 0.0, %v140
    %v142 = vpop.f32.mrb[0].mxu0
    %143 = vmatprep.mubr.f32.mxu0 0.0
    %144 = vmatmul.mubr.f32.gmra.mrb[0].mxu0 %v50
    %v145 = vpop.f32.mrb[0].mxu0
    %v146 = vadd.f32 0.0, %v145
    %v147 = vpop.f32.mrb[0].mxu0
    %148 = vmatprep.mubr.f32.mxu0 0.0
    %149 = vmatmul.mubr.f32.gmra.mrb[0].mxu0 %v53
    %v150 = vpop.f32.mrb[0].mxu0
    %v151 = vadd.f32 0.0, %v150
    %v152 = vpop.f32.mrb[0].mxu0
    %153 = vmatprep.mubr.f32.mxu0 0.0
    %154 = vmatmul.mubr.f32.gmra.mrb[0].mxu0 %v56
    %v155 = vpop.f32.mrb[0].mxu0
    %v156 = vadd.f32 0.0, %v155
    %v157 = vpop.f32.mrb[0].mxu0
    %158 = vmatprep.mubr.f32.mxu0 0.0
    %159 = vmatmul.mubr.f32.gmra.mrb[0].mxu0 %v59
    %v160 = vpop.f32.mrb[0].mxu0
    %v161 = vadd.f32 0.0, %v160
    %v162 = vpop.f32.mrb[0].mxu0
    %163 = vmatprep.mubr.f32.mxu0 0.0
    %164 = vmatmul.mubr.f32.gmra.mrb[0].mxu0 %v62
    %v165 = vpop.f32.mrb[0].mxu0
    %v166 = vadd.f32 0.0, %v165
    %v167 = vpop.f32.mrb[0].mxu0
    %168 = vdwg.mxu0
    %v169 = vld [vmem:[%s2] sm:$0xf]
    %v170 = vmul.f32 %v131, %v131
    %v171 = vmul.f32 %v136, %v136
    %v172 = vmul.f32 %v141, %v141
    %v173 = vmul.f32 %v146, %v146
    %v174 = vmul.f32 %v151, %v151
    %v175 = vmul.f32 %v156, %v156
    %v176 = vmul.f32 %v161, %v161
    %v177 = vmul.f32 %v166, %v166
    %v178 = vmax.f32 %v170, 3.5527137e-15
    %v179 = vmax.f32 %v171, 3.5527137e-15
    %v180 = vmax.f32 %v172, 3.5527137e-15
    %v181 = vmax.f32 %v173, 3.5527137e-15
    %v182 = vmax.f32 %v174, 3.5527137e-15
    %v183 = vmax.f32 %v175, 3.5527137e-15
    %v184 = vmax.f32 %v176, 3.5527137e-15
    %v185 = vmax.f32 %v177, 3.5527137e-15
    %v186 = vrsqrt.pop %v178
    %v187 = vrsqrt.pop %v179
    %v188 = vrsqrt.pop %v180
    %v189 = vrsqrt.pop %v181
    %v190 = vrsqrt.pop %v182
    %v191 = vrsqrt.pop %v183
    %v192 = vrsqrt.pop %v184
    %v193 = vrsqrt.pop %v185
    %v194 = vmul.f32 %v170, %v186
    %v195 = vmul.f32 %v171, %v187
    %v196 = vmul.f32 %v172, %v188
    %v197 = vmul.f32 %v173, %v189
    %v198 = vmul.f32 %v174, %v190
    %v199 = vmul.f32 %v175, %v191
    %v200 = vmul.f32 %v176, %v192
    %v201 = vmul.f32 %v177, %v193
    %vm202 = vcmask 261120
    %v203 = vsel %vm202, %v194, 0.0
    %204 = vadd.xlane.f32.xlu0 %v203
    %v205 = vpop.xlane.xlu0 %204
    %v206 = vsel %vm202, %v195, 0.0
    %207 = vadd.xlane.f32.xlu0 %v206
    %v208 = vpop.xlane.xlu0 %207
    %v209 = vsel %vm202, %v196, 0.0
    %210 = vadd.xlane.f32.xlu0 %v209
    %v211 = vpop.xlane.xlu0 %210
    %v212 = vsel %vm202, %v197, 0.0
    %213 = vadd.xlane.f32.xlu0 %v212
    %v214 = vpop.xlane.xlu0 %213
    %v215 = vsel %vm202, %v198, 0.0
    %216 = vadd.xlane.f32.xlu0 %v215
    %v217 = vpop.xlane.xlu0 %216
    %v218 = vsel %vm202, %v199, 0.0
    %219 = vadd.xlane.f32.xlu0 %v218
    %v220 = vpop.xlane.xlu0 %219
    %v221 = vsel %vm202, %v200, 0.0
    %222 = vadd.xlane.f32.xlu0 %v221
    %v223 = vpop.xlane.xlu0 %222
    %v224 = vsel %vm202, %v201, 0.0
    %225 = vadd.xlane.f32.xlu0 %v224
    %v226 = vpop.xlane.xlu0 %225
    %v227 = vrcp.pop 32.0
    %v228 = vmul.f32 %v205, %v227
    %v229 = vmul.f32 %v208, %v227
    %v230 = vmul.f32 %v211, %v227
    %v231 = vmul.f32 %v214, %v227
    %v232 = vmul.f32 %v217, %v227
    %v233 = vmul.f32 %v220, %v227
    %v234 = vmul.f32 %v223, %v227
    %v235 = vmul.f32 %v226, %v227
    %v236 = vsub.f32 %v194, %v228
    %v237 = vsub.f32 %v195, %v229
    %v238 = vsub.f32 %v196, %v230
    %v239 = vsub.f32 %v197, %v231
    %v240 = vsub.f32 %v198, %v232
    %v241 = vsub.f32 %v199, %v233
    %v242 = vsub.f32 %v200, %v234
    %v243 = vsub.f32 %v201, %v235
    %v244 = vmul.f32 %v236, %v236
    %v245 = vmul.f32 %v237, %v237
    %v246 = vmul.f32 %v238, %v238
    %v247 = vmul.f32 %v239, %v239
    %v248 = vmul.f32 %v240, %v240
    %v249 = vmul.f32 %v241, %v241
    %v250 = vmul.f32 %v242, %v242
    %v251 = vmul.f32 %v243, %v243
    %v252 = vsel %vm202, %v244, 0.0
    %253 = vadd.xlane.f32.xlu0 %v252
    %v254 = vpop.xlane.xlu0 %253
    %v255 = vsel %vm202, %v245, 0.0
    %256 = vadd.xlane.f32.xlu0 %v255
    %v257 = vpop.xlane.xlu0 %256
    %v258 = vsel %vm202, %v246, 0.0
    %259 = vadd.xlane.f32.xlu0 %v258
    %v260 = vpop.xlane.xlu0 %259
    %v261 = vsel %vm202, %v247, 0.0
    %262 = vadd.xlane.f32.xlu0 %v261
    %v263 = vpop.xlane.xlu0 %262
    %v264 = vsel %vm202, %v248, 0.0
    %265 = vadd.xlane.f32.xlu0 %v264
    %v266 = vpop.xlane.xlu0 %265
    %v267 = vsel %vm202, %v249, 0.0
    %268 = vadd.xlane.f32.xlu0 %v267
    %v269 = vpop.xlane.xlu0 %268
    %v270 = vsel %vm202, %v250, 0.0
    %271 = vadd.xlane.f32.xlu0 %v270
    %v272 = vpop.xlane.xlu0 %271
    %v273 = vsel %vm202, %v251, 0.0
    %274 = vadd.xlane.f32.xlu0 %v273
    %v275 = vpop.xlane.xlu0 %274
    %v276 = vmul.f32 %v254, %v227
    %v277 = vmul.f32 %v257, %v227
    %v278 = vmul.f32 %v260, %v227
    %v279 = vmul.f32 %v263, %v227
    %v280 = vmul.f32 %v266, %v227
    %v281 = vmul.f32 %v269, %v227
    %v282 = vmul.f32 %v272, %v227
    %v283 = vmul.f32 %v275, %v227
    %v284 = vadd.f32 %v276, 1e-05
    %v285 = vadd.f32 %v277, 1e-05
    %v286 = vadd.f32 %v278, 1e-05
    %v287 = vadd.f32 %v279, 1e-05
    %v288 = vadd.f32 %v280, 1e-05
    %v289 = vadd.f32 %v281, 1e-05
    %v290 = vadd.f32 %v282, 1e-05
    %v291 = vadd.f32 %v283, 1e-05
    %v292 = vrsqrt.pop %v284
    %v293 = vrsqrt.pop %v285
    %v294 = vrsqrt.pop %v286
    %v295 = vrsqrt.pop %v287
    %v296 = vrsqrt.pop %v288
    %v297 = vrsqrt.pop %v289
    %v298 = vrsqrt.pop %v290
    %v299 = vrsqrt.pop %v291
    %v300 = vmul.f32 %v236, %v292
    %v301 = vmul.f32 %v237, %v293
    %v302 = vmul.f32 %v238, %v294
    %v303 = vmul.f32 %v239, %v295
    %v304 = vmul.f32 %v240, %v296
    %v305 = vmul.f32 %v241, %v297
    %v306 = vmul.f32 %v242, %v298
    %v307 = vmul.f32 %v243, %v299
    %v308 = vlaneseq
    %v309 = vshrl.u32 %v308, 7
    %v310 = vsub.s32 0, %v309
    %v311 = vrot.slane %v169, %v310
    %v312 = vmul.f32 %v300, %v311
    %v313 = vmul.f32 %v301, %v311
    %v314 = vmul.f32 %v302, %v311
    %v315 = vmul.f32 %v303, %v311
    %v316 = vmul.f32 %v304, %v311
    %v317 = vmul.f32 %v305, %v311
    %v318 = vmul.f32 %v306, %v311
    %v319 = vmul.f32 %v307, %v311
    %v320 = vlaneseq
    %v321 = vshrl.u32 %v320, 7
    %v322 = vsub.s32 1, %v321
    %v323 = vrot.slane %v169, %v322
    %v324 = vadd.f32 %v312, %v323
    %v325 = vadd.f32 %v313, %v323
    %v326 = vadd.f32 %v314, %v323
    %v327 = vadd.f32 %v315, %v323
    %v328 = vadd.f32 %v316, %v323
    %v329 = vadd.f32 %v317, %v323
    %v330 = vadd.f32 %v318, %v323
    %v331 = vadd.f32 %v319, %v323
    %v332 = vmax.f32 %v324, 0.0
    %v333 = vmax.f32 %v325, 0.0
    %v334 = vmax.f32 %v326, 0.0
    %v335 = vmax.f32 %v327, 0.0
    %v336 = vmax.f32 %v328, 0.0
    %v337 = vmax.f32 %v329, 0.0
    %v338 = vmax.f32 %v330, 0.0
    %v339 = vmax.f32 %v331, 0.0
    %v340 = vmul.f32 %v332, %v186
    %v341 = vmul.f32 %v333, %v187
    %v342 = vmul.f32 %v334, %v188
    %v343 = vmul.f32 %v335, %v189
    %v344 = vmul.f32 %v336, %v190
    %v345 = vmul.f32 %v337, %v191
    %v346 = vmul.f32 %v338, %v192
    %v347 = vmul.f32 %v339, %v193
    %v348 = vmul.f32 %v131, %v340
    %v349 = vmul.f32 %v136, %v341
    %v350 = vmul.f32 %v141, %v342
    %v351 = vmul.f32 %v146, %v343
    %v352 = vmul.f32 %v151, %v344
    %v353 = vmul.f32 %v156, %v345
    %v354 = vmul.f32 %v161, %v346
    %v355 = vmul.f32 %v166, %v347
    %v356 = vmul.f32 %v29, %v29
    %v357 = vmul.f32 %v30, %v30
    %v358 = vmul.f32 %v31, %v31
    %v359 = vmul.f32 %v32, %v32
    %v360 = vmul.f32 %v33, %v33
    %v361 = vmul.f32 %v34, %v34
    %v362 = vmul.f32 %v35, %v35
    %v363 = vmul.f32 %v36, %v36
    %372 = vrot.lane.b32.xlu0 %v356, 120
    %v373 = vpop.permute.xlu0 %372
    %374 = vrot.lane.b32.xlu0 %v357, 120
    %v375 = vpop.permute.xlu0 %374
    %376 = vrot.lane.b32.xlu0 %v358, 120
    %v377 = vpop.permute.xlu0 %376
    %378 = vrot.lane.b32.xlu0 %v359, 120
    %v379 = vpop.permute.xlu0 %378
    %380 = vrot.lane.b32.xlu0 %v360, 120
    %v381 = vpop.permute.xlu0 %380
    %382 = vrot.lane.b32.xlu0 %v361, 120
    %v383 = vpop.permute.xlu0 %382
    %384 = vrot.lane.b32.xlu0 %v362, 120
    %v385 = vpop.permute.xlu0 %384
    %386 = vrot.lane.b32.xlu0 %v363, 120
    %v387 = vpop.permute.xlu0 %386
    %v396 = vadd.f32 %v356, %v373
    %v397 = vadd.f32 %v357, %v375
    %v398 = vadd.f32 %v358, %v377
    %v399 = vadd.f32 %v359, %v379
    %v400 = vadd.f32 %v360, %v381
    %v401 = vadd.f32 %v361, %v383
    %v402 = vadd.f32 %v362, %v385
    %v403 = vadd.f32 %v363, %v387
    %404 = vrot.lane.b32.xlu0 %v356, 112
    %v405 = vpop.permute.xlu0 %404
    %406 = vrot.lane.b32.xlu0 %v357, 112
    %v407 = vpop.permute.xlu0 %406
    %408 = vrot.lane.b32.xlu0 %v358, 112
    %v409 = vpop.permute.xlu0 %408
    %410 = vrot.lane.b32.xlu0 %v359, 112
    %v411 = vpop.permute.xlu0 %410
    %412 = vrot.lane.b32.xlu0 %v360, 112
    %v413 = vpop.permute.xlu0 %412
    %414 = vrot.lane.b32.xlu0 %v361, 112
    %v415 = vpop.permute.xlu0 %414
    %416 = vrot.lane.b32.xlu0 %v362, 112
    %v417 = vpop.permute.xlu0 %416
    %418 = vrot.lane.b32.xlu0 %v363, 112
    %v419 = vpop.permute.xlu0 %418
    %v428 = vadd.f32 %v396, %v405
    %v429 = vadd.f32 %v397, %v407
    %v430 = vadd.f32 %v398, %v409
    %v431 = vadd.f32 %v399, %v411
    %v432 = vadd.f32 %v400, %v413
    %v433 = vadd.f32 %v401, %v415
    %v434 = vadd.f32 %v402, %v417
    %v435 = vadd.f32 %v403, %v419
    %v436 = vmax.f32 %v428, 3.5527137e-15
    %v437 = vmax.f32 %v429, 3.5527137e-15
    %v438 = vmax.f32 %v430, 3.5527137e-15
    %v439 = vmax.f32 %v431, 3.5527137e-15
    %v440 = vmax.f32 %v432, 3.5527137e-15
    %v441 = vmax.f32 %v433, 3.5527137e-15
    %v442 = vmax.f32 %v434, 3.5527137e-15
    %v443 = vmax.f32 %v435, 3.5527137e-15
    %v444 = vrsqrt.pop %v436
    %v445 = vrsqrt.pop %v437
    %v446 = vrsqrt.pop %v438
    %v447 = vrsqrt.pop %v439
    %v448 = vrsqrt.pop %v440
    %v449 = vrsqrt.pop %v441
    %v450 = vrsqrt.pop %v442
    %v451 = vrsqrt.pop %v443
    %v452 = vmul.f32 %v428, %v444
    %v453 = vmul.f32 %v429, %v445
    %v454 = vmul.f32 %v430, %v446
    %v455 = vmul.f32 %v431, %v447
    %v456 = vmul.f32 %v432, %v448
    %v457 = vmul.f32 %v433, %v449
    %v458 = vmul.f32 %v434, %v450
    %v459 = vmul.f32 %v435, %v451
    %468 = vrot.lane.b32.xlu0 %v452, 112
    %v469 = vpop.permute.xlu0 %468
    %470 = vrot.lane.b32.xlu0 %v453, 112
    %v471 = vpop.permute.xlu0 %470
    %472 = vrot.lane.b32.xlu0 %v454, 112
    %v473 = vpop.permute.xlu0 %472
    %474 = vrot.lane.b32.xlu0 %v455, 112
    %v475 = vpop.permute.xlu0 %474
    %476 = vrot.lane.b32.xlu0 %v456, 112
    %v477 = vpop.permute.xlu0 %476
    %478 = vrot.lane.b32.xlu0 %v457, 112
    %v479 = vpop.permute.xlu0 %478
    %480 = vrot.lane.b32.xlu0 %v458, 112
    %v481 = vpop.permute.xlu0 %480
    %482 = vrot.lane.b32.xlu0 %v459, 112
    %v483 = vpop.permute.xlu0 %482
    %vm492 = vcmask 64512
    %v493 = vsel %vm492, %v469, 0.0
    %494 = vadd.xlane.f32.xlu0 %v493
    %v495 = vpop.xlane.xlu0 %494
    %v496 = vsel %vm492, %v471, 0.0
    %497 = vadd.xlane.f32.xlu0 %v496
    %v498 = vpop.xlane.xlu0 %497
    %v499 = vsel %vm492, %v473, 0.0
    %500 = vadd.xlane.f32.xlu0 %v499
    %v501 = vpop.xlane.xlu0 %500
    %v502 = vsel %vm492, %v475, 0.0
    %503 = vadd.xlane.f32.xlu0 %v502
    %v504 = vpop.xlane.xlu0 %503
    %v505 = vsel %vm492, %v477, 0.0
    %506 = vadd.xlane.f32.xlu0 %v505
    %v507 = vpop.xlane.xlu0 %506
    %v508 = vsel %vm492, %v479, 0.0
    %509 = vadd.xlane.f32.xlu0 %v508
    %v510 = vpop.xlane.xlu0 %509
    %v511 = vsel %vm492, %v481, 0.0
    %512 = vadd.xlane.f32.xlu0 %v511
    %v513 = vpop.xlane.xlu0 %512
    %v514 = vsel %vm492, %v483, 0.0
    %515 = vadd.xlane.f32.xlu0 %v514
    %v516 = vpop.xlane.xlu0 %515
    %v517 = vrcp.pop 8.0
    %v518 = vmul.f32 %v495, %v517
    %v519 = vmul.f32 %v498, %v517
    %v520 = vmul.f32 %v501, %v517
    %v521 = vmul.f32 %v504, %v517
    %v522 = vmul.f32 %v507, %v517
    %v523 = vmul.f32 %v510, %v517
    %v524 = vmul.f32 %v513, %v517
    %v525 = vmul.f32 %v516, %v517
    %v526 = vsub.f32 %v452, %v518
    %v527 = vsub.f32 %v453, %v519
    %v528 = vsub.f32 %v454, %v520
    %v529 = vsub.f32 %v455, %v521
    %v530 = vsub.f32 %v456, %v522
    %v531 = vsub.f32 %v457, %v523
    %v532 = vsub.f32 %v458, %v524
    %v533 = vsub.f32 %v459, %v525
    %v534 = vmul.f32 %v526, %v526
    %v535 = vmul.f32 %v527, %v527
    %v536 = vmul.f32 %v528, %v528
    %v537 = vmul.f32 %v529, %v529
    %v538 = vmul.f32 %v530, %v530
    %v539 = vmul.f32 %v531, %v531
    %v540 = vmul.f32 %v532, %v532
    %v541 = vmul.f32 %v533, %v533
    %550 = vrot.lane.b32.xlu0 %v534, 112
    %v551 = vpop.permute.xlu0 %550
    %552 = vrot.lane.b32.xlu0 %v535, 112
    %v553 = vpop.permute.xlu0 %552
    %554 = vrot.lane.b32.xlu0 %v536, 112
    %v555 = vpop.permute.xlu0 %554
    %556 = vrot.lane.b32.xlu0 %v537, 112
    %v557 = vpop.permute.xlu0 %556
    %558 = vrot.lane.b32.xlu0 %v538, 112
    %v559 = vpop.permute.xlu0 %558
    %560 = vrot.lane.b32.xlu0 %v539, 112
    %v561 = vpop.permute.xlu0 %560
    %562 = vrot.lane.b32.xlu0 %v540, 112
    %v563 = vpop.permute.xlu0 %562
    %564 = vrot.lane.b32.xlu0 %v541, 112
    %v565 = vpop.permute.xlu0 %564
    %v574 = vsel %vm492, %v551, 0.0
    %575 = vadd.xlane.f32.xlu0 %v574
    %v576 = vpop.xlane.xlu0 %575
    %v577 = vsel %vm492, %v553, 0.0
    %578 = vadd.xlane.f32.xlu0 %v577
    %v579 = vpop.xlane.xlu0 %578
    %v580 = vsel %vm492, %v555, 0.0
    %581 = vadd.xlane.f32.xlu0 %v580
    %v582 = vpop.xlane.xlu0 %581
    %v583 = vsel %vm492, %v557, 0.0
    %584 = vadd.xlane.f32.xlu0 %v583
    %v585 = vpop.xlane.xlu0 %584
    %v586 = vsel %vm492, %v559, 0.0
    %587 = vadd.xlane.f32.xlu0 %v586
    %v588 = vpop.xlane.xlu0 %587
    %v589 = vsel %vm492, %v561, 0.0
    %590 = vadd.xlane.f32.xlu0 %v589
    %v591 = vpop.xlane.xlu0 %590
    %v592 = vsel %vm492, %v563, 0.0
    %593 = vadd.xlane.f32.xlu0 %v592
    %v594 = vpop.xlane.xlu0 %593
    %v595 = vsel %vm492, %v565, 0.0
    %596 = vadd.xlane.f32.xlu0 %v595
    %v597 = vpop.xlane.xlu0 %596
    %v598 = vmul.f32 %v576, %v517
    %v599 = vmul.f32 %v579, %v517
    %v600 = vmul.f32 %v582, %v517
    %v601 = vmul.f32 %v585, %v517
    %v602 = vmul.f32 %v588, %v517
    %v603 = vmul.f32 %v591, %v517
    %v604 = vmul.f32 %v594, %v517
    %v605 = vmul.f32 %v597, %v517
    %v606 = vadd.f32 %v598, 1e-05
    %v607 = vadd.f32 %v599, 1e-05
    %v608 = vadd.f32 %v600, 1e-05
    %v609 = vadd.f32 %v601, 1e-05
    %v610 = vadd.f32 %v602, 1e-05
    %v611 = vadd.f32 %v603, 1e-05
    %v612 = vadd.f32 %v604, 1e-05
    %v613 = vadd.f32 %v605, 1e-05
    %v614 = vrsqrt.pop %v606
    %v615 = vrsqrt.pop %v607
    %v616 = vrsqrt.pop %v608
    %v617 = vrsqrt.pop %v609
    %v618 = vrsqrt.pop %v610
    %v619 = vrsqrt.pop %v611
    %v620 = vrsqrt.pop %v612
    %v621 = vrsqrt.pop %v613
    %v622 = vmul.f32 %v526, %v614
    %v623 = vmul.f32 %v527, %v615
    %v624 = vmul.f32 %v528, %v616
    %v625 = vmul.f32 %v529, %v617
    %v626 = vmul.f32 %v530, %v618
    %v627 = vmul.f32 %v531, %v619
    %v628 = vmul.f32 %v532, %v620
    %v629 = vmul.f32 %v533, %v621
    %v630 = vlaneseq
    %v631 = vshrl.u32 %v630, 7
    %v632 = vsub.s32 2, %v631
    %v633 = vrot.slane %v169, %v632
    %635 = vrot.lane.b32.xlu0 %v633, 16
    %v636 = vpop.permute.xlu0 %635
    %v638 = vmul.f32 %v622, %v636
    %v639 = vmul.f32 %v623, %v636
    %v640 = vmul.f32 %v624, %v636
    %v641 = vmul.f32 %v625, %v636
    %v642 = vmul.f32 %v626, %v636
    %v643 = vmul.f32 %v627, %v636
    %v644 = vmul.f32 %v628, %v636
    %v645 = vmul.f32 %v629, %v636
    %v646 = vlaneseq
    %v647 = vshrl.u32 %v646, 7
    %v648 = vsub.s32 3, %v647
    %v649 = vrot.slane %v169, %v648
    %651 = vrot.lane.b32.xlu0 %v649, 16
    %v652 = vpop.permute.xlu0 %651
    %v654 = vadd.f32 %v638, %v652
    %v655 = vadd.f32 %v639, %v652
    %v656 = vadd.f32 %v640, %v652
    %v657 = vadd.f32 %v641, %v652
    %v658 = vadd.f32 %v642, %v652
    %v659 = vadd.f32 %v643, %v652
    %v660 = vadd.f32 %v644, %v652
    %v661 = vadd.f32 %v645, %v652
    %v662 = vmax.f32 %v654, 0.0
    %v663 = vmax.f32 %v655, 0.0
    %v664 = vmax.f32 %v656, 0.0
    %v665 = vmax.f32 %v657, 0.0
    %v666 = vmax.f32 %v658, 0.0
    %v667 = vmax.f32 %v659, 0.0
    %v668 = vmax.f32 %v660, 0.0
    %v669 = vmax.f32 %v661, 0.0
    %v670 = vmul.f32 %v662, %v444
    %v671 = vmul.f32 %v663, %v445
    %v672 = vmul.f32 %v664, %v446
    %v673 = vmul.f32 %v665, %v447
    %v674 = vmul.f32 %v666, %v448
    %v675 = vmul.f32 %v667, %v449
    %v676 = vmul.f32 %v668, %v450
    %v677 = vmul.f32 %v669, %v451
    %686 = vrot.lane.b32.xlu0 %v670, 112
    %v687 = vpop.permute.xlu0 %686
    %688 = vrot.lane.b32.xlu0 %v671, 112
    %v689 = vpop.permute.xlu0 %688
    %690 = vrot.lane.b32.xlu0 %v672, 112
    %v691 = vpop.permute.xlu0 %690
    %692 = vrot.lane.b32.xlu0 %v673, 112
    %v693 = vpop.permute.xlu0 %692
    %694 = vrot.lane.b32.xlu0 %v674, 112
    %v695 = vpop.permute.xlu0 %694
    %696 = vrot.lane.b32.xlu0 %v675, 112
    %v697 = vpop.permute.xlu0 %696
    %698 = vrot.lane.b32.xlu0 %v676, 112
    %v699 = vpop.permute.xlu0 %698
    %700 = vrot.lane.b32.xlu0 %v677, 112
    %v701 = vpop.permute.xlu0 %700
    %710 = vrot.lane.b32.xlu0 %v670, 120
    %v711 = vpop.permute.xlu0 %710
    %712 = vrot.lane.b32.xlu0 %v671, 120
    %v713 = vpop.permute.xlu0 %712
    %714 = vrot.lane.b32.xlu0 %v672, 120
    %v715 = vpop.permute.xlu0 %714
    %716 = vrot.lane.b32.xlu0 %v673, 120
    %v717 = vpop.permute.xlu0 %716
    %718 = vrot.lane.b32.xlu0 %v674, 120
    %v719 = vpop.permute.xlu0 %718
    %720 = vrot.lane.b32.xlu0 %v675, 120
    %v721 = vpop.permute.xlu0 %720
    %722 = vrot.lane.b32.xlu0 %v676, 120
    %v723 = vpop.permute.xlu0 %722
    %724 = vrot.lane.b32.xlu0 %v677, 120
    %v725 = vpop.permute.xlu0 %724
    %v734 = vsel %vm492, %v687, %v711
    %v735 = vsel %vm492, %v689, %v713
    %v736 = vsel %vm492, %v691, %v715
    %v737 = vsel %vm492, %v693, %v717
    %v738 = vsel %vm492, %v695, %v719
    %v739 = vsel %vm492, %v697, %v721
    %v740 = vsel %vm492, %v699, %v723
    %v741 = vsel %vm492, %v701, %v725
    %v742 = vsel %vm39, %v734, %v670
    %v743 = vsel %vm39, %v735, %v671
    %v744 = vsel %vm39, %v736, %v672
    %v745 = vsel %vm39, %v737, %v673
    %v746 = vsel %vm39, %v738, %v674
    %v747 = vsel %vm39, %v739, %v675
    %v748 = vsel %vm39, %v740, %v676
    %v749 = vsel %vm39, %v741, %v677
    %758 = vrot.lane.b32.xlu0 %v742, 16
    %v759 = vpop.permute.xlu0 %758
    %760 = vrot.lane.b32.xlu0 %v743, 16
    %v761 = vpop.permute.xlu0 %760
    %762 = vrot.lane.b32.xlu0 %v744, 16
    %v763 = vpop.permute.xlu0 %762
    %764 = vrot.lane.b32.xlu0 %v745, 16
    %v765 = vpop.permute.xlu0 %764
    %766 = vrot.lane.b32.xlu0 %v746, 16
    %v767 = vpop.permute.xlu0 %766
    %768 = vrot.lane.b32.xlu0 %v747, 16
    %v769 = vpop.permute.xlu0 %768
    %770 = vrot.lane.b32.xlu0 %v748, 16
    %v771 = vpop.permute.xlu0 %770
    %772 = vrot.lane.b32.xlu0 %v749, 16
    %v773 = vpop.permute.xlu0 %772
    %v782 = vmul.f32 %v29, %v759
    %v783 = vmul.f32 %v30, %v761
    %v784 = vmul.f32 %v31, %v763
    %v785 = vmul.f32 %v32, %v765
    %v786 = vmul.f32 %v33, %v767
    %v787 = vmul.f32 %v34, %v769
    %v788 = vmul.f32 %v35, %v771
    %v789 = vmul.f32 %v36, %v773
    %s790 = scalar_lea.vmem [#allocation2], 56
    %v791 = vld [vmem:[%s790] sm:$0xff]
    %v792 = vld [vmem:[%s790 + $0x8] sm:$0xff]
    %v793 = vld [vmem:[%s790 + $0x10] sm:$0xff]
    %v794 = vld [vmem:[%s790 + $0x18] sm:$0xff]
    %v795 = vld [vmem:[%s790 + $0x20] sm:$0xff]
    %v796 = vld [vmem:[%s790 + $0x28] sm:$0xff]
    %v797 = vld [vmem:[%s790 + $0x30] sm:$0xff]
    %806 = vrot.lane.b32.xlu0 %v782, 16
    %v807 = vpop.permute.xlu0 %806
    %808 = vrot.lane.b32.xlu0 %v783, 16
    %v809 = vpop.permute.xlu0 %808
    %810 = vrot.lane.b32.xlu0 %v784, 16
    %v811 = vpop.permute.xlu0 %810
    %812 = vrot.lane.b32.xlu0 %v785, 16
    %v813 = vpop.permute.xlu0 %812
    %814 = vrot.lane.b32.xlu0 %v786, 16
    %v815 = vpop.permute.xlu0 %814
    %816 = vrot.lane.b32.xlu0 %v787, 16
    %v817 = vpop.permute.xlu0 %816
    %818 = vrot.lane.b32.xlu0 %v788, 16
    %v819 = vpop.permute.xlu0 %818
    %820 = vrot.lane.b32.xlu0 %v789, 16
    %v821 = vpop.permute.xlu0 %820
    %v830 = vsel %vm202, %v348, %v807
    %v831 = vsel %vm202, %v349, %v809
    %v832 = vsel %vm202, %v350, %v811
    %v833 = vsel %vm202, %v351, %v813
    %v834 = vsel %vm202, %v352, %v815
    %v835 = vsel %vm202, %v353, %v817
    %v836 = vsel %vm202, %v354, %v819
    %v837 = vsel %vm202, %v355, %v821
    %vm838 = vcmask 457728
    %v840 = vsel %vm838, %v830, 0
    %v843 = vsel %vm838, %v831, 0
    %v846 = vsel %vm838, %v832, 0
    %v849 = vsel %vm838, %v833, 0
    %v852 = vsel %vm838, %v834, 0
    %v855 = vsel %vm838, %v835, 0
    %v858 = vsel %vm838, %v836, 0
    %v861 = vsel %vm838, %v837, 0
    %863 = vmatprep.subr.mxu0 0.0
    %864 = vmatpush1.msra.mxu0 %v791
    %865 = vmatprep.subr.mxu0 0.0
    %866 = vmatpush1.msra.mxu0 %v792
    %867 = vmatprep.subr.mxu0 0.0
    %868 = vmatpush1.msra.mxu0 %v793
    %869 = vmatprep.subr.mxu0 0.0
    %870 = vmatpush1.msra.mxu0 %v794
    %871 = vmatprep.subr.mxu0 0.0
    %872 = vmatpush1.msra.mxu0 %v795
    %873 = vmatprep.subr.mxu0 0.0
    %874 = vmatpush1.msra.mxu0 %v796
    %875 = vmatprep.subr.mxu0 0.0
    %876 = vmatpush1.msra.mxu0 %v797
    %877 = vmatprep.subr.mxu0 0.0
    %878 = vmatpush1.msra.mxu0 0.0
    %879 = vmatprep.subr.mxu0 0.0
    %880 = vmatpush1.msra.mxu0 0.0
    %881 = vmatprep.subr.mxu0 0.0
    %882 = vmatpush1.msra.mxu0 0.0
    %883 = vmatprep.subr.mxu0 0.0
    %884 = vmatpush1.msra.mxu0 0.0
    %885 = vmatprep.subr.mxu0 0.0
    %886 = vmatpush1.msra.mxu0 0.0
    %887 = vmatprep.subr.mxu0 0.0
    %888 = vmatpush1.msra.mxu0 0.0
    %889 = vmatprep.subr.mxu0 0.0
    %890 = vmatpush1.msra.mxu0 0.0
    %891 = vmatprep.subr.mxu0 0.0
    %892 = vmatpush1.msra.mxu0 0.0
    %893 = vmatprep.subr.mxu0 0.0
    %894 = vmatpush1.msra.mxu0 0.0
    %895 = vmatprep.subr.mxu0 0.0
    %896 = vmatpush1.msra.mxu0 0.0
    %897 = vmatprep.subr.mxu0 0.0
    %898 = vmatpush1.msra.mxu0 0.0
    %899 = vmatprep.subr.mxu0 0.0
    %900 = vmatpush1.msra.mxu0 0.0
    %901 = vmatprep.subr.mxu0 0.0
    %902 = vmatpush1.msra.mxu0 0.0
    %903 = vmatprep.subr.mxu0 0.0
    %904 = vmatpush1.msra.mxu0 0.0
    %905 = vmatprep.subr.mxu0 0.0
    %906 = vmatpush1.msra.mxu0 0.0
    %907 = vmatprep.subr.mxu0 0.0
    %908 = vmatpush1.msra.mxu0 0.0
    %909 = vmatprep.subr.mxu0 0.0
    %910 = vmatpush1.msra.mxu0 0.0
    %911 = vmatprep.subr.mxu0 0.0
    %912 = vmatpush1.msra.mxu0 0.0
    %913 = vmatprep.subr.mxu0 0.0
    %914 = vmatpush1.msra.mxu0 0.0
    %915 = vmatprep.subr.mxu0 0.0
    %916 = vmatpush1.msra.mxu0 0.0
    %917 = vmatprep.subr.mxu0 0.0
    %918 = vmatpush1.msra.mxu0 0.0
    %919 = vmatprep.subr.mxu0 0.0
    %920 = vmatpush1.msra.mxu0 0.0
    %921 = vmatprep.subr.mxu0 0.0
    %922 = vmatpush1.msra.mxu0 0.0
    %923 = vmatprep.subr.mxu0 0.0
    %924 = vmatpush1.msra.mxu0 0.0
    %925 = vmatprep.subr.mxu0 0.0
    %926 = vmatpush1.msra.mxu0 0.0
    %927 = vmatprep.mubr.f32.mxu0 0.0
    %928 = vmatmul.mubr.f32.gmra.mrb[0].mxu0 %v840
    %v929 = vpop.f32.mrb[0].mxu0
    %v930 = vadd.f32 0.0, %v929
    %v931 = vpop.f32.mrb[0].mxu0
    %932 = vmatprep.mubr.f32.mxu0 0.0
    %933 = vmatmul.mubr.f32.gmra.mrb[0].mxu0 %v843
    %v934 = vpop.f32.mrb[0].mxu0
    %v935 = vadd.f32 0.0, %v934
    %v936 = vpop.f32.mrb[0].mxu0
    %937 = vmatprep.mubr.f32.mxu0 0.0
    %938 = vmatmul.mubr.f32.gmra.mrb[0].mxu0 %v846
    %v939 = vpop.f32.mrb[0].mxu0
    %v940 = vadd.f32 0.0, %v939
    %v941 = vpop.f32.mrb[0].mxu0
    %942 = vmatprep.mubr.f32.mxu0 0.0
    %943 = vmatmul.mubr.f32.gmra.mrb[0].mxu0 %v849
    %v944 = vpop.f32.mrb[0].mxu0
    %v945 = vadd.f32 0.0, %v944
    %v946 = vpop.f32.mrb[0].mxu0
    %947 = vmatprep.mubr.f32.mxu0 0.0
    %948 = vmatmul.mubr.f32.gmra.mrb[0].mxu0 %v852
    %v949 = vpop.f32.mrb[0].mxu0
    %v950 = vadd.f32 0.0, %v949
    %v951 = vpop.f32.mrb[0].mxu0
    %952 = vmatprep.mubr.f32.mxu0 0.0
    %953 = vmatmul.mubr.f32.gmra.mrb[0].mxu0 %v855
    %v954 = vpop.f32.mrb[0].mxu0
    %v955 = vadd.f32 0.0, %v954
    %v956 = vpop.f32.mrb[0].mxu0
    %957 = vmatprep.mubr.f32.mxu0 0.0
    %958 = vmatmul.mubr.f32.gmra.mrb[0].mxu0 %v858
    %v959 = vpop.f32.mrb[0].mxu0
    %v960 = vadd.f32 0.0, %v959
    %v961 = vpop.f32.mrb[0].mxu0
    %962 = vmatprep.mubr.f32.mxu0 0.0
    %963 = vmatmul.mubr.f32.gmra.mrb[0].mxu0 %v861
    %v964 = vpop.f32.mrb[0].mxu0
    %v965 = vadd.f32 0.0, %v964
    %v966 = vpop.f32.mrb[0].mxu0
    %967 = vdwg.mxu0
    %s968 = scalar_lea.vmem %s2, 4
    %v969 = vld [vmem:[%s968] sm:$0xf]
    %v970 = vmul.f32 %v930, %v930
    %v971 = vmul.f32 %v935, %v935
    %v972 = vmul.f32 %v940, %v940
    %v973 = vmul.f32 %v945, %v945
    %v974 = vmul.f32 %v950, %v950
    %v975 = vmul.f32 %v955, %v955
    %v976 = vmul.f32 %v960, %v960
    %v977 = vmul.f32 %v965, %v965
    %v978 = vmax.f32 %v970, 3.5527137e-15
    %v979 = vmax.f32 %v971, 3.5527137e-15
    %v980 = vmax.f32 %v972, 3.5527137e-15
    %v981 = vmax.f32 %v973, 3.5527137e-15
    %v982 = vmax.f32 %v974, 3.5527137e-15
    %v983 = vmax.f32 %v975, 3.5527137e-15
    %v984 = vmax.f32 %v976, 3.5527137e-15
    %v985 = vmax.f32 %v977, 3.5527137e-15
    %v986 = vrsqrt.pop %v978
    %v987 = vrsqrt.pop %v979
    %v988 = vrsqrt.pop %v980
    %v989 = vrsqrt.pop %v981
    %v990 = vrsqrt.pop %v982
    %v991 = vrsqrt.pop %v983
    %v992 = vrsqrt.pop %v984
    %v993 = vrsqrt.pop %v985
    %v994 = vmul.f32 %v970, %v986
    %v995 = vmul.f32 %v971, %v987
    %v996 = vmul.f32 %v972, %v988
    %v997 = vmul.f32 %v973, %v989
    %v998 = vmul.f32 %v974, %v990
    %v999 = vmul.f32 %v975, %v991
    %v1000 = vmul.f32 %v976, %v992
    %v1001 = vmul.f32 %v977, %v993
    %v1002 = vsel %vm202, %v994, 0.0
    %1003 = vadd.xlane.f32.xlu0 %v1002
    %v1004 = vpop.xlane.xlu0 %1003
    %v1005 = vsel %vm202, %v995, 0.0
    %1006 = vadd.xlane.f32.xlu0 %v1005
    %v1007 = vpop.xlane.xlu0 %1006
    %v1008 = vsel %vm202, %v996, 0.0
    %1009 = vadd.xlane.f32.xlu0 %v1008
    %v1010 = vpop.xlane.xlu0 %1009
    %v1011 = vsel %vm202, %v997, 0.0
    %1012 = vadd.xlane.f32.xlu0 %v1011
    %v1013 = vpop.xlane.xlu0 %1012
    %v1014 = vsel %vm202, %v998, 0.0
    %1015 = vadd.xlane.f32.xlu0 %v1014
    %v1016 = vpop.xlane.xlu0 %1015
    %v1017 = vsel %vm202, %v999, 0.0
    %1018 = vadd.xlane.f32.xlu0 %v1017
    %v1019 = vpop.xlane.xlu0 %1018
    %v1020 = vsel %vm202, %v1000, 0.0
    %1021 = vadd.xlane.f32.xlu0 %v1020
    %v1022 = vpop.xlane.xlu0 %1021
    %v1023 = vsel %vm202, %v1001, 0.0
    %1024 = vadd.xlane.f32.xlu0 %v1023
    %v1025 = vpop.xlane.xlu0 %1024
    %v1026 = vmul.f32 %v1004, %v227
    %v1027 = vmul.f32 %v1007, %v227
    %v1028 = vmul.f32 %v1010, %v227
    %v1029 = vmul.f32 %v1013, %v227
    %v1030 = vmul.f32 %v1016, %v227
    %v1031 = vmul.f32 %v1019, %v227
    %v1032 = vmul.f32 %v1022, %v227
    %v1033 = vmul.f32 %v1025, %v227
    %v1034 = vsub.f32 %v994, %v1026
    %v1035 = vsub.f32 %v995, %v1027
    %v1036 = vsub.f32 %v996, %v1028
    %v1037 = vsub.f32 %v997, %v1029
    %v1038 = vsub.f32 %v998, %v1030
    %v1039 = vsub.f32 %v999, %v1031
    %v1040 = vsub.f32 %v1000, %v1032
    %v1041 = vsub.f32 %v1001, %v1033
    %v1042 = vmul.f32 %v1034, %v1034
    %v1043 = vmul.f32 %v1035, %v1035
    %v1044 = vmul.f32 %v1036, %v1036
    %v1045 = vmul.f32 %v1037, %v1037
    %v1046 = vmul.f32 %v1038, %v1038
    %v1047 = vmul.f32 %v1039, %v1039
    %v1048 = vmul.f32 %v1040, %v1040
    %v1049 = vmul.f32 %v1041, %v1041
    %v1050 = vsel %vm202, %v1042, 0.0
    %1051 = vadd.xlane.f32.xlu0 %v1050
    %v1052 = vpop.xlane.xlu0 %1051
    %v1053 = vsel %vm202, %v1043, 0.0
    %1054 = vadd.xlane.f32.xlu0 %v1053
    %v1055 = vpop.xlane.xlu0 %1054
    %v1056 = vsel %vm202, %v1044, 0.0
    %1057 = vadd.xlane.f32.xlu0 %v1056
    %v1058 = vpop.xlane.xlu0 %1057
    %v1059 = vsel %vm202, %v1045, 0.0
    %1060 = vadd.xlane.f32.xlu0 %v1059
    %v1061 = vpop.xlane.xlu0 %1060
    %v1062 = vsel %vm202, %v1046, 0.0
    %1063 = vadd.xlane.f32.xlu0 %v1062
    %v1064 = vpop.xlane.xlu0 %1063
    %v1065 = vsel %vm202, %v1047, 0.0
    %1066 = vadd.xlane.f32.xlu0 %v1065
    %v1067 = vpop.xlane.xlu0 %1066
    %v1068 = vsel %vm202, %v1048, 0.0
    %1069 = vadd.xlane.f32.xlu0 %v1068
    %v1070 = vpop.xlane.xlu0 %1069
    %v1071 = vsel %vm202, %v1049, 0.0
    %1072 = vadd.xlane.f32.xlu0 %v1071
    %v1073 = vpop.xlane.xlu0 %1072
    %v1074 = vmul.f32 %v1052, %v227
    %v1075 = vmul.f32 %v1055, %v227
    %v1076 = vmul.f32 %v1058, %v227
    %v1077 = vmul.f32 %v1061, %v227
    %v1078 = vmul.f32 %v1064, %v227
    %v1079 = vmul.f32 %v1067, %v227
    %v1080 = vmul.f32 %v1070, %v227
    %v1081 = vmul.f32 %v1073, %v227
    %v1082 = vadd.f32 %v1074, 1e-05
    %v1083 = vadd.f32 %v1075, 1e-05
    %v1084 = vadd.f32 %v1076, 1e-05
    %v1085 = vadd.f32 %v1077, 1e-05
    %v1086 = vadd.f32 %v1078, 1e-05
    %v1087 = vadd.f32 %v1079, 1e-05
    %v1088 = vadd.f32 %v1080, 1e-05
    %v1089 = vadd.f32 %v1081, 1e-05
    %v1090 = vrsqrt.pop %v1082
    %v1091 = vrsqrt.pop %v1083
    %v1092 = vrsqrt.pop %v1084
    %v1093 = vrsqrt.pop %v1085
    %v1094 = vrsqrt.pop %v1086
    %v1095 = vrsqrt.pop %v1087
    %v1096 = vrsqrt.pop %v1088
    %v1097 = vrsqrt.pop %v1089
    %v1098 = vmul.f32 %v1034, %v1090
    %v1099 = vmul.f32 %v1035, %v1091
    %v1100 = vmul.f32 %v1036, %v1092
    %v1101 = vmul.f32 %v1037, %v1093
    %v1102 = vmul.f32 %v1038, %v1094
    %v1103 = vmul.f32 %v1039, %v1095
    %v1104 = vmul.f32 %v1040, %v1096
    %v1105 = vmul.f32 %v1041, %v1097
    %v1106 = vlaneseq
    %v1107 = vshrl.u32 %v1106, 7
    %v1108 = vsub.s32 0, %v1107
    %v1109 = vrot.slane %v969, %v1108
    %v1110 = vmul.f32 %v1098, %v1109
    %v1111 = vmul.f32 %v1099, %v1109
    %v1112 = vmul.f32 %v1100, %v1109
    %v1113 = vmul.f32 %v1101, %v1109
    %v1114 = vmul.f32 %v1102, %v1109
    %v1115 = vmul.f32 %v1103, %v1109
    %v1116 = vmul.f32 %v1104, %v1109
    %v1117 = vmul.f32 %v1105, %v1109
    %v1118 = vlaneseq
    %v1119 = vshrl.u32 %v1118, 7
    %v1120 = vsub.s32 1, %v1119
    %v1121 = vrot.slane %v969, %v1120
    %v1122 = vadd.f32 %v1110, %v1121
    %v1123 = vadd.f32 %v1111, %v1121
    %v1124 = vadd.f32 %v1112, %v1121
    %v1125 = vadd.f32 %v1113, %v1121
    %v1126 = vadd.f32 %v1114, %v1121
    %v1127 = vadd.f32 %v1115, %v1121
    %v1128 = vadd.f32 %v1116, %v1121
    %v1129 = vadd.f32 %v1117, %v1121
    %v1130 = vmax.f32 %v1122, 0.0
    %v1131 = vmax.f32 %v1123, 0.0
    %v1132 = vmax.f32 %v1124, 0.0
    %v1133 = vmax.f32 %v1125, 0.0
    %v1134 = vmax.f32 %v1126, 0.0
    %v1135 = vmax.f32 %v1127, 0.0
    %v1136 = vmax.f32 %v1128, 0.0
    %v1137 = vmax.f32 %v1129, 0.0
    %v1138 = vmul.f32 %v1130, %v986
    %v1139 = vmul.f32 %v1131, %v987
    %v1140 = vmul.f32 %v1132, %v988
    %v1141 = vmul.f32 %v1133, %v989
    %v1142 = vmul.f32 %v1134, %v990
    %v1143 = vmul.f32 %v1135, %v991
    %v1144 = vmul.f32 %v1136, %v992
    %v1145 = vmul.f32 %v1137, %v993
    %v1146 = vmul.f32 %v930, %v1138
    %v1147 = vmul.f32 %v935, %v1139
    %v1148 = vmul.f32 %v940, %v1140
    %v1149 = vmul.f32 %v945, %v1141
    %v1150 = vmul.f32 %v950, %v1142
    %v1151 = vmul.f32 %v955, %v1143
    %v1152 = vmul.f32 %v960, %v1144
    %v1153 = vmul.f32 %v965, %v1145
    %1162 = vrot.lane.b32.xlu0 %v970, 120
    %v1163 = vpop.permute.xlu0 %1162
    %1164 = vrot.lane.b32.xlu0 %v971, 120
    %v1165 = vpop.permute.xlu0 %1164
    %1166 = vrot.lane.b32.xlu0 %v972, 120
    %v1167 = vpop.permute.xlu0 %1166
    %1168 = vrot.lane.b32.xlu0 %v973, 120
    %v1169 = vpop.permute.xlu0 %1168
    %1170 = vrot.lane.b32.xlu0 %v974, 120
    %v1171 = vpop.permute.xlu0 %1170
    %1172 = vrot.lane.b32.xlu0 %v975, 120
    %v1173 = vpop.permute.xlu0 %1172
    %1174 = vrot.lane.b32.xlu0 %v976, 120
    %v1175 = vpop.permute.xlu0 %1174
    %1176 = vrot.lane.b32.xlu0 %v977, 120
    %v1177 = vpop.permute.xlu0 %1176
    %v1186 = vadd.f32 %v970, %v1163
    %v1187 = vadd.f32 %v971, %v1165
    %v1188 = vadd.f32 %v972, %v1167
    %v1189 = vadd.f32 %v973, %v1169
    %v1190 = vadd.f32 %v974, %v1171
    %v1191 = vadd.f32 %v975, %v1173
    %v1192 = vadd.f32 %v976, %v1175
    %v1193 = vadd.f32 %v977, %v1177
    %1194 = vrot.lane.b32.xlu0 %v970, 112
    %v1195 = vpop.permute.xlu0 %1194
    %1196 = vrot.lane.b32.xlu0 %v971, 112
    %v1197 = vpop.permute.xlu0 %1196
    %1198 = vrot.lane.b32.xlu0 %v972, 112
    %v1199 = vpop.permute.xlu0 %1198
    %1200 = vrot.lane.b32.xlu0 %v973, 112
    %v1201 = vpop.permute.xlu0 %1200
    %1202 = vrot.lane.b32.xlu0 %v974, 112
    %v1203 = vpop.permute.xlu0 %1202
    %1204 = vrot.lane.b32.xlu0 %v975, 112
    %v1205 = vpop.permute.xlu0 %1204
    %1206 = vrot.lane.b32.xlu0 %v976, 112
    %v1207 = vpop.permute.xlu0 %1206
    %1208 = vrot.lane.b32.xlu0 %v977, 112
    %v1209 = vpop.permute.xlu0 %1208
    %v1218 = vadd.f32 %v1186, %v1195
    %v1219 = vadd.f32 %v1187, %v1197
    %v1220 = vadd.f32 %v1188, %v1199
    %v1221 = vadd.f32 %v1189, %v1201
    %v1222 = vadd.f32 %v1190, %v1203
    %v1223 = vadd.f32 %v1191, %v1205
    %v1224 = vadd.f32 %v1192, %v1207
    %v1225 = vadd.f32 %v1193, %v1209
    %v1226 = vmax.f32 %v1218, 3.5527137e-15
    %v1227 = vmax.f32 %v1219, 3.5527137e-15
    %v1228 = vmax.f32 %v1220, 3.5527137e-15
    %v1229 = vmax.f32 %v1221, 3.5527137e-15
    %v1230 = vmax.f32 %v1222, 3.5527137e-15
    %v1231 = vmax.f32 %v1223, 3.5527137e-15
    %v1232 = vmax.f32 %v1224, 3.5527137e-15
    %v1233 = vmax.f32 %v1225, 3.5527137e-15
    %v1234 = vrsqrt.pop %v1226
    %v1235 = vrsqrt.pop %v1227
    %v1236 = vrsqrt.pop %v1228
    %v1237 = vrsqrt.pop %v1229
    %v1238 = vrsqrt.pop %v1230
    %v1239 = vrsqrt.pop %v1231
    %v1240 = vrsqrt.pop %v1232
    %v1241 = vrsqrt.pop %v1233
    %v1242 = vmul.f32 %v1218, %v1234
    %v1243 = vmul.f32 %v1219, %v1235
    %v1244 = vmul.f32 %v1220, %v1236
    %v1245 = vmul.f32 %v1221, %v1237
    %v1246 = vmul.f32 %v1222, %v1238
    %v1247 = vmul.f32 %v1223, %v1239
    %v1248 = vmul.f32 %v1224, %v1240
    %v1249 = vmul.f32 %v1225, %v1241
    %1258 = vrot.lane.b32.xlu0 %v1242, 96
    %v1259 = vpop.permute.xlu0 %1258
    %1260 = vrot.lane.b32.xlu0 %v1243, 96
    %v1261 = vpop.permute.xlu0 %1260
    %1262 = vrot.lane.b32.xlu0 %v1244, 96
    %v1263 = vpop.permute.xlu0 %1262
    %1264 = vrot.lane.b32.xlu0 %v1245, 96
    %v1265 = vpop.permute.xlu0 %1264
    %1266 = vrot.lane.b32.xlu0 %v1246, 96
    %v1267 = vpop.permute.xlu0 %1266
    %1268 = vrot.lane.b32.xlu0 %v1247, 96
    %v1269 = vpop.permute.xlu0 %1268
    %1270 = vrot.lane.b32.xlu0 %v1248, 96
    %v1271 = vpop.permute.xlu0 %1270
    %1272 = vrot.lane.b32.xlu0 %v1249, 96
    %v1273 = vpop.permute.xlu0 %1272
    %v1282 = vsel %vm492, %v1259, 0.0
    %1283 = vadd.xlane.f32.xlu0 %v1282
    %v1284 = vpop.xlane.xlu0 %1283
    %v1285 = vsel %vm492, %v1261, 0.0
    %1286 = vadd.xlane.f32.xlu0 %v1285
    %v1287 = vpop.xlane.xlu0 %1286
    %v1288 = vsel %vm492, %v1263, 0.0
    %1289 = vadd.xlane.f32.xlu0 %v1288
    %v1290 = vpop.xlane.xlu0 %1289
    %v1291 = vsel %vm492, %v1265, 0.0
    %1292 = vadd.xlane.f32.xlu0 %v1291
    %v1293 = vpop.xlane.xlu0 %1292
    %v1294 = vsel %vm492, %v1267, 0.0
    %1295 = vadd.xlane.f32.xlu0 %v1294
    %v1296 = vpop.xlane.xlu0 %1295
    %v1297 = vsel %vm492, %v1269, 0.0
    %1298 = vadd.xlane.f32.xlu0 %v1297
    %v1299 = vpop.xlane.xlu0 %1298
    %v1300 = vsel %vm492, %v1271, 0.0
    %1301 = vadd.xlane.f32.xlu0 %v1300
    %v1302 = vpop.xlane.xlu0 %1301
    %v1303 = vsel %vm492, %v1273, 0.0
    %1304 = vadd.xlane.f32.xlu0 %v1303
    %v1305 = vpop.xlane.xlu0 %1304
    %v1306 = vmul.f32 %v1284, %v517
    %v1307 = vmul.f32 %v1287, %v517
    %v1308 = vmul.f32 %v1290, %v517
    %v1309 = vmul.f32 %v1293, %v517
    %v1310 = vmul.f32 %v1296, %v517
    %v1311 = vmul.f32 %v1299, %v517
    %v1312 = vmul.f32 %v1302, %v517
    %v1313 = vmul.f32 %v1305, %v517
    %v1314 = vsub.f32 %v1242, %v1306
    %v1315 = vsub.f32 %v1243, %v1307
    %v1316 = vsub.f32 %v1244, %v1308
    %v1317 = vsub.f32 %v1245, %v1309
    %v1318 = vsub.f32 %v1246, %v1310
    %v1319 = vsub.f32 %v1247, %v1311
    %v1320 = vsub.f32 %v1248, %v1312
    %v1321 = vsub.f32 %v1249, %v1313
    %v1322 = vmul.f32 %v1314, %v1314
    %v1323 = vmul.f32 %v1315, %v1315
    %v1324 = vmul.f32 %v1316, %v1316
    %v1325 = vmul.f32 %v1317, %v1317
    %v1326 = vmul.f32 %v1318, %v1318
    %v1327 = vmul.f32 %v1319, %v1319
    %v1328 = vmul.f32 %v1320, %v1320
    %v1329 = vmul.f32 %v1321, %v1321
    %1338 = vrot.lane.b32.xlu0 %v1322, 96
    %v1339 = vpop.permute.xlu0 %1338
    %1340 = vrot.lane.b32.xlu0 %v1323, 96
    %v1341 = vpop.permute.xlu0 %1340
    %1342 = vrot.lane.b32.xlu0 %v1324, 96
    %v1343 = vpop.permute.xlu0 %1342
    %1344 = vrot.lane.b32.xlu0 %v1325, 96
    %v1345 = vpop.permute.xlu0 %1344
    %1346 = vrot.lane.b32.xlu0 %v1326, 96
    %v1347 = vpop.permute.xlu0 %1346
    %1348 = vrot.lane.b32.xlu0 %v1327, 96
    %v1349 = vpop.permute.xlu0 %1348
    %1350 = vrot.lane.b32.xlu0 %v1328, 96
    %v1351 = vpop.permute.xlu0 %1350
    %1352 = vrot.lane.b32.xlu0 %v1329, 96
    %v1353 = vpop.permute.xlu0 %1352
    %v1362 = vsel %vm492, %v1339, 0.0
    %1363 = vadd.xlane.f32.xlu0 %v1362
    %v1364 = vpop.xlane.xlu0 %1363
    %v1365 = vsel %vm492, %v1341, 0.0
    %1366 = vadd.xlane.f32.xlu0 %v1365
    %v1367 = vpop.xlane.xlu0 %1366
    %v1368 = vsel %vm492, %v1343, 0.0
    %1369 = vadd.xlane.f32.xlu0 %v1368
    %v1370 = vpop.xlane.xlu0 %1369
    %v1371 = vsel %vm492, %v1345, 0.0
    %1372 = vadd.xlane.f32.xlu0 %v1371
    %v1373 = vpop.xlane.xlu0 %1372
    %v1374 = vsel %vm492, %v1347, 0.0
    %1375 = vadd.xlane.f32.xlu0 %v1374
    %v1376 = vpop.xlane.xlu0 %1375
    %v1377 = vsel %vm492, %v1349, 0.0
    %1378 = vadd.xlane.f32.xlu0 %v1377
    %v1379 = vpop.xlane.xlu0 %1378
    %v1380 = vsel %vm492, %v1351, 0.0
    %1381 = vadd.xlane.f32.xlu0 %v1380
    %v1382 = vpop.xlane.xlu0 %1381
    %v1383 = vsel %vm492, %v1353, 0.0
    %1384 = vadd.xlane.f32.xlu0 %v1383
    %v1385 = vpop.xlane.xlu0 %1384
    %v1386 = vmul.f32 %v1364, %v517
    %v1387 = vmul.f32 %v1367, %v517
    %v1388 = vmul.f32 %v1370, %v517
    %v1389 = vmul.f32 %v1373, %v517
    %v1390 = vmul.f32 %v1376, %v517
    %v1391 = vmul.f32 %v1379, %v517
    %v1392 = vmul.f32 %v1382, %v517
    %v1393 = vmul.f32 %v1385, %v517
    %v1394 = vadd.f32 %v1386, 1e-05
    %v1395 = vadd.f32 %v1387, 1e-05
    %v1396 = vadd.f32 %v1388, 1e-05
    %v1397 = vadd.f32 %v1389, 1e-05
    %v1398 = vadd.f32 %v1390, 1e-05
    %v1399 = vadd.f32 %v1391, 1e-05
    %v1400 = vadd.f32 %v1392, 1e-05
    %v1401 = vadd.f32 %v1393, 1e-05
    %v1402 = vrsqrt.pop %v1394
    %v1403 = vrsqrt.pop %v1395
    %v1404 = vrsqrt.pop %v1396
    %v1405 = vrsqrt.pop %v1397
    %v1406 = vrsqrt.pop %v1398
    %v1407 = vrsqrt.pop %v1399
    %v1408 = vrsqrt.pop %v1400
    %v1409 = vrsqrt.pop %v1401
    %v1410 = vmul.f32 %v1314, %v1402
    %v1411 = vmul.f32 %v1315, %v1403
    %v1412 = vmul.f32 %v1316, %v1404
    %v1413 = vmul.f32 %v1317, %v1405
    %v1414 = vmul.f32 %v1318, %v1406
    %v1415 = vmul.f32 %v1319, %v1407
    %v1416 = vmul.f32 %v1320, %v1408
    %v1417 = vmul.f32 %v1321, %v1409
    %v1418 = vlaneseq
    %v1419 = vshrl.u32 %v1418, 7
    %v1420 = vsub.s32 2, %v1419
    %v1421 = vrot.slane %v969, %v1420
    %1423 = vrot.lane.b32.xlu0 %v1421, 32
    %v1424 = vpop.permute.xlu0 %1423
    %v1426 = vmul.f32 %v1410, %v1424
    %v1427 = vmul.f32 %v1411, %v1424
    %v1428 = vmul.f32 %v1412, %v1424
    %v1429 = vmul.f32 %v1413, %v1424
    %v1430 = vmul.f32 %v1414, %v1424
    %v1431 = vmul.f32 %v1415, %v1424
    %v1432 = vmul.f32 %v1416, %v1424
    %v1433 = vmul.f32 %v1417, %v1424
    %v1434 = vlaneseq
    %v1435 = vshrl.u32 %v1434, 7
    %v1436 = vsub.s32 3, %v1435
    %v1437 = vrot.slane %v969, %v1436
    %1439 = vrot.lane.b32.xlu0 %v1437, 32
    %v1440 = vpop.permute.xlu0 %1439
    %v1442 = vadd.f32 %v1426, %v1440
    %v1443 = vadd.f32 %v1427, %v1440
    %v1444 = vadd.f32 %v1428, %v1440
    %v1445 = vadd.f32 %v1429, %v1440
    %v1446 = vadd.f32 %v1430, %v1440
    %v1447 = vadd.f32 %v1431, %v1440
    %v1448 = vadd.f32 %v1432, %v1440
    %v1449 = vadd.f32 %v1433, %v1440
    %v1450 = vmax.f32 %v1442, 0.0
    %v1451 = vmax.f32 %v1443, 0.0
    %v1452 = vmax.f32 %v1444, 0.0
    %v1453 = vmax.f32 %v1445, 0.0
    %v1454 = vmax.f32 %v1446, 0.0
    %v1455 = vmax.f32 %v1447, 0.0
    %v1456 = vmax.f32 %v1448, 0.0
    %v1457 = vmax.f32 %v1449, 0.0
    %v1458 = vmul.f32 %v1450, %v1234
    %v1459 = vmul.f32 %v1451, %v1235
    %v1460 = vmul.f32 %v1452, %v1236
    %v1461 = vmul.f32 %v1453, %v1237
    %v1462 = vmul.f32 %v1454, %v1238
    %v1463 = vmul.f32 %v1455, %v1239
    %v1464 = vmul.f32 %v1456, %v1240
    %v1465 = vmul.f32 %v1457, %v1241
    %1474 = vrot.lane.b32.xlu0 %v1458, 96
    %v1475 = vpop.permute.xlu0 %1474
    %1476 = vrot.lane.b32.xlu0 %v1459, 96
    %v1477 = vpop.permute.xlu0 %1476
    %1478 = vrot.lane.b32.xlu0 %v1460, 96
    %v1479 = vpop.permute.xlu0 %1478
    %1480 = vrot.lane.b32.xlu0 %v1461, 96
    %v1481 = vpop.permute.xlu0 %1480
    %1482 = vrot.lane.b32.xlu0 %v1462, 96
    %v1483 = vpop.permute.xlu0 %1482
    %1484 = vrot.lane.b32.xlu0 %v1463, 96
    %v1485 = vpop.permute.xlu0 %1484
    %1486 = vrot.lane.b32.xlu0 %v1464, 96
    %v1487 = vpop.permute.xlu0 %1486
    %1488 = vrot.lane.b32.xlu0 %v1465, 96
    %v1489 = vpop.permute.xlu0 %1488
    %1498 = vrot.lane.b32.xlu0 %v1458, 104
    %v1499 = vpop.permute.xlu0 %1498
    %1500 = vrot.lane.b32.xlu0 %v1459, 104
    %v1501 = vpop.permute.xlu0 %1500
    %1502 = vrot.lane.b32.xlu0 %v1460, 104
    %v1503 = vpop.permute.xlu0 %1502
    %1504 = vrot.lane.b32.xlu0 %v1461, 104
    %v1505 = vpop.permute.xlu0 %1504
    %1506 = vrot.lane.b32.xlu0 %v1462, 104
    %v1507 = vpop.permute.xlu0 %1506
    %1508 = vrot.lane.b32.xlu0 %v1463, 104
    %v1509 = vpop.permute.xlu0 %1508
    %1510 = vrot.lane.b32.xlu0 %v1464, 104
    %v1511 = vpop.permute.xlu0 %1510
    %1512 = vrot.lane.b32.xlu0 %v1465, 104
    %v1513 = vpop.permute.xlu0 %1512
    %1522 = vrot.lane.b32.xlu0 %v1458, 112
    %v1523 = vpop.permute.xlu0 %1522
    %1524 = vrot.lane.b32.xlu0 %v1459, 112
    %v1525 = vpop.permute.xlu0 %1524
    %1526 = vrot.lane.b32.xlu0 %v1460, 112
    %v1527 = vpop.permute.xlu0 %1526
    %1528 = vrot.lane.b32.xlu0 %v1461, 112
    %v1529 = vpop.permute.xlu0 %1528
    %1530 = vrot.lane.b32.xlu0 %v1462, 112
    %v1531 = vpop.permute.xlu0 %1530
    %1532 = vrot.lane.b32.xlu0 %v1463, 112
    %v1533 = vpop.permute.xlu0 %1532
    %1534 = vrot.lane.b32.xlu0 %v1464, 112
    %v1535 = vpop.permute.xlu0 %1534
    %1536 = vrot.lane.b32.xlu0 %v1465, 112
    %v1537 = vpop.permute.xlu0 %1536
    %v1546 = vsel %vm492, %v1475, %v1499
    %v1547 = vsel %vm492, %v1477, %v1501
    %v1548 = vsel %vm492, %v1479, %v1503
    %v1549 = vsel %vm492, %v1481, %v1505
    %v1550 = vsel %vm492, %v1483, %v1507
    %v1551 = vsel %vm492, %v1485, %v1509
    %v1552 = vsel %vm492, %v1487, %v1511
    %v1553 = vsel %vm492, %v1489, %v1513
    %v1554 = vsel %vm39, %v1546, %v1523
    %v1555 = vsel %vm39, %v1547, %v1525
    %v1556 = vsel %vm39, %v1548, %v1527
    %v1557 = vsel %vm39, %v1549, %v1529
    %v1558 = vsel %vm39, %v1550, %v1531
    %v1559 = vsel %vm39, %v1551, %v1533
    %v1560 = vsel %vm39, %v1552, %v1535
    %v1561 = vsel %vm39, %v1553, %v1537
    %1570 = vrot.lane.b32.xlu0 %v1554, 32
    %v1571 = vpop.permute.xlu0 %1570
    %1572 = vrot.lane.b32.xlu0 %v1555, 32
    %v1573 = vpop.permute.xlu0 %1572
    %1574 = vrot.lane.b32.xlu0 %v1556, 32
    %v1575 = vpop.permute.xlu0 %1574
    %1576 = vrot.lane.b32.xlu0 %v1557, 32
    %v1577 = vpop.permute.xlu0 %1576
    %1578 = vrot.lane.b32.xlu0 %v1558, 32
    %v1579 = vpop.permute.xlu0 %1578
    %1580 = vrot.lane.b32.xlu0 %v1559, 32
    %v1581 = vpop.permute.xlu0 %1580
    %1582 = vrot.lane.b32.xlu0 %v1560, 32
    %v1583 = vpop.permute.xlu0 %1582
    %1584 = vrot.lane.b32.xlu0 %v1561, 32
    %v1585 = vpop.permute.xlu0 %1584
    %v1594 = vmul.f32 %v930, %v1571
    %v1595 = vmul.f32 %v935, %v1573
    %v1596 = vmul.f32 %v940, %v1575
    %v1597 = vmul.f32 %v945, %v1577
    %v1598 = vmul.f32 %v950, %v1579
    %v1599 = vmul.f32 %v955, %v1581
    %v1600 = vmul.f32 %v960, %v1583
    %v1601 = vmul.f32 %v965, %v1585
    %s1602 = scalar_lea.vmem [#allocation2], 112
    %v1603 = vld [vmem:[%s1602] sm:$0xff]
    %v1604 = vld [vmem:[%s1602 + $0x8] sm:$0xff]
    %v1605 = vld [vmem:[%s1602 + $0x10] sm:$0xff]
    %v1606 = vld [vmem:[%s1602 + $0x18] sm:$0xff]
    %v1607 = vld [vmem:[%s1602 + $0x20] sm:$0xff]
    %v1608 = vld [vmem:[%s1602 + $0x28] sm:$0xff]
    %v1609 = vld [vmem:[%s1602 + $0x30] sm:$0xff]
    %v1610 = vsel %vm202, %v1146, %v1594
    %v1611 = vsel %vm202, %v1147, %v1595
    %v1612 = vsel %vm202, %v1148, %v1596
    %v1613 = vsel %vm202, %v1149, %v1597
    %v1614 = vsel %vm202, %v1150, %v1598
    %v1615 = vsel %vm202, %v1151, %v1599
    %v1616 = vsel %vm202, %v1152, %v1600
    %v1617 = vsel %vm202, %v1153, %v1601
    %v1619 = vsel %vm838, %v1610, 0
    %v1622 = vsel %vm838, %v1611, 0
    %v1625 = vsel %vm838, %v1612, 0
    %v1628 = vsel %vm838, %v1613, 0
    %v1631 = vsel %vm838, %v1614, 0
    %v1634 = vsel %vm838, %v1615, 0
    %v1637 = vsel %vm838, %v1616, 0
    %v1640 = vsel %vm838, %v1617, 0
    %1642 = vmatprep.subr.mxu0 0.0
    %1643 = vmatpush1.msra.mxu0 %v1603
    %1644 = vmatprep.subr.mxu0 0.0
    %1645 = vmatpush1.msra.mxu0 %v1604
    %1646 = vmatprep.subr.mxu0 0.0
    %1647 = vmatpush1.msra.mxu0 %v1605
    %1648 = vmatprep.subr.mxu0 0.0
    %1649 = vmatpush1.msra.mxu0 %v1606
    %1650 = vmatprep.subr.mxu0 0.0
    %1651 = vmatpush1.msra.mxu0 %v1607
    %1652 = vmatprep.subr.mxu0 0.0
    %1653 = vmatpush1.msra.mxu0 %v1608
    %1654 = vmatprep.subr.mxu0 0.0
    %1655 = vmatpush1.msra.mxu0 %v1609
    %1656 = vmatprep.subr.mxu0 0.0
    %1657 = vmatpush1.msra.mxu0 0.0
    %1658 = vmatprep.subr.mxu0 0.0
    %1659 = vmatpush1.msra.mxu0 0.0
    %1660 = vmatprep.subr.mxu0 0.0
    %1661 = vmatpush1.msra.mxu0 0.0
    %1662 = vmatprep.subr.mxu0 0.0
    %1663 = vmatpush1.msra.mxu0 0.0
    %1664 = vmatprep.subr.mxu0 0.0
    %1665 = vmatpush1.msra.mxu0 0.0
    %1666 = vmatprep.subr.mxu0 0.0
    %1667 = vmatpush1.msra.mxu0 0.0
    %1668 = vmatprep.subr.mxu0 0.0
    %1669 = vmatpush1.msra.mxu0 0.0
    %1670 = vmatprep.subr.mxu0 0.0
    %1671 = vmatpush1.msra.mxu0 0.0
    %1672 = vmatprep.subr.mxu0 0.0
    %1673 = vmatpush1.msra.mxu0 0.0
    %1674 = vmatprep.subr.mxu0 0.0
    %1675 = vmatpush1.msra.mxu0 0.0
    %1676 = vmatprep.subr.mxu0 0.0
    %1677 = vmatpush1.msra.mxu0 0.0
    %1678 = vmatprep.subr.mxu0 0.0
    %1679 = vmatpush1.msra.mxu0 0.0
    %1680 = vmatprep.subr.mxu0 0.0
    %1681 = vmatpush1.msra.mxu0 0.0
    %1682 = vmatprep.subr.mxu0 0.0
    %1683 = vmatpush1.msra.mxu0 0.0
    %1684 = vmatprep.subr.mxu0 0.0
    %1685 = vmatpush1.msra.mxu0 0.0
    %1686 = vmatprep.subr.mxu0 0.0
    %1687 = vmatpush1.msra.mxu0 0.0
    %1688 = vmatprep.subr.mxu0 0.0
    %1689 = vmatpush1.msra.mxu0 0.0
    %1690 = vmatprep.subr.mxu0 0.0
    %1691 = vmatpush1.msra.mxu0 0.0
    %1692 = vmatprep.subr.mxu0 0.0
    %1693 = vmatpush1.msra.mxu0 0.0
    %1694 = vmatprep.subr.mxu0 0.0
    %1695 = vmatpush1.msra.mxu0 0.0
    %1696 = vmatprep.subr.mxu0 0.0
    %1697 = vmatpush1.msra.mxu0 0.0
    %1698 = vmatprep.subr.mxu0 0.0
    %1699 = vmatpush1.msra.mxu0 0.0
    %1700 = vmatprep.subr.mxu0 0.0
    %1701 = vmatpush1.msra.mxu0 0.0
    %1702 = vmatprep.subr.mxu0 0.0
    %1703 = vmatpush1.msra.mxu0 0.0
    %1704 = vmatprep.subr.mxu0 0.0
    %1705 = vmatpush1.msra.mxu0 0.0
    %1706 = vmatprep.mubr.f32.mxu0 0.0
    %1707 = vmatmul.mubr.f32.gmra.mrb[0].mxu0 %v1619
    %v1708 = vpop.f32.mrb[0].mxu0
    %v1709 = vadd.f32 0.0, %v1708
    %v1710 = vpop.f32.mrb[0].mxu0
    %1711 = vmatprep.mubr.f32.mxu0 0.0
    %1712 = vmatmul.mubr.f32.gmra.mrb[0].mxu0 %v1622
    %v1713 = vpop.f32.mrb[0].mxu0
    %v1714 = vadd.f32 0.0, %v1713
    %v1715 = vpop.f32.mrb[0].mxu0
    %1716 = vmatprep.mubr.f32.mxu0 0.0
    %1717 = vmatmul.mubr.f32.gmra.mrb[0].mxu0 %v1625
    %v1718 = vpop.f32.mrb[0].mxu0
    %v1719 = vadd.f32 0.0, %v1718
    %v1720 = vpop.f32.mrb[0].mxu0
    %1721 = vmatprep.mubr.f32.mxu0 0.0
    %1722 = vmatmul.mubr.f32.gmra.mrb[0].mxu0 %v1628
    %v1723 = vpop.f32.mrb[0].mxu0
    %v1724 = vadd.f32 0.0, %v1723
    %v1725 = vpop.f32.mrb[0].mxu0
    %1726 = vmatprep.mubr.f32.mxu0 0.0
    %1727 = vmatmul.mubr.f32.gmra.mrb[0].mxu0 %v1631
    %v1728 = vpop.f32.mrb[0].mxu0
    %v1729 = vadd.f32 0.0, %v1728
    %v1730 = vpop.f32.mrb[0].mxu0
    %1731 = vmatprep.mubr.f32.mxu0 0.0
    %1732 = vmatmul.mubr.f32.gmra.mrb[0].mxu0 %v1634
    %v1733 = vpop.f32.mrb[0].mxu0
    %v1734 = vadd.f32 0.0, %v1733
    %v1735 = vpop.f32.mrb[0].mxu0
    %1736 = vmatprep.mubr.f32.mxu0 0.0
    %1737 = vmatmul.mubr.f32.gmra.mrb[0].mxu0 %v1637
    %v1738 = vpop.f32.mrb[0].mxu0
    %v1739 = vadd.f32 0.0, %v1738
    %v1740 = vpop.f32.mrb[0].mxu0
    %1741 = vmatprep.mubr.f32.mxu0 0.0
    %1742 = vmatmul.mubr.f32.gmra.mrb[0].mxu0 %v1640
    %v1743 = vpop.f32.mrb[0].mxu0
    %v1744 = vadd.f32 0.0, %v1743
    %v1745 = vpop.f32.mrb[0].mxu0
    %1746 = vdwg.mxu0
    %s1747 = scalar_lea.vmem %s2, 8
    %v1748 = vld [vmem:[%s1747] sm:$0xf]
    %v1749 = vmul.f32 %v1709, %v1709
    %v1750 = vmul.f32 %v1714, %v1714
    %v1751 = vmul.f32 %v1719, %v1719
    %v1752 = vmul.f32 %v1724, %v1724
    %v1753 = vmul.f32 %v1729, %v1729
    %v1754 = vmul.f32 %v1734, %v1734
    %v1755 = vmul.f32 %v1739, %v1739
    %v1756 = vmul.f32 %v1744, %v1744
    %v1757 = vmax.f32 %v1749, 3.5527137e-15
    %v1758 = vmax.f32 %v1750, 3.5527137e-15
    %v1759 = vmax.f32 %v1751, 3.5527137e-15
    %v1760 = vmax.f32 %v1752, 3.5527137e-15
    %v1761 = vmax.f32 %v1753, 3.5527137e-15
    %v1762 = vmax.f32 %v1754, 3.5527137e-15
    %v1763 = vmax.f32 %v1755, 3.5527137e-15
    %v1764 = vmax.f32 %v1756, 3.5527137e-15
    %v1765 = vrsqrt.pop %v1757
    %v1766 = vrsqrt.pop %v1758
    %v1767 = vrsqrt.pop %v1759
    %v1768 = vrsqrt.pop %v1760
    %v1769 = vrsqrt.pop %v1761
    %v1770 = vrsqrt.pop %v1762
    %v1771 = vrsqrt.pop %v1763
    %v1772 = vrsqrt.pop %v1764
    %v1773 = vmul.f32 %v1749, %v1765
    %v1774 = vmul.f32 %v1750, %v1766
    %v1775 = vmul.f32 %v1751, %v1767
    %v1776 = vmul.f32 %v1752, %v1768
    %v1777 = vmul.f32 %v1753, %v1769
    %v1778 = vmul.f32 %v1754, %v1770
    %v1779 = vmul.f32 %v1755, %v1771
    %v1780 = vmul.f32 %v1756, %v1772
    %v1781 = vsel %vm202, %v1773, 0.0
    %1782 = vadd.xlane.f32.xlu0 %v1781
    %v1783 = vpop.xlane.xlu0 %1782
    %v1784 = vsel %vm202, %v1774, 0.0
    %1785 = vadd.xlane.f32.xlu0 %v1784
    %v1786 = vpop.xlane.xlu0 %1785
    %v1787 = vsel %vm202, %v1775, 0.0
    %1788 = vadd.xlane.f32.xlu0 %v1787
    %v1789 = vpop.xlane.xlu0 %1788
    %v1790 = vsel %vm202, %v1776, 0.0
    %1791 = vadd.xlane.f32.xlu0 %v1790
    %v1792 = vpop.xlane.xlu0 %1791
    %v1793 = vsel %vm202, %v1777, 0.0
    %1794 = vadd.xlane.f32.xlu0 %v1793
    %v1795 = vpop.xlane.xlu0 %1794
    %v1796 = vsel %vm202, %v1778, 0.0
    %1797 = vadd.xlane.f32.xlu0 %v1796
    %v1798 = vpop.xlane.xlu0 %1797
    %v1799 = vsel %vm202, %v1779, 0.0
    %1800 = vadd.xlane.f32.xlu0 %v1799
    %v1801 = vpop.xlane.xlu0 %1800
    %v1802 = vsel %vm202, %v1780, 0.0
    %1803 = vadd.xlane.f32.xlu0 %v1802
    %v1804 = vpop.xlane.xlu0 %1803
    %v1805 = vmul.f32 %v1783, %v227
    %v1806 = vmul.f32 %v1786, %v227
    %v1807 = vmul.f32 %v1789, %v227
    %v1808 = vmul.f32 %v1792, %v227
    %v1809 = vmul.f32 %v1795, %v227
    %v1810 = vmul.f32 %v1798, %v227
    %v1811 = vmul.f32 %v1801, %v227
    %v1812 = vmul.f32 %v1804, %v227
    %v1813 = vsub.f32 %v1773, %v1805
    %v1814 = vsub.f32 %v1774, %v1806
    %v1815 = vsub.f32 %v1775, %v1807
    %v1816 = vsub.f32 %v1776, %v1808
    %v1817 = vsub.f32 %v1777, %v1809
    %v1818 = vsub.f32 %v1778, %v1810
    %v1819 = vsub.f32 %v1779, %v1811
    %v1820 = vsub.f32 %v1780, %v1812
    %v1821 = vmul.f32 %v1813, %v1813
    %v1822 = vmul.f32 %v1814, %v1814
    %v1823 = vmul.f32 %v1815, %v1815
    %v1824 = vmul.f32 %v1816, %v1816
    %v1825 = vmul.f32 %v1817, %v1817
    %v1826 = vmul.f32 %v1818, %v1818
    %v1827 = vmul.f32 %v1819, %v1819
    %v1828 = vmul.f32 %v1820, %v1820
    %v1829 = vsel %vm202, %v1821, 0.0
    %1830 = vadd.xlane.f32.xlu0 %v1829
    %v1831 = vpop.xlane.xlu0 %1830
    %v1832 = vsel %vm202, %v1822, 0.0
    %1833 = vadd.xlane.f32.xlu0 %v1832
    %v1834 = vpop.xlane.xlu0 %1833
    %v1835 = vsel %vm202, %v1823, 0.0
    %1836 = vadd.xlane.f32.xlu0 %v1835
    %v1837 = vpop.xlane.xlu0 %1836
    %v1838 = vsel %vm202, %v1824, 0.0
    %1839 = vadd.xlane.f32.xlu0 %v1838
    %v1840 = vpop.xlane.xlu0 %1839
    %v1841 = vsel %vm202, %v1825, 0.0
    %1842 = vadd.xlane.f32.xlu0 %v1841
    %v1843 = vpop.xlane.xlu0 %1842
    %v1844 = vsel %vm202, %v1826, 0.0
    %1845 = vadd.xlane.f32.xlu0 %v1844
    %v1846 = vpop.xlane.xlu0 %1845
    %v1847 = vsel %vm202, %v1827, 0.0
    %1848 = vadd.xlane.f32.xlu0 %v1847
    %v1849 = vpop.xlane.xlu0 %1848
    %v1850 = vsel %vm202, %v1828, 0.0
    %1851 = vadd.xlane.f32.xlu0 %v1850
    %v1852 = vpop.xlane.xlu0 %1851
    %v1853 = vmul.f32 %v1831, %v227
    %v1854 = vmul.f32 %v1834, %v227
    %v1855 = vmul.f32 %v1837, %v227
    %v1856 = vmul.f32 %v1840, %v227
    %v1857 = vmul.f32 %v1843, %v227
    %v1858 = vmul.f32 %v1846, %v227
    %v1859 = vmul.f32 %v1849, %v227
    %v1860 = vmul.f32 %v1852, %v227
    %v1861 = vadd.f32 %v1853, 1e-05
    %v1862 = vadd.f32 %v1854, 1e-05
    %v1863 = vadd.f32 %v1855, 1e-05
    %v1864 = vadd.f32 %v1856, 1e-05
    %v1865 = vadd.f32 %v1857, 1e-05
    %v1866 = vadd.f32 %v1858, 1e-05
    %v1867 = vadd.f32 %v1859, 1e-05
    %v1868 = vadd.f32 %v1860, 1e-05
    %v1869 = vrsqrt.pop %v1861
    %v1870 = vrsqrt.pop %v1862
    %v1871 = vrsqrt.pop %v1863
    %v1872 = vrsqrt.pop %v1864
    %v1873 = vrsqrt.pop %v1865
    %v1874 = vrsqrt.pop %v1866
    %v1875 = vrsqrt.pop %v1867
    %v1876 = vrsqrt.pop %v1868
    %v1877 = vmul.f32 %v1813, %v1869
    %v1878 = vmul.f32 %v1814, %v1870
    %v1879 = vmul.f32 %v1815, %v1871
    %v1880 = vmul.f32 %v1816, %v1872
    %v1881 = vmul.f32 %v1817, %v1873
    %v1882 = vmul.f32 %v1818, %v1874
    %v1883 = vmul.f32 %v1819, %v1875
    %v1884 = vmul.f32 %v1820, %v1876
    %v1885 = vlaneseq
    %v1886 = vshrl.u32 %v1885, 7
    %v1887 = vsub.s32 0, %v1886
    %v1888 = vrot.slane %v1748, %v1887
    %v1889 = vmul.f32 %v1877, %v1888
    %v1890 = vmul.f32 %v1878, %v1888
    %v1891 = vmul.f32 %v1879, %v1888
    %v1892 = vmul.f32 %v1880, %v1888
    %v1893 = vmul.f32 %v1881, %v1888
    %v1894 = vmul.f32 %v1882, %v1888
    %v1895 = vmul.f32 %v1883, %v1888
    %v1896 = vmul.f32 %v1884, %v1888
    %v1897 = vlaneseq
    %v1898 = vshrl.u32 %v1897, 7
    %v1899 = vsub.s32 1, %v1898
    %v1900 = vrot.slane %v1748, %v1899
    %v1901 = vadd.f32 %v1889, %v1900
    %v1902 = vadd.f32 %v1890, %v1900
    %v1903 = vadd.f32 %v1891, %v1900
    %v1904 = vadd.f32 %v1892, %v1900
    %v1905 = vadd.f32 %v1893, %v1900
    %v1906 = vadd.f32 %v1894, %v1900
    %v1907 = vadd.f32 %v1895, %v1900
    %v1908 = vadd.f32 %v1896, %v1900
    %v1909 = vmax.f32 %v1901, 0.0
    %v1910 = vmax.f32 %v1902, 0.0
    %v1911 = vmax.f32 %v1903, 0.0
    %v1912 = vmax.f32 %v1904, 0.0
    %v1913 = vmax.f32 %v1905, 0.0
    %v1914 = vmax.f32 %v1906, 0.0
    %v1915 = vmax.f32 %v1907, 0.0
    %v1916 = vmax.f32 %v1908, 0.0
    %v1917 = vmul.f32 %v1909, %v1765
    %v1918 = vmul.f32 %v1910, %v1766
    %v1919 = vmul.f32 %v1911, %v1767
    %v1920 = vmul.f32 %v1912, %v1768
    %v1921 = vmul.f32 %v1913, %v1769
    %v1922 = vmul.f32 %v1914, %v1770
    %v1923 = vmul.f32 %v1915, %v1771
    %v1924 = vmul.f32 %v1916, %v1772
    %v1925 = vmul.f32 %v1709, %v1917
    %v1926 = vmul.f32 %v1714, %v1918
    %v1927 = vmul.f32 %v1719, %v1919
    %v1928 = vmul.f32 %v1724, %v1920
    %v1929 = vmul.f32 %v1729, %v1921
    %v1930 = vmul.f32 %v1734, %v1922
    %v1931 = vmul.f32 %v1739, %v1923
    %v1932 = vmul.f32 %v1744, %v1924
    %1941 = vrot.lane.b32.xlu0 %v1749, 120
    %v1942 = vpop.permute.xlu0 %1941
    %1943 = vrot.lane.b32.xlu0 %v1750, 120
    %v1944 = vpop.permute.xlu0 %1943
    %1945 = vrot.lane.b32.xlu0 %v1751, 120
    %v1946 = vpop.permute.xlu0 %1945
    %1947 = vrot.lane.b32.xlu0 %v1752, 120
    %v1948 = vpop.permute.xlu0 %1947
    %1949 = vrot.lane.b32.xlu0 %v1753, 120
    %v1950 = vpop.permute.xlu0 %1949
    %1951 = vrot.lane.b32.xlu0 %v1754, 120
    %v1952 = vpop.permute.xlu0 %1951
    %1953 = vrot.lane.b32.xlu0 %v1755, 120
    %v1954 = vpop.permute.xlu0 %1953
    %1955 = vrot.lane.b32.xlu0 %v1756, 120
    %v1956 = vpop.permute.xlu0 %1955
    %v1965 = vadd.f32 %v1749, %v1942
    %v1966 = vadd.f32 %v1750, %v1944
    %v1967 = vadd.f32 %v1751, %v1946
    %v1968 = vadd.f32 %v1752, %v1948
    %v1969 = vadd.f32 %v1753, %v1950
    %v1970 = vadd.f32 %v1754, %v1952
    %v1971 = vadd.f32 %v1755, %v1954
    %v1972 = vadd.f32 %v1756, %v1956
    %1973 = vrot.lane.b32.xlu0 %v1749, 112
    %v1974 = vpop.permute.xlu0 %1973
    %1975 = vrot.lane.b32.xlu0 %v1750, 112
    %v1976 = vpop.permute.xlu0 %1975
    %1977 = vrot.lane.b32.xlu0 %v1751, 112
    %v1978 = vpop.permute.xlu0 %1977
    %1979 = vrot.lane.b32.xlu0 %v1752, 112
    %v1980 = vpop.permute.xlu0 %1979
    %1981 = vrot.lane.b32.xlu0 %v1753, 112
    %v1982 = vpop.permute.xlu0 %1981
    %1983 = vrot.lane.b32.xlu0 %v1754, 112
    %v1984 = vpop.permute.xlu0 %1983
    %1985 = vrot.lane.b32.xlu0 %v1755, 112
    %v1986 = vpop.permute.xlu0 %1985
    %1987 = vrot.lane.b32.xlu0 %v1756, 112
    %v1988 = vpop.permute.xlu0 %1987
    %v1997 = vadd.f32 %v1965, %v1974
    %v1998 = vadd.f32 %v1966, %v1976
    %v1999 = vadd.f32 %v1967, %v1978
    %v2000 = vadd.f32 %v1968, %v1980
    %v2001 = vadd.f32 %v1969, %v1982
    %v2002 = vadd.f32 %v1970, %v1984
    %v2003 = vadd.f32 %v1971, %v1986
    %v2004 = vadd.f32 %v1972, %v1988
    %v2005 = vmax.f32 %v1997, 3.5527137e-15
    %v2006 = vmax.f32 %v1998, 3.5527137e-15
    %v2007 = vmax.f32 %v1999, 3.5527137e-15
    %v2008 = vmax.f32 %v2000, 3.5527137e-15
    %v2009 = vmax.f32 %v2001, 3.5527137e-15
    %v2010 = vmax.f32 %v2002, 3.5527137e-15
    %v2011 = vmax.f32 %v2003, 3.5527137e-15
    %v2012 = vmax.f32 %v2004, 3.5527137e-15
    %v2013 = vrsqrt.pop %v2005
    %v2014 = vrsqrt.pop %v2006
    %v2015 = vrsqrt.pop %v2007
    %v2016 = vrsqrt.pop %v2008
    %v2017 = vrsqrt.pop %v2009
    %v2018 = vrsqrt.pop %v2010
    %v2019 = vrsqrt.pop %v2011
    %v2020 = vrsqrt.pop %v2012
    %v2021 = vmul.f32 %v1997, %v2013
    %v2022 = vmul.f32 %v1998, %v2014
    %v2023 = vmul.f32 %v1999, %v2015
    %v2024 = vmul.f32 %v2000, %v2016
    %v2025 = vmul.f32 %v2001, %v2017
    %v2026 = vmul.f32 %v2002, %v2018
    %v2027 = vmul.f32 %v2003, %v2019
    %v2028 = vmul.f32 %v2004, %v2020
    %2037 = vrot.lane.b32.xlu0 %v2021, 96
    %v2038 = vpop.permute.xlu0 %2037
    %2039 = vrot.lane.b32.xlu0 %v2022, 96
    %v2040 = vpop.permute.xlu0 %2039
    %2041 = vrot.lane.b32.xlu0 %v2023, 96
    %v2042 = vpop.permute.xlu0 %2041
    %2043 = vrot.lane.b32.xlu0 %v2024, 96
    %v2044 = vpop.permute.xlu0 %2043
    %2045 = vrot.lane.b32.xlu0 %v2025, 96
    %v2046 = vpop.permute.xlu0 %2045
    %2047 = vrot.lane.b32.xlu0 %v2026, 96
    %v2048 = vpop.permute.xlu0 %2047
    %2049 = vrot.lane.b32.xlu0 %v2027, 96
    %v2050 = vpop.permute.xlu0 %2049
    %2051 = vrot.lane.b32.xlu0 %v2028, 96
    %v2052 = vpop.permute.xlu0 %2051
    %v2061 = vsel %vm492, %v2038, 0.0
    %2062 = vadd.xlane.f32.xlu0 %v2061
    %v2063 = vpop.xlane.xlu0 %2062
    %v2064 = vsel %vm492, %v2040, 0.0
    %2065 = vadd.xlane.f32.xlu0 %v2064
    %v2066 = vpop.xlane.xlu0 %2065
    %v2067 = vsel %vm492, %v2042, 0.0
    %2068 = vadd.xlane.f32.xlu0 %v2067
    %v2069 = vpop.xlane.xlu0 %2068
    %v2070 = vsel %vm492, %v2044, 0.0
    %2071 = vadd.xlane.f32.xlu0 %v2070
    %v2072 = vpop.xlane.xlu0 %2071
    %v2073 = vsel %vm492, %v2046, 0.0
    %2074 = vadd.xlane.f32.xlu0 %v2073
    %v2075 = vpop.xlane.xlu0 %2074
    %v2076 = vsel %vm492, %v2048, 0.0
    %2077 = vadd.xlane.f32.xlu0 %v2076
    %v2078 = vpop.xlane.xlu0 %2077
    %v2079 = vsel %vm492, %v2050, 0.0
    %2080 = vadd.xlane.f32.xlu0 %v2079
    %v2081 = vpop.xlane.xlu0 %2080
    %v2082 = vsel %vm492, %v2052, 0.0
    %2083 = vadd.xlane.f32.xlu0 %v2082
    %v2084 = vpop.xlane.xlu0 %2083
    %v2085 = vmul.f32 %v2063, %v517
    %v2086 = vmul.f32 %v2066, %v517
    %v2087 = vmul.f32 %v2069, %v517
    %v2088 = vmul.f32 %v2072, %v517
    %v2089 = vmul.f32 %v2075, %v517
    %v2090 = vmul.f32 %v2078, %v517
    %v2091 = vmul.f32 %v2081, %v517
    %v2092 = vmul.f32 %v2084, %v517
    %v2093 = vsub.f32 %v2021, %v2085
    %v2094 = vsub.f32 %v2022, %v2086
    %v2095 = vsub.f32 %v2023, %v2087
    %v2096 = vsub.f32 %v2024, %v2088
    %v2097 = vsub.f32 %v2025, %v2089
    %v2098 = vsub.f32 %v2026, %v2090
    %v2099 = vsub.f32 %v2027, %v2091
    %v2100 = vsub.f32 %v2028, %v2092
    %v2101 = vmul.f32 %v2093, %v2093
    %v2102 = vmul.f32 %v2094, %v2094
    %v2103 = vmul.f32 %v2095, %v2095
    %v2104 = vmul.f32 %v2096, %v2096
    %v2105 = vmul.f32 %v2097, %v2097
    %v2106 = vmul.f32 %v2098, %v2098
    %v2107 = vmul.f32 %v2099, %v2099
    %v2108 = vmul.f32 %v2100, %v2100
    %2117 = vrot.lane.b32.xlu0 %v2101, 96
    %v2118 = vpop.permute.xlu0 %2117
    %2119 = vrot.lane.b32.xlu0 %v2102, 96
    %v2120 = vpop.permute.xlu0 %2119
    %2121 = vrot.lane.b32.xlu0 %v2103, 96
    %v2122 = vpop.permute.xlu0 %2121
    %2123 = vrot.lane.b32.xlu0 %v2104, 96
    %v2124 = vpop.permute.xlu0 %2123
    %2125 = vrot.lane.b32.xlu0 %v2105, 96
    %v2126 = vpop.permute.xlu0 %2125
    %2127 = vrot.lane.b32.xlu0 %v2106, 96
    %v2128 = vpop.permute.xlu0 %2127
    %2129 = vrot.lane.b32.xlu0 %v2107, 96
    %v2130 = vpop.permute.xlu0 %2129
    %2131 = vrot.lane.b32.xlu0 %v2108, 96
    %v2132 = vpop.permute.xlu0 %2131
    %v2141 = vsel %vm492, %v2118, 0.0
    %2142 = vadd.xlane.f32.xlu0 %v2141
    %v2143 = vpop.xlane.xlu0 %2142
    %v2144 = vsel %vm492, %v2120, 0.0
    %2145 = vadd.xlane.f32.xlu0 %v2144
    %v2146 = vpop.xlane.xlu0 %2145
    %v2147 = vsel %vm492, %v2122, 0.0
    %2148 = vadd.xlane.f32.xlu0 %v2147
    %v2149 = vpop.xlane.xlu0 %2148
    %v2150 = vsel %vm492, %v2124, 0.0
    %2151 = vadd.xlane.f32.xlu0 %v2150
    %v2152 = vpop.xlane.xlu0 %2151
    %v2153 = vsel %vm492, %v2126, 0.0
    %2154 = vadd.xlane.f32.xlu0 %v2153
    %v2155 = vpop.xlane.xlu0 %2154
    %v2156 = vsel %vm492, %v2128, 0.0
    %2157 = vadd.xlane.f32.xlu0 %v2156
    %v2158 = vpop.xlane.xlu0 %2157
    %v2159 = vsel %vm492, %v2130, 0.0
    %2160 = vadd.xlane.f32.xlu0 %v2159
    %v2161 = vpop.xlane.xlu0 %2160
    %v2162 = vsel %vm492, %v2132, 0.0
    %2163 = vadd.xlane.f32.xlu0 %v2162
    %v2164 = vpop.xlane.xlu0 %2163
    %v2165 = vmul.f32 %v2143, %v517
    %v2166 = vmul.f32 %v2146, %v517
    %v2167 = vmul.f32 %v2149, %v517
    %v2168 = vmul.f32 %v2152, %v517
    %v2169 = vmul.f32 %v2155, %v517
    %v2170 = vmul.f32 %v2158, %v517
    %v2171 = vmul.f32 %v2161, %v517
    %v2172 = vmul.f32 %v2164, %v517
    %v2173 = vadd.f32 %v2165, 1e-05
    %v2174 = vadd.f32 %v2166, 1e-05
    %v2175 = vadd.f32 %v2167, 1e-05
    %v2176 = vadd.f32 %v2168, 1e-05
    %v2177 = vadd.f32 %v2169, 1e-05
    %v2178 = vadd.f32 %v2170, 1e-05
    %v2179 = vadd.f32 %v2171, 1e-05
    %v2180 = vadd.f32 %v2172, 1e-05
    %v2181 = vrsqrt.pop %v2173
    %v2182 = vrsqrt.pop %v2174
    %v2183 = vrsqrt.pop %v2175
    %v2184 = vrsqrt.pop %v2176
    %v2185 = vrsqrt.pop %v2177
    %v2186 = vrsqrt.pop %v2178
    %v2187 = vrsqrt.pop %v2179
    %v2188 = vrsqrt.pop %v2180
    %v2189 = vmul.f32 %v2093, %v2181
    %v2190 = vmul.f32 %v2094, %v2182
    %v2191 = vmul.f32 %v2095, %v2183
    %v2192 = vmul.f32 %v2096, %v2184
    %v2193 = vmul.f32 %v2097, %v2185
    %v2194 = vmul.f32 %v2098, %v2186
    %v2195 = vmul.f32 %v2099, %v2187
    %v2196 = vmul.f32 %v2100, %v2188
    %v2197 = vlaneseq
    %v2198 = vshrl.u32 %v2197, 7
    %v2199 = vsub.s32 2, %v2198
    %v2200 = vrot.slane %v1748, %v2199
    %2202 = vrot.lane.b32.xlu0 %v2200, 32
    %v2203 = vpop.permute.xlu0 %2202
    %v2205 = vmul.f32 %v2189, %v2203
    %v2206 = vmul.f32 %v2190, %v2203
    %v2207 = vmul.f32 %v2191, %v2203
    %v2208 = vmul.f32 %v2192, %v2203
    %v2209 = vmul.f32 %v2193, %v2203
    %v2210 = vmul.f32 %v2194, %v2203
    %v2211 = vmul.f32 %v2195, %v2203
    %v2212 = vmul.f32 %v2196, %v2203
    %v2213 = vlaneseq
    %v2214 = vshrl.u32 %v2213, 7
    %v2215 = vsub.s32 3, %v2214
    %v2216 = vrot.slane %v1748, %v2215
    %2218 = vrot.lane.b32.xlu0 %v2216, 32
    %v2219 = vpop.permute.xlu0 %2218
    %v2221 = vadd.f32 %v2205, %v2219
    %v2222 = vadd.f32 %v2206, %v2219
    %v2223 = vadd.f32 %v2207, %v2219
    %v2224 = vadd.f32 %v2208, %v2219
    %v2225 = vadd.f32 %v2209, %v2219
    %v2226 = vadd.f32 %v2210, %v2219
    %v2227 = vadd.f32 %v2211, %v2219
    %v2228 = vadd.f32 %v2212, %v2219
    %v2229 = vmax.f32 %v2221, 0.0
    %v2230 = vmax.f32 %v2222, 0.0
    %v2231 = vmax.f32 %v2223, 0.0
    %v2232 = vmax.f32 %v2224, 0.0
    %v2233 = vmax.f32 %v2225, 0.0
    %v2234 = vmax.f32 %v2226, 0.0
    %v2235 = vmax.f32 %v2227, 0.0
    %v2236 = vmax.f32 %v2228, 0.0
    %v2237 = vmul.f32 %v2229, %v2013
    %v2238 = vmul.f32 %v2230, %v2014
    %v2239 = vmul.f32 %v2231, %v2015
    %v2240 = vmul.f32 %v2232, %v2016
    %v2241 = vmul.f32 %v2233, %v2017
    %v2242 = vmul.f32 %v2234, %v2018
    %v2243 = vmul.f32 %v2235, %v2019
    %v2244 = vmul.f32 %v2236, %v2020
    %2253 = vrot.lane.b32.xlu0 %v2237, 96
    %v2254 = vpop.permute.xlu0 %2253
    %2255 = vrot.lane.b32.xlu0 %v2238, 96
    %v2256 = vpop.permute.xlu0 %2255
    %2257 = vrot.lane.b32.xlu0 %v2239, 96
    %v2258 = vpop.permute.xlu0 %2257
    %2259 = vrot.lane.b32.xlu0 %v2240, 96
    %v2260 = vpop.permute.xlu0 %2259
    %2261 = vrot.lane.b32.xlu0 %v2241, 96
    %v2262 = vpop.permute.xlu0 %2261
    %2263 = vrot.lane.b32.xlu0 %v2242, 96
    %v2264 = vpop.permute.xlu0 %2263
    %2265 = vrot.lane.b32.xlu0 %v2243, 96
    %v2266 = vpop.permute.xlu0 %2265
    %2267 = vrot.lane.b32.xlu0 %v2244, 96
    %v2268 = vpop.permute.xlu0 %2267
    %2277 = vrot.lane.b32.xlu0 %v2237, 104
    %v2278 = vpop.permute.xlu0 %2277
    %2279 = vrot.lane.b32.xlu0 %v2238, 104
    %v2280 = vpop.permute.xlu0 %2279
    %2281 = vrot.lane.b32.xlu0 %v2239, 104
    %v2282 = vpop.permute.xlu0 %2281
    %2283 = vrot.lane.b32.xlu0 %v2240, 104
    %v2284 = vpop.permute.xlu0 %2283
    %2285 = vrot.lane.b32.xlu0 %v2241, 104
    %v2286 = vpop.permute.xlu0 %2285
    %2287 = vrot.lane.b32.xlu0 %v2242, 104
    %v2288 = vpop.permute.xlu0 %2287
    %2289 = vrot.lane.b32.xlu0 %v2243, 104
    %v2290 = vpop.permute.xlu0 %2289
    %2291 = vrot.lane.b32.xlu0 %v2244, 104
    %v2292 = vpop.permute.xlu0 %2291
    %2301 = vrot.lane.b32.xlu0 %v2237, 112
    %v2302 = vpop.permute.xlu0 %2301
    %2303 = vrot.lane.b32.xlu0 %v2238, 112
    %v2304 = vpop.permute.xlu0 %2303
    %2305 = vrot.lane.b32.xlu0 %v2239, 112
    %v2306 = vpop.permute.xlu0 %2305
    %2307 = vrot.lane.b32.xlu0 %v2240, 112
    %v2308 = vpop.permute.xlu0 %2307
    %2309 = vrot.lane.b32.xlu0 %v2241, 112
    %v2310 = vpop.permute.xlu0 %2309
    %2311 = vrot.lane.b32.xlu0 %v2242, 112
    %v2312 = vpop.permute.xlu0 %2311
    %2313 = vrot.lane.b32.xlu0 %v2243, 112
    %v2314 = vpop.permute.xlu0 %2313
    %2315 = vrot.lane.b32.xlu0 %v2244, 112
    %v2316 = vpop.permute.xlu0 %2315
    %v2325 = vsel %vm492, %v2254, %v2278
    %v2326 = vsel %vm492, %v2256, %v2280
    %v2327 = vsel %vm492, %v2258, %v2282
    %v2328 = vsel %vm492, %v2260, %v2284
    %v2329 = vsel %vm492, %v2262, %v2286
    %v2330 = vsel %vm492, %v2264, %v2288
    %v2331 = vsel %vm492, %v2266, %v2290
    %v2332 = vsel %vm492, %v2268, %v2292
    %v2333 = vsel %vm39, %v2325, %v2302
    %v2334 = vsel %vm39, %v2326, %v2304
    %v2335 = vsel %vm39, %v2327, %v2306
    %v2336 = vsel %vm39, %v2328, %v2308
    %v2337 = vsel %vm39, %v2329, %v2310
    %v2338 = vsel %vm39, %v2330, %v2312
    %v2339 = vsel %vm39, %v2331, %v2314
    %v2340 = vsel %vm39, %v2332, %v2316
    %2349 = vrot.lane.b32.xlu0 %v2333, 32
    %v2350 = vpop.permute.xlu0 %2349
    %2351 = vrot.lane.b32.xlu0 %v2334, 32
    %v2352 = vpop.permute.xlu0 %2351
    %2353 = vrot.lane.b32.xlu0 %v2335, 32
    %v2354 = vpop.permute.xlu0 %2353
    %2355 = vrot.lane.b32.xlu0 %v2336, 32
    %v2356 = vpop.permute.xlu0 %2355
    %2357 = vrot.lane.b32.xlu0 %v2337, 32
    %v2358 = vpop.permute.xlu0 %2357
    %2359 = vrot.lane.b32.xlu0 %v2338, 32
    %v2360 = vpop.permute.xlu0 %2359
    %2361 = vrot.lane.b32.xlu0 %v2339, 32
    %v2362 = vpop.permute.xlu0 %2361
    %2363 = vrot.lane.b32.xlu0 %v2340, 32
    %v2364 = vpop.permute.xlu0 %2363
    %v2373 = vmul.f32 %v1709, %v2350
    %v2374 = vmul.f32 %v1714, %v2352
    %v2375 = vmul.f32 %v1719, %v2354
    %v2376 = vmul.f32 %v1724, %v2356
    %v2377 = vmul.f32 %v1729, %v2358
    %v2378 = vmul.f32 %v1734, %v2360
    %v2379 = vmul.f32 %v1739, %v2362
    %v2380 = vmul.f32 %v1744, %v2364
    %s2381 = scalar_lea.vmem [#allocation2], 168
    %v2382 = vld [vmem:[%s2381] sm:$0xff]
    %v2383 = vld [vmem:[%s2381 + $0x8] sm:$0xff]
    %v2384 = vld [vmem:[%s2381 + $0x10] sm:$0xff]
    %v2385 = vld [vmem:[%s2381 + $0x18] sm:$0xff]
    %v2386 = vld [vmem:[%s2381 + $0x20] sm:$0xff]
    %v2387 = vld [vmem:[%s2381 + $0x28] sm:$0xff]
    %v2388 = vld [vmem:[%s2381 + $0x30] sm:$0xff]
    %v2389 = vsel %vm202, %v1925, %v2373
    %v2390 = vsel %vm202, %v1926, %v2374
    %v2391 = vsel %vm202, %v1927, %v2375
    %v2392 = vsel %vm202, %v1928, %v2376
    %v2393 = vsel %vm202, %v1929, %v2377
    %v2394 = vsel %vm202, %v1930, %v2378
    %v2395 = vsel %vm202, %v1931, %v2379
    %v2396 = vsel %vm202, %v1932, %v2380
    %v2398 = vsel %vm838, %v2389, 0
    %v2401 = vsel %vm838, %v2390, 0
    %v2404 = vsel %vm838, %v2391, 0
    %v2407 = vsel %vm838, %v2392, 0
    %v2410 = vsel %vm838, %v2393, 0
    %v2413 = vsel %vm838, %v2394, 0
    %v2416 = vsel %vm838, %v2395, 0
    %v2419 = vsel %vm838, %v2396, 0
    %2421 = vmatprep.subr.mxu0 0.0
    %2422 = vmatpush1.msra.mxu0 %v2382
    %2423 = vmatprep.subr.mxu0 0.0
    %2424 = vmatpush1.msra.mxu0 %v2383
    %2425 = vmatprep.subr.mxu0 0.0
    %2426 = vmatpush1.msra.mxu0 %v2384
    %2427 = vmatprep.subr.mxu0 0.0
    %2428 = vmatpush1.msra.mxu0 %v2385
    %2429 = vmatprep.subr.mxu0 0.0
    %2430 = vmatpush1.msra.mxu0 %v2386
    %2431 = vmatprep.subr.mxu0 0.0
    %2432 = vmatpush1.msra.mxu0 %v2387
    %2433 = vmatprep.subr.mxu0 0.0
    %2434 = vmatpush1.msra.mxu0 %v2388
    %2435 = vmatprep.subr.mxu0 0.0
    %2436 = vmatpush1.msra.mxu0 0.0
    %2437 = vmatprep.subr.mxu0 0.0
    %2438 = vmatpush1.msra.mxu0 0.0
    %2439 = vmatprep.subr.mxu0 0.0
    %2440 = vmatpush1.msra.mxu0 0.0
    %2441 = vmatprep.subr.mxu0 0.0
    %2442 = vmatpush1.msra.mxu0 0.0
    %2443 = vmatprep.subr.mxu0 0.0
    %2444 = vmatpush1.msra.mxu0 0.0
    %2445 = vmatprep.subr.mxu0 0.0
    %2446 = vmatpush1.msra.mxu0 0.0
    %2447 = vmatprep.subr.mxu0 0.0
    %2448 = vmatpush1.msra.mxu0 0.0
    %2449 = vmatprep.subr.mxu0 0.0
    %2450 = vmatpush1.msra.mxu0 0.0
    %2451 = vmatprep.subr.mxu0 0.0
    %2452 = vmatpush1.msra.mxu0 0.0
    %2453 = vmatprep.subr.mxu0 0.0
    %2454 = vmatpush1.msra.mxu0 0.0
    %2455 = vmatprep.subr.mxu0 0.0
    %2456 = vmatpush1.msra.mxu0 0.0
    %2457 = vmatprep.subr.mxu0 0.0
    %2458 = vmatpush1.msra.mxu0 0.0
    %2459 = vmatprep.subr.mxu0 0.0
    %2460 = vmatpush1.msra.mxu0 0.0
    %2461 = vmatprep.subr.mxu0 0.0
    %2462 = vmatpush1.msra.mxu0 0.0
    %2463 = vmatprep.subr.mxu0 0.0
    %2464 = vmatpush1.msra.mxu0 0.0
    %2465 = vmatprep.subr.mxu0 0.0
    %2466 = vmatpush1.msra.mxu0 0.0
    %2467 = vmatprep.subr.mxu0 0.0
    %2468 = vmatpush1.msra.mxu0 0.0
    %2469 = vmatprep.subr.mxu0 0.0
    %2470 = vmatpush1.msra.mxu0 0.0
    %2471 = vmatprep.subr.mxu0 0.0
    %2472 = vmatpush1.msra.mxu0 0.0
    %2473 = vmatprep.subr.mxu0 0.0
    %2474 = vmatpush1.msra.mxu0 0.0
    %2475 = vmatprep.subr.mxu0 0.0
    %2476 = vmatpush1.msra.mxu0 0.0
    %2477 = vmatprep.subr.mxu0 0.0
    %2478 = vmatpush1.msra.mxu0 0.0
    %2479 = vmatprep.subr.mxu0 0.0
    %2480 = vmatpush1.msra.mxu0 0.0
    %2481 = vmatprep.subr.mxu0 0.0
    %2482 = vmatpush1.msra.mxu0 0.0
    %2483 = vmatprep.subr.mxu0 0.0
    %2484 = vmatpush1.msra.mxu0 0.0
    %2485 = vmatprep.mubr.f32.mxu0 0.0
    %2486 = vmatmul.mubr.f32.gmra.mrb[0].mxu0 %v2398
    %v2487 = vpop.f32.mrb[0].mxu0
    %v2488 = vadd.f32 0.0, %v2487
    %v2489 = vpop.f32.mrb[0].mxu0
    %2490 = vmatprep.mubr.f32.mxu0 0.0
    %2491 = vmatmul.mubr.f32.gmra.mrb[0].mxu0 %v2401
    %v2492 = vpop.f32.mrb[0].mxu0
    %v2493 = vadd.f32 0.0, %v2492
    %v2494 = vpop.f32.mrb[0].mxu0
    %2495 = vmatprep.mubr.f32.mxu0 0.0
    %2496 = vmatmul.mubr.f32.gmra.mrb[0].mxu0 %v2404
    %v2497 = vpop.f32.mrb[0].mxu0
    %v2498 = vadd.f32 0.0, %v2497
    %v2499 = vpop.f32.mrb[0].mxu0
    %2500 = vmatprep.mubr.f32.mxu0 0.0
    %2501 = vmatmul.mubr.f32.gmra.mrb[0].mxu0 %v2407
    %v2502 = vpop.f32.mrb[0].mxu0
    %v2503 = vadd.f32 0.0, %v2502
    %v2504 = vpop.f32.mrb[0].mxu0
    %2505 = vmatprep.mubr.f32.mxu0 0.0
    %2506 = vmatmul.mubr.f32.gmra.mrb[0].mxu0 %v2410
    %v2507 = vpop.f32.mrb[0].mxu0
    %v2508 = vadd.f32 0.0, %v2507
    %v2509 = vpop.f32.mrb[0].mxu0
    %2510 = vmatprep.mubr.f32.mxu0 0.0
    %2511 = vmatmul.mubr.f32.gmra.mrb[0].mxu0 %v2413
    %v2512 = vpop.f32.mrb[0].mxu0
    %v2513 = vadd.f32 0.0, %v2512
    %v2514 = vpop.f32.mrb[0].mxu0
    %2515 = vmatprep.mubr.f32.mxu0 0.0
    %2516 = vmatmul.mubr.f32.gmra.mrb[0].mxu0 %v2416
    %v2517 = vpop.f32.mrb[0].mxu0
    %v2518 = vadd.f32 0.0, %v2517
    %v2519 = vpop.f32.mrb[0].mxu0
    %2520 = vmatprep.mubr.f32.mxu0 0.0
    %2521 = vmatmul.mubr.f32.gmra.mrb[0].mxu0 %v2419
    %v2522 = vpop.f32.mrb[0].mxu0
    %v2523 = vadd.f32 0.0, %v2522
    %v2524 = vpop.f32.mrb[0].mxu0
    %2525 = vdwg.mxu0
    %v2526 = vand.u32 2147483647, %v2488
    %v2527 = vand.u32 2147483647, %v2493
    %v2528 = vand.u32 2147483647, %v2498
    %v2529 = vand.u32 2147483647, %v2503
    %v2530 = vand.u32 2147483647, %v2508
    %v2531 = vand.u32 2147483647, %v2513
    %v2532 = vand.u32 2147483647, %v2518
    %v2533 = vand.u32 2147483647, %v2523
    %v2534 = vsub.f32 0.0, %v2526
    %v2535 = vsub.f32 0.0, %v2527
    %v2536 = vsub.f32 0.0, %v2528
    %v2537 = vsub.f32 0.0, %v2529
    %v2538 = vsub.f32 0.0, %v2530
    %v2539 = vsub.f32 0.0, %v2531
    %v2540 = vsub.f32 0.0, %v2532
    %v2541 = vsub.f32 0.0, %v2533
    %v2542 = vmul.f32 %v2534, 1.442695
    %v2543 = vpow.pop %v2542
    %v2544 = vmul.f32 %v2535, 1.442695
    %v2545 = vpow.pop %v2544
    %v2546 = vmul.f32 %v2536, 1.442695
    %v2547 = vpow.pop %v2546
    %v2548 = vmul.f32 %v2537, 1.442695
    %v2549 = vpow.pop %v2548
    %v2550 = vmul.f32 %v2538, 1.442695
    %v2551 = vpow.pop %v2550
    %v2552 = vmul.f32 %v2539, 1.442695
    %v2553 = vpow.pop %v2552
    %v2554 = vmul.f32 %v2540, 1.442695
    %v2555 = vpow.pop %v2554
    %v2556 = vmul.f32 %v2541, 1.442695
    %v2557 = vpow.pop %v2556
    %v2558 = vadd.f32 %v2543, 1.0
    %v2559 = vadd.f32 %v2545, 1.0
    %v2560 = vadd.f32 %v2547, 1.0
    %v2561 = vadd.f32 %v2549, 1.0
    %v2562 = vadd.f32 %v2551, 1.0
    %v2563 = vadd.f32 %v2553, 1.0
    %v2564 = vadd.f32 %v2555, 1.0
    %v2565 = vadd.f32 %v2557, 1.0
    %v2566 = vrcp.pop %v2558
    %v2567 = vmul.f32 1.0, %v2566
    %v2568 = vrcp.pop %v2559
    %v2569 = vmul.f32 1.0, %v2568
    %v2570 = vrcp.pop %v2560
    %v2571 = vmul.f32 1.0, %v2570
    %v2572 = vrcp.pop %v2561
    %v2573 = vmul.f32 1.0, %v2572
    %v2574 = vrcp.pop %v2562
    %v2575 = vmul.f32 1.0, %v2574
    %v2576 = vrcp.pop %v2563
    %v2577 = vmul.f32 1.0, %v2576
    %v2578 = vrcp.pop %v2564
    %v2579 = vmul.f32 1.0, %v2578
    %v2580 = vrcp.pop %v2565
    %v2581 = vmul.f32 1.0, %v2580
    %vm2582 = vcmp.ge.f32.partialorder %v2488, 0.0
    %vm2583 = vcmp.ge.f32.partialorder %v2493, 0.0
    %vm2584 = vcmp.ge.f32.partialorder %v2498, 0.0
    %vm2585 = vcmp.ge.f32.partialorder %v2503, 0.0
    %vm2586 = vcmp.ge.f32.partialorder %v2508, 0.0
    %vm2587 = vcmp.ge.f32.partialorder %v2513, 0.0
    %vm2588 = vcmp.ge.f32.partialorder %v2518, 0.0
    %vm2589 = vcmp.ge.f32.partialorder %v2523, 0.0
    %v2590 = vmul.f32 %v2543, %v2567
    %v2591 = vmul.f32 %v2545, %v2569
    %v2592 = vmul.f32 %v2547, %v2571
    %v2593 = vmul.f32 %v2549, %v2573
    %v2594 = vmul.f32 %v2551, %v2575
    %v2595 = vmul.f32 %v2553, %v2577
    %v2596 = vmul.f32 %v2555, %v2579
    %v2597 = vmul.f32 %v2557, %v2581
    %v2598 = vsel %vm2582, %v2567, %v2590
    %v2599 = vsel %vm2583, %v2569, %v2591
    %v2600 = vsel %vm2584, %v2571, %v2592
    %v2601 = vsel %vm2585, %v2573, %v2593
    %v2602 = vsel %vm2586, %v2575, %v2594
    %v2603 = vsel %vm2587, %v2577, %v2595
    %v2604 = vsel %vm2588, %v2579, %v2596
    %v2605 = vsel %vm2589, %v2581, %v2597
    %v2606 = vmax.f32 %v2488, 0.0
    %v2607 = vmax.f32 %v2493, 0.0
    %v2608 = vmax.f32 %v2498, 0.0
    %v2609 = vmax.f32 %v2503, 0.0
    %v2610 = vmax.f32 %v2508, 0.0
    %v2611 = vmax.f32 %v2513, 0.0
    %v2612 = vmax.f32 %v2518, 0.0
    %v2613 = vmax.f32 %v2523, 0.0
    %2614 = vrot.lane.b32.xlu0 %v29, 82
    %v2615 = vpop.permute.xlu0 %2614
    %2616 = vrot.lane.b32.xlu0 %v30, 82
    %v2617 = vpop.permute.xlu0 %2616
    %2618 = vrot.lane.b32.xlu0 %v31, 82
    %v2619 = vpop.permute.xlu0 %2618
    %2620 = vrot.lane.b32.xlu0 %v32, 82
    %v2621 = vpop.permute.xlu0 %2620
    %2622 = vrot.lane.b32.xlu0 %v33, 82
    %v2623 = vpop.permute.xlu0 %2622
    %2624 = vrot.lane.b32.xlu0 %v34, 82
    %v2625 = vpop.permute.xlu0 %2624
    %2626 = vrot.lane.b32.xlu0 %v35, 82
    %v2627 = vpop.permute.xlu0 %2626
    %2628 = vrot.lane.b32.xlu0 %v36, 82
    %v2629 = vpop.permute.xlu0 %2628
    %v2638 = vmul.f32 %v2488, %v2615
    %v2639 = vmul.f32 %v2493, %v2617
    %v2640 = vmul.f32 %v2498, %v2619
    %v2641 = vmul.f32 %v2503, %v2621
    %v2642 = vmul.f32 %v2508, %v2623
    %v2643 = vmul.f32 %v2513, %v2625
    %v2644 = vmul.f32 %v2518, %v2627
    %v2645 = vmul.f32 %v2523, %v2629
    %v2646 = vsub.f32 %v2606, %v2638
    %v2647 = vsub.f32 %v2607, %v2639
    %v2648 = vsub.f32 %v2608, %v2640
    %v2649 = vsub.f32 %v2609, %v2641
    %v2650 = vsub.f32 %v2610, %v2642
    %v2651 = vsub.f32 %v2611, %v2643
    %v2652 = vsub.f32 %v2612, %v2644
    %v2653 = vsub.f32 %v2613, %v2645
    %v2654 = vlog2.pop %v2558
    %v2655 = vmul.f32 %v2654, 0.6931472
    %v2656 = vlog2.pop %v2559
    %v2657 = vmul.f32 %v2656, 0.6931472
    %v2658 = vlog2.pop %v2560
    %v2659 = vmul.f32 %v2658, 0.6931472
    %v2660 = vlog2.pop %v2561
    %v2661 = vmul.f32 %v2660, 0.6931472
    %v2662 = vlog2.pop %v2562
    %v2663 = vmul.f32 %v2662, 0.6931472
    %v2664 = vlog2.pop %v2563
    %v2665 = vmul.f32 %v2664, 0.6931472
    %v2666 = vlog2.pop %v2564
    %v2667 = vmul.f32 %v2666, 0.6931472
    %v2668 = vlog2.pop %v2565
    %v2669 = vmul.f32 %v2668, 0.6931472
    %v2670 = vadd.f32 %v2646, %v2655
    %v2671 = vadd.f32 %v2647, %v2657
    %v2672 = vadd.f32 %v2648, %v2659
    %v2673 = vadd.f32 %v2649, %v2661
    %v2674 = vadd.f32 %v2650, %v2663
    %v2675 = vadd.f32 %v2651, %v2665
    %v2676 = vadd.f32 %v2652, %v2667
    %v2677 = vadd.f32 %v2653, %v2669
    %2686 = vrot.lane.b32.xlu0 %v2670, 48
    %v2687 = vpop.permute.xlu0 %2686
    %2688 = vrot.lane.b32.xlu0 %v2671, 48
    %v2689 = vpop.permute.xlu0 %2688
    %2690 = vrot.lane.b32.xlu0 %v2672, 48
    %v2691 = vpop.permute.xlu0 %2690
    %2692 = vrot.lane.b32.xlu0 %v2673, 48
    %v2693 = vpop.permute.xlu0 %2692
    %2694 = vrot.lane.b32.xlu0 %v2674, 48
    %v2695 = vpop.permute.xlu0 %2694
    %2696 = vrot.lane.b32.xlu0 %v2675, 48
    %v2697 = vpop.permute.xlu0 %2696
    %2698 = vrot.lane.b32.xlu0 %v2676, 48
    %v2699 = vpop.permute.xlu0 %2698
    %2700 = vrot.lane.b32.xlu0 %v2677, 48
    %v2701 = vpop.permute.xlu0 %2700
    %v2710 = vmul.f32 %v29, %v2687
    %v2711 = vmul.f32 %v30, %v2689
    %v2712 = vmul.f32 %v31, %v2691
    %v2713 = vmul.f32 %v32, %v2693
    %v2714 = vmul.f32 %v33, %v2695
    %v2715 = vmul.f32 %v34, %v2697
    %v2716 = vmul.f32 %v35, %v2699
    %v2717 = vmul.f32 %v36, %v2701
    %2718 = vrot.lane.b32.xlu0 %v29, 90
    %v2719 = vpop.permute.xlu0 %2718
    %2720 = vrot.lane.b32.xlu0 %v30, 90
    %v2721 = vpop.permute.xlu0 %2720
    %2722 = vrot.lane.b32.xlu0 %v31, 90
    %v2723 = vpop.permute.xlu0 %2722
    %2724 = vrot.lane.b32.xlu0 %v32, 90
    %v2725 = vpop.permute.xlu0 %2724
    %2726 = vrot.lane.b32.xlu0 %v33, 90
    %v2727 = vpop.permute.xlu0 %2726
    %2728 = vrot.lane.b32.xlu0 %v34, 90
    %v2729 = vpop.permute.xlu0 %2728
    %2730 = vrot.lane.b32.xlu0 %v35, 90
    %v2731 = vpop.permute.xlu0 %2730
    %2732 = vrot.lane.b32.xlu0 %v36, 90
    %v2733 = vpop.permute.xlu0 %2732
    %v2742 = vsub.f32 %v2488, %v2719
    %v2743 = vsub.f32 %v2493, %v2721
    %v2744 = vsub.f32 %v2498, %v2723
    %v2745 = vsub.f32 %v2503, %v2725
    %v2746 = vsub.f32 %v2508, %v2727
    %v2747 = vsub.f32 %v2513, %v2729
    %v2748 = vsub.f32 %v2518, %v2731
    %v2749 = vsub.f32 %v2523, %v2733
    %v2750 = vmul.f32 %v2742, %v2742
    %v2751 = vmul.f32 %v2743, %v2743
    %v2752 = vmul.f32 %v2744, %v2744
    %v2753 = vmul.f32 %v2745, %v2745
    %v2754 = vmul.f32 %v2746, %v2746
    %v2755 = vmul.f32 %v2747, %v2747
    %v2756 = vmul.f32 %v2748, %v2748
    %v2757 = vmul.f32 %v2749, %v2749
    %2766 = vrot.lane.b32.xlu0 %v2750, 126
    %v2767 = vpop.permute.xlu0 %2766
    %2768 = vrot.lane.b32.xlu0 %v2751, 126
    %v2769 = vpop.permute.xlu0 %2768
    %2770 = vrot.lane.b32.xlu0 %v2752, 126
    %v2771 = vpop.permute.xlu0 %2770
    %2772 = vrot.lane.b32.xlu0 %v2753, 126
    %v2773 = vpop.permute.xlu0 %2772
    %2774 = vrot.lane.b32.xlu0 %v2754, 126
    %v2775 = vpop.permute.xlu0 %2774
    %2776 = vrot.lane.b32.xlu0 %v2755, 126
    %v2777 = vpop.permute.xlu0 %2776
    %2778 = vrot.lane.b32.xlu0 %v2756, 126
    %v2779 = vpop.permute.xlu0 %2778
    %2780 = vrot.lane.b32.xlu0 %v2757, 126
    %v2781 = vpop.permute.xlu0 %2780
    %v2790 = vadd.f32 %v2750, %v2767
    %v2791 = vadd.f32 %v2751, %v2769
    %v2792 = vadd.f32 %v2752, %v2771
    %v2793 = vadd.f32 %v2753, %v2773
    %v2794 = vadd.f32 %v2754, %v2775
    %v2795 = vadd.f32 %v2755, %v2777
    %v2796 = vadd.f32 %v2756, %v2779
    %v2797 = vadd.f32 %v2757, %v2781
    %2798 = vrot.lane.b32.xlu0 %v2750, 124
    %v2799 = vpop.permute.xlu0 %2798
    %2800 = vrot.lane.b32.xlu0 %v2751, 124
    %v2801 = vpop.permute.xlu0 %2800
    %2802 = vrot.lane.b32.xlu0 %v2752, 124
    %v2803 = vpop.permute.xlu0 %2802
    %2804 = vrot.lane.b32.xlu0 %v2753, 124
    %v2805 = vpop.permute.xlu0 %2804
    %2806 = vrot.lane.b32.xlu0 %v2754, 124
    %v2807 = vpop.permute.xlu0 %2806
    %2808 = vrot.lane.b32.xlu0 %v2755, 124
    %v2809 = vpop.permute.xlu0 %2808
    %2810 = vrot.lane.b32.xlu0 %v2756, 124
    %v2811 = vpop.permute.xlu0 %2810
    %2812 = vrot.lane.b32.xlu0 %v2757, 124
    %v2813 = vpop.permute.xlu0 %2812
    %v2822 = vadd.f32 %v2790, %v2799
    %v2823 = vadd.f32 %v2791, %v2801
    %v2824 = vadd.f32 %v2792, %v2803
    %v2825 = vadd.f32 %v2793, %v2805
    %v2826 = vadd.f32 %v2794, %v2807
    %v2827 = vadd.f32 %v2795, %v2809
    %v2828 = vadd.f32 %v2796, %v2811
    %v2829 = vadd.f32 %v2797, %v2813
    %v2830 = vadd.f32 %v2822, 1e-10
    %v2831 = vadd.f32 %v2823, 1e-10
    %v2832 = vadd.f32 %v2824, 1e-10
    %v2833 = vadd.f32 %v2825, 1e-10
    %v2834 = vadd.f32 %v2826, 1e-10
    %v2835 = vadd.f32 %v2827, 1e-10
    %v2836 = vadd.f32 %v2828, 1e-10
    %v2837 = vadd.f32 %v2829, 1e-10
    %v2838 = vrsqrt.pop %v2830
    %v2839 = vmul.f32 %v2830, %v2838
    %vm2840 = vcmp.eq.f32.partialorder %v2830, inf
    %v2841 = vsel %vm2840, %v2830, %v2839
    %vm2842 = vcmp.eq.f32.partialorder %v2830, 0.0
    %v2843 = vand.u32 %v2830, 2147483648
    %v2844 = vsel %vm2842, %v2843, %v2841
    %v2845 = vrsqrt.pop %v2831
    %v2846 = vmul.f32 %v2831, %v2845
    %vm2847 = vcmp.eq.f32.partialorder %v2831, inf
    %v2848 = vsel %vm2847, %v2831, %v2846
    %vm2849 = vcmp.eq.f32.partialorder %v2831, 0.0
    %v2850 = vand.u32 %v2831, 2147483648
    %v2851 = vsel %vm2849, %v2850, %v2848
    %v2852 = vrsqrt.pop %v2832
    %v2853 = vmul.f32 %v2832, %v2852
    %vm2854 = vcmp.eq.f32.partialorder %v2832, inf
    %v2855 = vsel %vm2854, %v2832, %v2853
    %vm2856 = vcmp.eq.f32.partialorder %v2832, 0.0
    %v2857 = vand.u32 %v2832, 2147483648
    %v2858 = vsel %vm2856, %v2857, %v2855
    %v2859 = vrsqrt.pop %v2833
    %v2860 = vmul.f32 %v2833, %v2859
    %vm2861 = vcmp.eq.f32.partialorder %v2833, inf
    %v2862 = vsel %vm2861, %v2833, %v2860
    %vm2863 = vcmp.eq.f32.partialorder %v2833, 0.0
    %v2864 = vand.u32 %v2833, 2147483648
    %v2865 = vsel %vm2863, %v2864, %v2862
    %v2866 = vrsqrt.pop %v2834
    %v2867 = vmul.f32 %v2834, %v2866
    %vm2868 = vcmp.eq.f32.partialorder %v2834, inf
    %v2869 = vsel %vm2868, %v2834, %v2867
    %vm2870 = vcmp.eq.f32.partialorder %v2834, 0.0
    %v2871 = vand.u32 %v2834, 2147483648
    %v2872 = vsel %vm2870, %v2871, %v2869
    %v2873 = vrsqrt.pop %v2835
    %v2874 = vmul.f32 %v2835, %v2873
    %vm2875 = vcmp.eq.f32.partialorder %v2835, inf
    %v2876 = vsel %vm2875, %v2835, %v2874
    %vm2877 = vcmp.eq.f32.partialorder %v2835, 0.0
    %v2878 = vand.u32 %v2835, 2147483648
    %v2879 = vsel %vm2877, %v2878, %v2876
    %v2880 = vrsqrt.pop %v2836
    %v2881 = vmul.f32 %v2836, %v2880
    %vm2882 = vcmp.eq.f32.partialorder %v2836, inf
    %v2883 = vsel %vm2882, %v2836, %v2881
    %vm2884 = vcmp.eq.f32.partialorder %v2836, 0.0
    %v2885 = vand.u32 %v2836, 2147483648
    %v2886 = vsel %vm2884, %v2885, %v2883
    %v2887 = vrsqrt.pop %v2837
    %v2888 = vmul.f32 %v2837, %v2887
    %vm2889 = vcmp.eq.f32.partialorder %v2837, inf
    %v2890 = vsel %vm2889, %v2837, %v2888
    %vm2891 = vcmp.eq.f32.partialorder %v2837, 0.0
    %v2892 = vand.u32 %v2837, 2147483648
    %v2893 = vsel %vm2891, %v2892, %v2890
    %v2894 = vmin.f32 %v2844, 10.0
    %v2895 = vmin.f32 %v2851, 10.0
    %v2896 = vmin.f32 %v2858, 10.0
    %v2897 = vmin.f32 %v2865, 10.0
    %v2898 = vmin.f32 %v2872, 10.0
    %v2899 = vmin.f32 %v2879, 10.0
    %v2900 = vmin.f32 %v2886, 10.0
    %v2901 = vmin.f32 %v2893, 10.0
    %v2902 = vmin.f32 %v2822, 100.0
    %v2903 = vmin.f32 %v2823, 100.0
    %v2904 = vmin.f32 %v2824, 100.0
    %v2905 = vmin.f32 %v2825, 100.0
    %v2906 = vmin.f32 %v2826, 100.0
    %v2907 = vmin.f32 %v2827, 100.0
    %v2908 = vmin.f32 %v2828, 100.0
    %v2909 = vmin.f32 %v2829, 100.0
    %v2910 = vmul.f32 %v2488, %v2488
    %v2911 = vmul.f32 %v2493, %v2493
    %v2912 = vmul.f32 %v2498, %v2498
    %v2913 = vmul.f32 %v2503, %v2503
    %v2914 = vmul.f32 %v2508, %v2508
    %v2915 = vmul.f32 %v2513, %v2513
    %v2916 = vmul.f32 %v2518, %v2518
    %v2917 = vmul.f32 %v2523, %v2523
    %2926 = vrot.lane.b32.xlu0 %v2910, 126
    %v2927 = vpop.permute.xlu0 %2926
    %2928 = vrot.lane.b32.xlu0 %v2911, 126
    %v2929 = vpop.permute.xlu0 %2928
    %2930 = vrot.lane.b32.xlu0 %v2912, 126
    %v2931 = vpop.permute.xlu0 %2930
    %2932 = vrot.lane.b32.xlu0 %v2913, 126
    %v2933 = vpop.permute.xlu0 %2932
    %2934 = vrot.lane.b32.xlu0 %v2914, 126
    %v2935 = vpop.permute.xlu0 %2934
    %2936 = vrot.lane.b32.xlu0 %v2915, 126
    %v2937 = vpop.permute.xlu0 %2936
    %2938 = vrot.lane.b32.xlu0 %v2916, 126
    %v2939 = vpop.permute.xlu0 %2938
    %2940 = vrot.lane.b32.xlu0 %v2917, 126
    %v2941 = vpop.permute.xlu0 %2940
    %v2950 = vadd.f32 %v2910, %v2927
    %v2951 = vadd.f32 %v2911, %v2929
    %v2952 = vadd.f32 %v2912, %v2931
    %v2953 = vadd.f32 %v2913, %v2933
    %v2954 = vadd.f32 %v2914, %v2935
    %v2955 = vadd.f32 %v2915, %v2937
    %v2956 = vadd.f32 %v2916, %v2939
    %v2957 = vadd.f32 %v2917, %v2941
    %2958 = vrot.lane.b32.xlu0 %v2910, 124
    %v2959 = vpop.permute.xlu0 %2958
    %2960 = vrot.lane.b32.xlu0 %v2911, 124
    %v2961 = vpop.permute.xlu0 %2960
    %2962 = vrot.lane.b32.xlu0 %v2912, 124
    %v2963 = vpop.permute.xlu0 %2962
    %2964 = vrot.lane.b32.xlu0 %v2913, 124
    %v2965 = vpop.permute.xlu0 %2964
    %2966 = vrot.lane.b32.xlu0 %v2914, 124
    %v2967 = vpop.permute.xlu0 %2966
    %2968 = vrot.lane.b32.xlu0 %v2915, 124
    %v2969 = vpop.permute.xlu0 %2968
    %2970 = vrot.lane.b32.xlu0 %v2916, 124
    %v2971 = vpop.permute.xlu0 %2970
    %2972 = vrot.lane.b32.xlu0 %v2917, 124
    %v2973 = vpop.permute.xlu0 %2972
    %v2982 = vadd.f32 %v2950, %v2959
    %v2983 = vadd.f32 %v2951, %v2961
    %v2984 = vadd.f32 %v2952, %v2963
    %v2985 = vadd.f32 %v2953, %v2965
    %v2986 = vadd.f32 %v2954, %v2967
    %v2987 = vadd.f32 %v2955, %v2969
    %v2988 = vadd.f32 %v2956, %v2971
    %v2989 = vadd.f32 %v2957, %v2973
    %2990 = vrot.lane.b32.xlu0 %v356, 126
    %v2991 = vpop.permute.xlu0 %2990
    %2992 = vrot.lane.b32.xlu0 %v357, 126
    %v2993 = vpop.permute.xlu0 %2992
    %2994 = vrot.lane.b32.xlu0 %v358, 126
    %v2995 = vpop.permute.xlu0 %2994
    %2996 = vrot.lane.b32.xlu0 %v359, 126
    %v2997 = vpop.permute.xlu0 %2996
    %2998 = vrot.lane.b32.xlu0 %v360, 126
    %v2999 = vpop.permute.xlu0 %2998
    %3000 = vrot.lane.b32.xlu0 %v361, 126
    %v3001 = vpop.permute.xlu0 %3000
    %3002 = vrot.lane.b32.xlu0 %v362, 126
    %v3003 = vpop.permute.xlu0 %3002
    %3004 = vrot.lane.b32.xlu0 %v363, 126
    %v3005 = vpop.permute.xlu0 %3004
    %v3014 = vadd.f32 %v356, %v2991
    %v3015 = vadd.f32 %v357, %v2993
    %v3016 = vadd.f32 %v358, %v2995
    %v3017 = vadd.f32 %v359, %v2997
    %v3018 = vadd.f32 %v360, %v2999
    %v3019 = vadd.f32 %v361, %v3001
    %v3020 = vadd.f32 %v362, %v3003
    %v3021 = vadd.f32 %v363, %v3005
    %3022 = vrot.lane.b32.xlu0 %v356, 124
    %v3023 = vpop.permute.xlu0 %3022
    %3024 = vrot.lane.b32.xlu0 %v357, 124
    %v3025 = vpop.permute.xlu0 %3024
    %3026 = vrot.lane.b32.xlu0 %v358, 124
    %v3027 = vpop.permute.xlu0 %3026
    %3028 = vrot.lane.b32.xlu0 %v359, 124
    %v3029 = vpop.permute.xlu0 %3028
    %3030 = vrot.lane.b32.xlu0 %v360, 124
    %v3031 = vpop.permute.xlu0 %3030
    %3032 = vrot.lane.b32.xlu0 %v361, 124
    %v3033 = vpop.permute.xlu0 %3032
    %3034 = vrot.lane.b32.xlu0 %v362, 124
    %v3035 = vpop.permute.xlu0 %3034
    %3036 = vrot.lane.b32.xlu0 %v363, 124
    %v3037 = vpop.permute.xlu0 %3036
    %v3046 = vadd.f32 %v3014, %v3023
    %v3047 = vadd.f32 %v3015, %v3025
    %v3048 = vadd.f32 %v3016, %v3027
    %v3049 = vadd.f32 %v3017, %v3029
    %v3050 = vadd.f32 %v3018, %v3031
    %v3051 = vadd.f32 %v3019, %v3033
    %v3052 = vadd.f32 %v3020, %v3035
    %v3053 = vadd.f32 %v3021, %v3037
    %v3054 = vrsqrt.pop %v2982
    %v3055 = vmul.f32 %v2982, %v3054
    %vm3056 = vcmp.eq.f32.partialorder %v2982, inf
    %v3057 = vsel %vm3056, %v2982, %v3055
    %vm3058 = vcmp.eq.f32.partialorder %v2982, 0.0
    %v3059 = vand.u32 %v2982, 2147483648
    %v3060 = vsel %vm3058, %v3059, %v3057
    %v3061 = vrsqrt.pop %v2983
    %v3062 = vmul.f32 %v2983, %v3061
    %vm3063 = vcmp.eq.f32.partialorder %v2983, inf
    %v3064 = vsel %vm3063, %v2983, %v3062
    %vm3065 = vcmp.eq.f32.partialorder %v2983, 0.0
    %v3066 = vand.u32 %v2983, 2147483648
    %v3067 = vsel %vm3065, %v3066, %v3064
    %v3068 = vrsqrt.pop %v2984
    %v3069 = vmul.f32 %v2984, %v3068
    %vm3070 = vcmp.eq.f32.partialorder %v2984, inf
    %v3071 = vsel %vm3070, %v2984, %v3069
    %vm3072 = vcmp.eq.f32.partialorder %v2984, 0.0
    %v3073 = vand.u32 %v2984, 2147483648
    %v3074 = vsel %vm3072, %v3073, %v3071
    %v3075 = vrsqrt.pop %v2985
    %v3076 = vmul.f32 %v2985, %v3075
    %vm3077 = vcmp.eq.f32.partialorder %v2985, inf
    %v3078 = vsel %vm3077, %v2985, %v3076
    %vm3079 = vcmp.eq.f32.partialorder %v2985, 0.0
    %v3080 = vand.u32 %v2985, 2147483648
    %v3081 = vsel %vm3079, %v3080, %v3078
    %v3082 = vrsqrt.pop %v2986
    %v3083 = vmul.f32 %v2986, %v3082
    %vm3084 = vcmp.eq.f32.partialorder %v2986, inf
    %v3085 = vsel %vm3084, %v2986, %v3083
    %vm3086 = vcmp.eq.f32.partialorder %v2986, 0.0
    %v3087 = vand.u32 %v2986, 2147483648
    %v3088 = vsel %vm3086, %v3087, %v3085
    %v3089 = vrsqrt.pop %v2987
    %v3090 = vmul.f32 %v2987, %v3089
    %vm3091 = vcmp.eq.f32.partialorder %v2987, inf
    %v3092 = vsel %vm3091, %v2987, %v3090
    %vm3093 = vcmp.eq.f32.partialorder %v2987, 0.0
    %v3094 = vand.u32 %v2987, 2147483648
    %v3095 = vsel %vm3093, %v3094, %v3092
    %v3096 = vrsqrt.pop %v2988
    %v3097 = vmul.f32 %v2988, %v3096
    %vm3098 = vcmp.eq.f32.partialorder %v2988, inf
    %v3099 = vsel %vm3098, %v2988, %v3097
    %vm3100 = vcmp.eq.f32.partialorder %v2988, 0.0
    %v3101 = vand.u32 %v2988, 2147483648
    %v3102 = vsel %vm3100, %v3101, %v3099
    %v3103 = vrsqrt.pop %v2989
    %v3104 = vmul.f32 %v2989, %v3103
    %vm3105 = vcmp.eq.f32.partialorder %v2989, inf
    %v3106 = vsel %vm3105, %v2989, %v3104
    %vm3107 = vcmp.eq.f32.partialorder %v2989, 0.0
    %v3108 = vand.u32 %v2989, 2147483648
    %v3109 = vsel %vm3107, %v3108, %v3106
    %v3110 = vrsqrt.pop %v3046
    %v3111 = vmul.f32 %v3046, %v3110
    %vm3112 = vcmp.eq.f32.partialorder %v3046, inf
    %v3113 = vsel %vm3112, %v3046, %v3111
    %vm3114 = vcmp.eq.f32.partialorder %v3046, 0.0
    %v3115 = vand.u32 %v3046, 2147483648
    %v3116 = vsel %vm3114, %v3115, %v3113
    %v3117 = vrsqrt.pop %v3047
    %v3118 = vmul.f32 %v3047, %v3117
    %vm3119 = vcmp.eq.f32.partialorder %v3047, inf
    %v3120 = vsel %vm3119, %v3047, %v3118
    %vm3121 = vcmp.eq.f32.partialorder %v3047, 0.0
    %v3122 = vand.u32 %v3047, 2147483648
    %v3123 = vsel %vm3121, %v3122, %v3120
    %v3124 = vrsqrt.pop %v3048
    %v3125 = vmul.f32 %v3048, %v3124
    %vm3126 = vcmp.eq.f32.partialorder %v3048, inf
    %v3127 = vsel %vm3126, %v3048, %v3125
    %vm3128 = vcmp.eq.f32.partialorder %v3048, 0.0
    %v3129 = vand.u32 %v3048, 2147483648
    %v3130 = vsel %vm3128, %v3129, %v3127
    %v3131 = vrsqrt.pop %v3049
    %v3132 = vmul.f32 %v3049, %v3131
    %vm3133 = vcmp.eq.f32.partialorder %v3049, inf
    %v3134 = vsel %vm3133, %v3049, %v3132
    %vm3135 = vcmp.eq.f32.partialorder %v3049, 0.0
    %v3136 = vand.u32 %v3049, 2147483648
    %v3137 = vsel %vm3135, %v3136, %v3134
    %v3138 = vrsqrt.pop %v3050
    %v3139 = vmul.f32 %v3050, %v3138
    %vm3140 = vcmp.eq.f32.partialorder %v3050, inf
    %v3141 = vsel %vm3140, %v3050, %v3139
    %vm3142 = vcmp.eq.f32.partialorder %v3050, 0.0
    %v3143 = vand.u32 %v3050, 2147483648
    %v3144 = vsel %vm3142, %v3143, %v3141
    %v3145 = vrsqrt.pop %v3051
    %v3146 = vmul.f32 %v3051, %v3145
    %vm3147 = vcmp.eq.f32.partialorder %v3051, inf
    %v3148 = vsel %vm3147, %v3051, %v3146
    %vm3149 = vcmp.eq.f32.partialorder %v3051, 0.0
    %v3150 = vand.u32 %v3051, 2147483648
    %v3151 = vsel %vm3149, %v3150, %v3148
    %v3152 = vrsqrt.pop %v3052
    %v3153 = vmul.f32 %v3052, %v3152
    %vm3154 = vcmp.eq.f32.partialorder %v3052, inf
    %v3155 = vsel %vm3154, %v3052, %v3153
    %vm3156 = vcmp.eq.f32.partialorder %v3052, 0.0
    %v3157 = vand.u32 %v3052, 2147483648
    %v3158 = vsel %vm3156, %v3157, %v3155
    %v3159 = vrsqrt.pop %v3053
    %v3160 = vmul.f32 %v3053, %v3159
    %vm3161 = vcmp.eq.f32.partialorder %v3053, inf
    %v3162 = vsel %vm3161, %v3053, %v3160
    %vm3163 = vcmp.eq.f32.partialorder %v3053, 0.0
    %v3164 = vand.u32 %v3053, 2147483648
    %v3165 = vsel %vm3163, %v3164, %v3162
    %vm3166 = vcmp.gt.f32.partialorder %v3060, 1e-05
    %vm3167 = vcmp.gt.f32.partialorder %v3067, 1e-05
    %vm3168 = vcmp.gt.f32.partialorder %v3074, 1e-05
    %vm3169 = vcmp.gt.f32.partialorder %v3081, 1e-05
    %vm3170 = vcmp.gt.f32.partialorder %v3088, 1e-05
    %vm3171 = vcmp.gt.f32.partialorder %v3095, 1e-05
    %vm3172 = vcmp.gt.f32.partialorder %v3102, 1e-05
    %vm3173 = vcmp.gt.f32.partialorder %v3109, 1e-05
    %vm3174 = vcmp.gt.f32.partialorder %v3116, 1e-05
    %vm3175 = vcmp.gt.f32.partialorder %v3123, 1e-05
    %vm3176 = vcmp.gt.f32.partialorder %v3130, 1e-05
    %vm3177 = vcmp.gt.f32.partialorder %v3137, 1e-05
    %vm3178 = vcmp.gt.f32.partialorder %v3144, 1e-05
    %vm3179 = vcmp.gt.f32.partialorder %v3151, 1e-05
    %vm3180 = vcmp.gt.f32.partialorder %v3158, 1e-05
    %vm3181 = vcmp.gt.f32.partialorder %v3165, 1e-05
    %v3182 = vsel %vm3166, %v2982, 1.0
    %v3183 = vsel %vm3167, %v2983, 1.0
    %v3184 = vsel %vm3168, %v2984, 1.0
    %v3185 = vsel %vm3169, %v2985, 1.0
    %v3186 = vsel %vm3170, %v2986, 1.0
    %v3187 = vsel %vm3171, %v2987, 1.0
    %v3188 = vsel %vm3172, %v2988, 1.0
    %v3189 = vsel %vm3173, %v2989, 1.0
    %v3190 = vrsqrt.pop %v3182
    %v3191 = vrsqrt.pop %v3183
    %v3192 = vrsqrt.pop %v3184
    %v3193 = vrsqrt.pop %v3185
    %v3194 = vrsqrt.pop %v3186
    %v3195 = vrsqrt.pop %v3187
    %v3196 = vrsqrt.pop %v3188
    %v3197 = vrsqrt.pop %v3189
    %v3198 = vsel %vm3174, %v3046, 1.0
    %v3199 = vsel %vm3175, %v3047, 1.0
    %v3200 = vsel %vm3176, %v3048, 1.0
    %v3201 = vsel %vm3177, %v3049, 1.0
    %v3202 = vsel %vm3178, %v3050, 1.0
    %v3203 = vsel %vm3179, %v3051, 1.0
    %v3204 = vsel %vm3180, %v3052, 1.0
    %v3205 = vsel %vm3181, %v3053, 1.0
    %v3206 = vrsqrt.pop %v3198
    %v3207 = vrsqrt.pop %v3199
    %v3208 = vrsqrt.pop %v3200
    %v3209 = vrsqrt.pop %v3201
    %v3210 = vrsqrt.pop %v3202
    %v3211 = vrsqrt.pop %v3203
    %v3212 = vrsqrt.pop %v3204
    %v3213 = vrsqrt.pop %v3205
    %v3214 = vmul.f32 %v2488, %v3190
    %v3215 = vmul.f32 %v2493, %v3191
    %v3216 = vmul.f32 %v2498, %v3192
    %v3217 = vmul.f32 %v2503, %v3193
    %v3218 = vmul.f32 %v2508, %v3194
    %v3219 = vmul.f32 %v2513, %v3195
    %v3220 = vmul.f32 %v2518, %v3196
    %v3221 = vmul.f32 %v2523, %v3197
    %v3222 = vsel %vm3166, %v3214, 1.0
    %v3223 = vsel %vm3167, %v3215, 1.0
    %v3224 = vsel %vm3168, %v3216, 1.0
    %v3225 = vsel %vm3169, %v3217, 1.0
    %v3226 = vsel %vm3170, %v3218, 1.0
    %v3227 = vsel %vm3171, %v3219, 1.0
    %v3228 = vsel %vm3172, %v3220, 1.0
    %v3229 = vsel %vm3173, %v3221, 1.0
    %3238 = vrot.lane.b32.xlu0 %v3190, 2
    %v3239 = vpop.permute.xlu0 %3238
    %3240 = vrot.lane.b32.xlu0 %v3191, 2
    %v3241 = vpop.permute.xlu0 %3240
    %3242 = vrot.lane.b32.xlu0 %v3192, 2
    %v3243 = vpop.permute.xlu0 %3242
    %3244 = vrot.lane.b32.xlu0 %v3193, 2
    %v3245 = vpop.permute.xlu0 %3244
    %3246 = vrot.lane.b32.xlu0 %v3194, 2
    %v3247 = vpop.permute.xlu0 %3246
    %3248 = vrot.lane.b32.xlu0 %v3195, 2
    %v3249 = vpop.permute.xlu0 %3248
    %3250 = vrot.lane.b32.xlu0 %v3196, 2
    %v3251 = vpop.permute.xlu0 %3250
    %3252 = vrot.lane.b32.xlu0 %v3197, 2
    %v3253 = vpop.permute.xlu0 %3252
    %v3262 = vmul.f32 %v2488, %v3239
    %v3263 = vmul.f32 %v2493, %v3241
    %v3264 = vmul.f32 %v2498, %v3243
    %v3265 = vmul.f32 %v2503, %v3245
    %v3266 = vmul.f32 %v2508, %v3247
    %v3267 = vmul.f32 %v2513, %v3249
    %v3268 = vmul.f32 %v2518, %v3251
    %v3269 = vmul.f32 %v2523, %v3253
    %3278 = vrot.lane.b32.xlu0 %v3262, 126
    %v3279 = vpop.permute.xlu0 %3278
    %3280 = vrot.lane.b32.xlu0 %v3263, 126
    %v3281 = vpop.permute.xlu0 %3280
    %3282 = vrot.lane.b32.xlu0 %v3264, 126
    %v3283 = vpop.permute.xlu0 %3282
    %3284 = vrot.lane.b32.xlu0 %v3265, 126
    %v3285 = vpop.permute.xlu0 %3284
    %3286 = vrot.lane.b32.xlu0 %v3266, 126
    %v3287 = vpop.permute.xlu0 %3286
    %3288 = vrot.lane.b32.xlu0 %v3267, 126
    %v3289 = vpop.permute.xlu0 %3288
    %3290 = vrot.lane.b32.xlu0 %v3268, 126
    %v3291 = vpop.permute.xlu0 %3290
    %3292 = vrot.lane.b32.xlu0 %v3269, 126
    %v3293 = vpop.permute.xlu0 %3292
    %v3302 = vsel %vm3166, %v3279, 0.0
    %v3303 = vsel %vm3167, %v3281, 0.0
    %v3304 = vsel %vm3168, %v3283, 0.0
    %v3305 = vsel %vm3169, %v3285, 0.0
    %v3306 = vsel %vm3170, %v3287, 0.0
    %v3307 = vsel %vm3171, %v3289, 0.0
    %v3308 = vsel %vm3172, %v3291, 0.0
    %v3309 = vsel %vm3173, %v3293, 0.0
    %3310 = vrot.lane.b32.xlu0 %v3190, 4
    %v3311 = vpop.permute.xlu0 %3310
    %3312 = vrot.lane.b32.xlu0 %v3191, 4
    %v3313 = vpop.permute.xlu0 %3312
    %3314 = vrot.lane.b32.xlu0 %v3192, 4
    %v3315 = vpop.permute.xlu0 %3314
    %3316 = vrot.lane.b32.xlu0 %v3193, 4
    %v3317 = vpop.permute.xlu0 %3316
    %3318 = vrot.lane.b32.xlu0 %v3194, 4
    %v3319 = vpop.permute.xlu0 %3318
    %3320 = vrot.lane.b32.xlu0 %v3195, 4
    %v3321 = vpop.permute.xlu0 %3320
    %3322 = vrot.lane.b32.xlu0 %v3196, 4
    %v3323 = vpop.permute.xlu0 %3322
    %3324 = vrot.lane.b32.xlu0 %v3197, 4
    %v3325 = vpop.permute.xlu0 %3324
    %v3334 = vmul.f32 %v2488, %v3311
    %v3335 = vmul.f32 %v2493, %v3313
    %v3336 = vmul.f32 %v2498, %v3315
    %v3337 = vmul.f32 %v2503, %v3317
    %v3338 = vmul.f32 %v2508, %v3319
    %v3339 = vmul.f32 %v2513, %v3321
    %v3340 = vmul.f32 %v2518, %v3323
    %v3341 = vmul.f32 %v2523, %v3325
    %3350 = vrot.lane.b32.xlu0 %v3334, 124
    %v3351 = vpop.permute.xlu0 %3350
    %3352 = vrot.lane.b32.xlu0 %v3335, 124
    %v3353 = vpop.permute.xlu0 %3352
    %3354 = vrot.lane.b32.xlu0 %v3336, 124
    %v3355 = vpop.permute.xlu0 %3354
    %3356 = vrot.lane.b32.xlu0 %v3337, 124
    %v3357 = vpop.permute.xlu0 %3356
    %3358 = vrot.lane.b32.xlu0 %v3338, 124
    %v3359 = vpop.permute.xlu0 %3358
    %3360 = vrot.lane.b32.xlu0 %v3339, 124
    %v3361 = vpop.permute.xlu0 %3360
    %3362 = vrot.lane.b32.xlu0 %v3340, 124
    %v3363 = vpop.permute.xlu0 %3362
    %3364 = vrot.lane.b32.xlu0 %v3341, 124
    %v3365 = vpop.permute.xlu0 %3364
    %v3374 = vsel %vm3166, %v3351, 0.0
    %v3375 = vsel %vm3167, %v3353, 0.0
    %v3376 = vsel %vm3168, %v3355, 0.0
    %v3377 = vsel %vm3169, %v3357, 0.0
    %v3378 = vsel %vm3170, %v3359, 0.0
    %v3379 = vsel %vm3171, %v3361, 0.0
    %v3380 = vsel %vm3172, %v3363, 0.0
    %v3381 = vsel %vm3173, %v3365, 0.0
    %v3382 = vmul.f32 %v29, %v3206
    %v3383 = vmul.f32 %v30, %v3207
    %v3384 = vmul.f32 %v31, %v3208
    %v3385 = vmul.f32 %v32, %v3209
    %v3386 = vmul.f32 %v33, %v3210
    %v3387 = vmul.f32 %v34, %v3211
    %v3388 = vmul.f32 %v35, %v3212
    %v3389 = vmul.f32 %v36, %v3213
    %v3390 = vsel %vm3174, %v3382, 1.0
    %v3391 = vsel %vm3175, %v3383, 1.0
    %v3392 = vsel %vm3176, %v3384, 1.0
    %v3393 = vsel %vm3177, %v3385, 1.0
    %v3394 = vsel %vm3178, %v3386, 1.0
    %v3395 = vsel %vm3179, %v3387, 1.0
    %v3396 = vsel %vm3180, %v3388, 1.0
    %v3397 = vsel %vm3181, %v3389, 1.0
    %3406 = vrot.lane.b32.xlu0 %v3206, 2
    %v3407 = vpop.permute.xlu0 %3406
    %3408 = vrot.lane.b32.xlu0 %v3207, 2
    %v3409 = vpop.permute.xlu0 %3408
    %3410 = vrot.lane.b32.xlu0 %v3208, 2
    %v3411 = vpop.permute.xlu0 %3410
    %3412 = vrot.lane.b32.xlu0 %v3209, 2
    %v3413 = vpop.permute.xlu0 %3412
    %3414 = vrot.lane.b32.xlu0 %v3210, 2
    %v3415 = vpop.permute.xlu0 %3414
    %3416 = vrot.lane.b32.xlu0 %v3211, 2
    %v3417 = vpop.permute.xlu0 %3416
    %3418 = vrot.lane.b32.xlu0 %v3212, 2
    %v3419 = vpop.permute.xlu0 %3418
    %3420 = vrot.lane.b32.xlu0 %v3213, 2
    %v3421 = vpop.permute.xlu0 %3420
    %v3430 = vmul.f32 %v29, %v3407
    %v3431 = vmul.f32 %v30, %v3409
    %v3432 = vmul.f32 %v31, %v3411
    %v3433 = vmul.f32 %v32, %v3413
    %v3434 = vmul.f32 %v33, %v3415
    %v3435 = vmul.f32 %v34, %v3417
    %v3436 = vmul.f32 %v35, %v3419
    %v3437 = vmul.f32 %v36, %v3421
    %3446 = vrot.lane.b32.xlu0 %v3430, 126
    %v3447 = vpop.permute.xlu0 %3446
    %3448 = vrot.lane.b32.xlu0 %v3431, 126
    %v3449 = vpop.permute.xlu0 %3448
    %3450 = vrot.lane.b32.xlu0 %v3432, 126
    %v3451 = vpop.permute.xlu0 %3450
    %3452 = vrot.lane.b32.xlu0 %v3433, 126
    %v3453 = vpop.permute.xlu0 %3452
    %3454 = vrot.lane.b32.xlu0 %v3434, 126
    %v3455 = vpop.permute.xlu0 %3454
    %3456 = vrot.lane.b32.xlu0 %v3435, 126
    %v3457 = vpop.permute.xlu0 %3456
    %3458 = vrot.lane.b32.xlu0 %v3436, 126
    %v3459 = vpop.permute.xlu0 %3458
    %3460 = vrot.lane.b32.xlu0 %v3437, 126
    %v3461 = vpop.permute.xlu0 %3460
    %v3470 = vsel %vm3174, %v3447, 0.0
    %v3471 = vsel %vm3175, %v3449, 0.0
    %v3472 = vsel %vm3176, %v3451, 0.0
    %v3473 = vsel %vm3177, %v3453, 0.0
    %v3474 = vsel %vm3178, %v3455, 0.0
    %v3475 = vsel %vm3179, %v3457, 0.0
    %v3476 = vsel %vm3180, %v3459, 0.0
    %v3477 = vsel %vm3181, %v3461, 0.0
    %3478 = vrot.lane.b32.xlu0 %v3206, 4
    %v3479 = vpop.permute.xlu0 %3478
    %3480 = vrot.lane.b32.xlu0 %v3207, 4
    %v3481 = vpop.permute.xlu0 %3480
    %3482 = vrot.lane.b32.xlu0 %v3208, 4
    %v3483 = vpop.permute.xlu0 %3482
    %3484 = vrot.lane.b32.xlu0 %v3209, 4
    %v3485 = vpop.permute.xlu0 %3484
    %3486 = vrot.lane.b32.xlu0 %v3210, 4
    %v3487 = vpop.permute.xlu0 %3486
    %3488 = vrot.lane.b32.xlu0 %v3211, 4
    %v3489 = vpop.permute.xlu0 %3488
    %3490 = vrot.lane.b32.xlu0 %v3212, 4
    %v3491 = vpop.permute.xlu0 %3490
    %3492 = vrot.lane.b32.xlu0 %v3213, 4
    %v3493 = vpop.permute.xlu0 %3492
    %v3502 = vmul.f32 %v29, %v3479
    %v3503 = vmul.f32 %v30, %v3481
    %v3504 = vmul.f32 %v31, %v3483
    %v3505 = vmul.f32 %v32, %v3485
    %v3506 = vmul.f32 %v33, %v3487
    %v3507 = vmul.f32 %v34, %v3489
    %v3508 = vmul.f32 %v35, %v3491
    %v3509 = vmul.f32 %v36, %v3493
    %3518 = vrot.lane.b32.xlu0 %v3502, 124
    %v3519 = vpop.permute.xlu0 %3518
    %3520 = vrot.lane.b32.xlu0 %v3503, 124
    %v3521 = vpop.permute.xlu0 %3520
    %3522 = vrot.lane.b32.xlu0 %v3504, 124
    %v3523 = vpop.permute.xlu0 %3522
    %3524 = vrot.lane.b32.xlu0 %v3505, 124
    %v3525 = vpop.permute.xlu0 %3524
    %3526 = vrot.lane.b32.xlu0 %v3506, 124
    %v3527 = vpop.permute.xlu0 %3526
    %3528 = vrot.lane.b32.xlu0 %v3507, 124
    %v3529 = vpop.permute.xlu0 %3528
    %3530 = vrot.lane.b32.xlu0 %v3508, 124
    %v3531 = vpop.permute.xlu0 %3530
    %3532 = vrot.lane.b32.xlu0 %v3509, 124
    %v3533 = vpop.permute.xlu0 %3532
    %v3542 = vsel %vm3174, %v3519, 0.0
    %v3543 = vsel %vm3175, %v3521, 0.0
    %v3544 = vsel %vm3176, %v3523, 0.0
    %v3545 = vsel %vm3177, %v3525, 0.0
    %v3546 = vsel %vm3178, %v3527, 0.0
    %v3547 = vsel %vm3179, %v3529, 0.0
    %v3548 = vsel %vm3180, %v3531, 0.0
    %v3549 = vsel %vm3181, %v3533, 0.0
    %3558 = vrot.lane.b32.xlu0 %v3390, 90
    %v3559 = vpop.permute.xlu0 %3558
    %3560 = vrot.lane.b32.xlu0 %v3391, 90
    %v3561 = vpop.permute.xlu0 %3560
    %3562 = vrot.lane.b32.xlu0 %v3392, 90
    %v3563 = vpop.permute.xlu0 %3562
    %3564 = vrot.lane.b32.xlu0 %v3393, 90
    %v3565 = vpop.permute.xlu0 %3564
    %3566 = vrot.lane.b32.xlu0 %v3394, 90
    %v3567 = vpop.permute.xlu0 %3566
    %3568 = vrot.lane.b32.xlu0 %v3395, 90
    %v3569 = vpop.permute.xlu0 %3568
    %3570 = vrot.lane.b32.xlu0 %v3396, 90
    %v3571 = vpop.permute.xlu0 %3570
    %3572 = vrot.lane.b32.xlu0 %v3397, 90
    %v3573 = vpop.permute.xlu0 %3572
    %v3582 = vmul.f32 %v3222, %v3559
    %v3583 = vmul.f32 %v3223, %v3561
    %v3584 = vmul.f32 %v3224, %v3563
    %v3585 = vmul.f32 %v3225, %v3565
    %v3586 = vmul.f32 %v3226, %v3567
    %v3587 = vmul.f32 %v3227, %v3569
    %v3588 = vmul.f32 %v3228, %v3571
    %v3589 = vmul.f32 %v3229, %v3573
    %3598 = vrot.lane.b32.xlu0 %v3470, 90
    %v3599 = vpop.permute.xlu0 %3598
    %3600 = vrot.lane.b32.xlu0 %v3471, 90
    %v3601 = vpop.permute.xlu0 %3600
    %3602 = vrot.lane.b32.xlu0 %v3472, 90
    %v3603 = vpop.permute.xlu0 %3602
    %3604 = vrot.lane.b32.xlu0 %v3473, 90
    %v3605 = vpop.permute.xlu0 %3604
    %3606 = vrot.lane.b32.xlu0 %v3474, 90
    %v3607 = vpop.permute.xlu0 %3606
    %3608 = vrot.lane.b32.xlu0 %v3475, 90
    %v3609 = vpop.permute.xlu0 %3608
    %3610 = vrot.lane.b32.xlu0 %v3476, 90
    %v3611 = vpop.permute.xlu0 %3610
    %3612 = vrot.lane.b32.xlu0 %v3477, 90
    %v3613 = vpop.permute.xlu0 %3612
    %v3622 = vmul.f32 %v3302, %v3599
    %v3623 = vmul.f32 %v3303, %v3601
    %v3624 = vmul.f32 %v3304, %v3603
    %v3625 = vmul.f32 %v3305, %v3605
    %v3626 = vmul.f32 %v3306, %v3607
    %v3627 = vmul.f32 %v3307, %v3609
    %v3628 = vmul.f32 %v3308, %v3611
    %v3629 = vmul.f32 %v3309, %v3613
    %v3630 = vadd.f32 %v3582, %v3622
    %v3631 = vadd.f32 %v3583, %v3623
    %v3632 = vadd.f32 %v3584, %v3624
    %v3633 = vadd.f32 %v3585, %v3625
    %v3634 = vadd.f32 %v3586, %v3626
    %v3635 = vadd.f32 %v3587, %v3627
    %v3636 = vadd.f32 %v3588, %v3628
    %v3637 = vadd.f32 %v3589, %v3629
    %3646 = vrot.lane.b32.xlu0 %v3542, 90
    %v3647 = vpop.permute.xlu0 %3646
    %3648 = vrot.lane.b32.xlu0 %v3543, 90
    %v3649 = vpop.permute.xlu0 %3648
    %3650 = vrot.lane.b32.xlu0 %v3544, 90
    %v3651 = vpop.permute.xlu0 %3650
    %3652 = vrot.lane.b32.xlu0 %v3545, 90
    %v3653 = vpop.permute.xlu0 %3652
    %3654 = vrot.lane.b32.xlu0 %v3546, 90
    %v3655 = vpop.permute.xlu0 %3654
    %3656 = vrot.lane.b32.xlu0 %v3547, 90
    %v3657 = vpop.permute.xlu0 %3656
    %3658 = vrot.lane.b32.xlu0 %v3548, 90
    %v3659 = vpop.permute.xlu0 %3658
    %3660 = vrot.lane.b32.xlu0 %v3549, 90
    %v3661 = vpop.permute.xlu0 %3660
    %v3670 = vmul.f32 %v3374, %v3647
    %v3671 = vmul.f32 %v3375, %v3649
    %v3672 = vmul.f32 %v3376, %v3651
    %v3673 = vmul.f32 %v3377, %v3653
    %v3674 = vmul.f32 %v3378, %v3655
    %v3675 = vmul.f32 %v3379, %v3657
    %v3676 = vmul.f32 %v3380, %v3659
    %v3677 = vmul.f32 %v3381, %v3661
    %v3678 = vadd.f32 %v3630, %v3670
    %v3679 = vadd.f32 %v3631, %v3671
    %v3680 = vadd.f32 %v3632, %v3672
    %v3681 = vadd.f32 %v3633, %v3673
    %v3682 = vadd.f32 %v3634, %v3674
    %v3683 = vadd.f32 %v3635, %v3675
    %v3684 = vadd.f32 %v3636, %v3676
    %v3685 = vadd.f32 %v3637, %v3677
    %v3686 = vsub.f32 1.0, %v3678
    %v3687 = vsub.f32 1.0, %v3679
    %v3688 = vsub.f32 1.0, %v3680
    %v3689 = vsub.f32 1.0, %v3681
    %v3690 = vsub.f32 1.0, %v3682
    %v3691 = vsub.f32 1.0, %v3683
    %v3692 = vsub.f32 1.0, %v3684
    %v3693 = vsub.f32 1.0, %v3685
    %v3694 = vand.u32 2147483647, %v3686
    %v3695 = vand.u32 2147483647, %v3687
    %v3696 = vand.u32 2147483647, %v3688
    %v3697 = vand.u32 2147483647, %v3689
    %v3698 = vand.u32 2147483647, %v3690
    %v3699 = vand.u32 2147483647, %v3691
    %v3700 = vand.u32 2147483647, %v3692
    %v3701 = vand.u32 2147483647, %v3693
    %3710 = vrot.lane.b32.xlu0 %v3116, 90
    %v3711 = vpop.permute.xlu0 %3710
    %3712 = vrot.lane.b32.xlu0 %v3123, 90
    %v3713 = vpop.permute.xlu0 %3712
    %3714 = vrot.lane.b32.xlu0 %v3130, 90
    %v3715 = vpop.permute.xlu0 %3714
    %3716 = vrot.lane.b32.xlu0 %v3137, 90
    %v3717 = vpop.permute.xlu0 %3716
    %3718 = vrot.lane.b32.xlu0 %v3144, 90
    %v3719 = vpop.permute.xlu0 %3718
    %3720 = vrot.lane.b32.xlu0 %v3151, 90
    %v3721 = vpop.permute.xlu0 %3720
    %3722 = vrot.lane.b32.xlu0 %v3158, 90
    %v3723 = vpop.permute.xlu0 %3722
    %3724 = vrot.lane.b32.xlu0 %v3165, 90
    %v3725 = vpop.permute.xlu0 %3724
    %v3734 = vsub.f32 %v3060, %v3711
    %v3735 = vsub.f32 %v3067, %v3713
    %v3736 = vsub.f32 %v3074, %v3715
    %v3737 = vsub.f32 %v3081, %v3717
    %v3738 = vsub.f32 %v3088, %v3719
    %v3739 = vsub.f32 %v3095, %v3721
    %v3740 = vsub.f32 %v3102, %v3723
    %v3741 = vsub.f32 %v3109, %v3725
    %v3742 = vand.u32 2147483647, %v3734
    %v3743 = vand.u32 2147483647, %v3735
    %v3744 = vand.u32 2147483647, %v3736
    %v3745 = vand.u32 2147483647, %v3737
    %v3746 = vand.u32 2147483647, %v3738
    %v3747 = vand.u32 2147483647, %v3739
    %v3748 = vand.u32 2147483647, %v3740
    %v3749 = vand.u32 2147483647, %v3741
    %3750 = vset.pattern.permute.xlu0 50
    %3751 = vperm.xlu0 %3750, %v29
    %v3752 = vpop.permute.xlu0 %3751
    %3754 = vset.pattern.permute.xlu0 50
    %3755 = vperm.xlu0 %3754, %v30
    %v3756 = vpop.permute.xlu0 %3755
    %3758 = vset.pattern.permute.xlu0 50
    %3759 = vperm.xlu0 %3758, %v31
    %v3760 = vpop.permute.xlu0 %3759
    %3762 = vset.pattern.permute.xlu0 50
    %3763 = vperm.xlu0 %3762, %v32
    %v3764 = vpop.permute.xlu0 %3763
    %3766 = vset.pattern.permute.xlu0 50
    %3767 = vperm.xlu0 %3766, %v33
    %v3768 = vpop.permute.xlu0 %3767
    %3770 = vset.pattern.permute.xlu0 50
    %3771 = vperm.xlu0 %3770, %v34
    %v3772 = vpop.permute.xlu0 %3771
    %3774 = vset.pattern.permute.xlu0 50
    %3775 = vperm.xlu0 %3774, %v35
    %v3776 = vpop.permute.xlu0 %3775
    %3778 = vset.pattern.permute.xlu0 50
    %3779 = vperm.xlu0 %3778, %v36
    %v3780 = vpop.permute.xlu0 %3779
    %v3782 = vmul.f32 %v3752, %v29
    %v3783 = vmul.f32 %v3756, %v30
    %v3784 = vmul.f32 %v3760, %v31
    %v3785 = vmul.f32 %v3764, %v32
    %v3786 = vmul.f32 %v3768, %v33
    %v3787 = vmul.f32 %v3772, %v34
    %v3788 = vmul.f32 %v3776, %v35
    %v3789 = vmul.f32 %v3780, %v36
    %v3790 = vlaneseq
    %v3791 = vand.u32 %v3790, 127
    %vm3792 = vcmp.eq.s32.totalorder %v3791, 0
    %v3793 = vsel %vm3792, 1, 0
    %vm3794 = vcmp.eq.s32.totalorder %v3793, 1
    %v3795 = vsel %vm3794, %v3752, 0.0
    %v3796 = vsel %vm3794, %v3756, 0.0
    %v3797 = vsel %vm3794, %v3760, 0.0
    %v3798 = vsel %vm3794, %v3764, 0.0
    %v3799 = vsel %vm3794, %v3768, 0.0
    %v3800 = vsel %vm3794, %v3772, 0.0
    %v3801 = vsel %vm3794, %v3776, 0.0
    %v3802 = vsel %vm3794, %v3780, 0.0
    %v3803 = vmul.f32 %v3752, %v2710
    %v3804 = vmul.f32 %v3756, %v2711
    %v3805 = vmul.f32 %v3760, %v2712
    %v3806 = vmul.f32 %v3764, %v2713
    %v3807 = vmul.f32 %v3768, %v2714
    %v3808 = vmul.f32 %v3772, %v2715
    %v3809 = vmul.f32 %v3776, %v2716
    %v3810 = vmul.f32 %v3780, %v2717
    %3819 = vrot.lane.b32.xlu0 %v3803, 127
    %v3820 = vpop.permute.xlu0 %3819
    %3821 = vrot.lane.b32.xlu0 %v3804, 127
    %v3822 = vpop.permute.xlu0 %3821
    %3823 = vrot.lane.b32.xlu0 %v3805, 127
    %v3824 = vpop.permute.xlu0 %3823
    %3825 = vrot.lane.b32.xlu0 %v3806, 127
    %v3826 = vpop.permute.xlu0 %3825
    %3827 = vrot.lane.b32.xlu0 %v3807, 127
    %v3828 = vpop.permute.xlu0 %3827
    %3829 = vrot.lane.b32.xlu0 %v3808, 127
    %v3830 = vpop.permute.xlu0 %3829
    %3831 = vrot.lane.b32.xlu0 %v3809, 127
    %v3832 = vpop.permute.xlu0 %3831
    %3833 = vrot.lane.b32.xlu0 %v3810, 127
    %v3834 = vpop.permute.xlu0 %3833
    %v3843 = vadd.f32 %v3803, %v3820
    %v3844 = vadd.f32 %v3804, %v3822
    %v3845 = vadd.f32 %v3805, %v3824
    %v3846 = vadd.f32 %v3806, %v3826
    %v3847 = vadd.f32 %v3807, %v3828
    %v3848 = vadd.f32 %v3808, %v3830
    %v3849 = vadd.f32 %v3809, %v3832
    %v3850 = vadd.f32 %v3810, %v3834
    %vm3851 = vcmp.eq.s32.totalorder %v3791, 1
    %v3852 = vsel %vm3851, 1, 0
    %vm3853 = vcmp.eq.s32.totalorder %v3852, 1
    %3855 = vset.pattern.permute.xlu0 48
    %3856 = vperm.xlu0 %3855, %v3843
    %v3857 = vpop.permute.xlu0 %3856
    %3860 = vset.pattern.permute.xlu0 48
    %3861 = vperm.xlu0 %3860, %v3844
    %v3862 = vpop.permute.xlu0 %3861
    %3865 = vset.pattern.permute.xlu0 48
    %3866 = vperm.xlu0 %3865, %v3845
    %v3867 = vpop.permute.xlu0 %3866
    %3870 = vset.pattern.permute.xlu0 48
    %3871 = vperm.xlu0 %3870, %v3846
    %v3872 = vpop.permute.xlu0 %3871
    %3875 = vset.pattern.permute.xlu0 48
    %3876 = vperm.xlu0 %3875, %v3847
    %v3877 = vpop.permute.xlu0 %3876
    %3880 = vset.pattern.permute.xlu0 48
    %3881 = vperm.xlu0 %3880, %v3848
    %v3882 = vpop.permute.xlu0 %3881
    %3885 = vset.pattern.permute.xlu0 48
    %3886 = vperm.xlu0 %3885, %v3849
    %v3887 = vpop.permute.xlu0 %3886
    %3890 = vset.pattern.permute.xlu0 48
    %3891 = vperm.xlu0 %3890, %v3850
    %v3892 = vpop.permute.xlu0 %3891
    %v3894 = vsel %vm3853, %v3857, 0.0
    %v3895 = vsel %vm3853, %v3862, 0.0
    %v3896 = vsel %vm3853, %v3867, 0.0
    %v3897 = vsel %vm3853, %v3872, 0.0
    %v3898 = vsel %vm3853, %v3877, 0.0
    %v3899 = vsel %vm3853, %v3882, 0.0
    %v3900 = vsel %vm3853, %v3887, 0.0
    %v3901 = vsel %vm3853, %v3892, 0.0
    %v3902 = vadd.f32 %v3795, %v3894
    %v3903 = vadd.f32 %v3796, %v3895
    %v3904 = vadd.f32 %v3797, %v3896
    %v3905 = vadd.f32 %v3798, %v3897
    %v3906 = vadd.f32 %v3799, %v3898
    %v3907 = vadd.f32 %v3800, %v3899
    %v3908 = vadd.f32 %v3801, %v3900
    %v3909 = vadd.f32 %v3802, %v3901
    %3918 = vrot.lane.b32.xlu0 %v3782, 127
    %v3919 = vpop.permute.xlu0 %3918
    %3920 = vrot.lane.b32.xlu0 %v3783, 127
    %v3921 = vpop.permute.xlu0 %3920
    %3922 = vrot.lane.b32.xlu0 %v3784, 127
    %v3923 = vpop.permute.xlu0 %3922
    %3924 = vrot.lane.b32.xlu0 %v3785, 127
    %v3925 = vpop.permute.xlu0 %3924
    %3926 = vrot.lane.b32.xlu0 %v3786, 127
    %v3927 = vpop.permute.xlu0 %3926
    %3928 = vrot.lane.b32.xlu0 %v3787, 127
    %v3929 = vpop.permute.xlu0 %3928
    %3930 = vrot.lane.b32.xlu0 %v3788, 127
    %v3931 = vpop.permute.xlu0 %3930
    %3932 = vrot.lane.b32.xlu0 %v3789, 127
    %v3933 = vpop.permute.xlu0 %3932
    %v3942 = vadd.f32 %v3782, %v3919
    %v3943 = vadd.f32 %v3783, %v3921
    %v3944 = vadd.f32 %v3784, %v3923
    %v3945 = vadd.f32 %v3785, %v3925
    %v3946 = vadd.f32 %v3786, %v3927
    %v3947 = vadd.f32 %v3787, %v3929
    %v3948 = vadd.f32 %v3788, %v3931
    %v3949 = vadd.f32 %v3789, %v3933
    %vm3950 = vcmp.eq.s32.totalorder %v3791, 2
    %v3951 = vsel %vm3950, 1, 0
    %vm3952 = vcmp.eq.s32.totalorder %v3951, 1
    %3954 = vset.pattern.permute.xlu0 46
    %3955 = vperm.xlu0 %3954, %v3942
    %v3956 = vpop.permute.xlu0 %3955
    %3959 = vset.pattern.permute.xlu0 46
    %3960 = vperm.xlu0 %3959, %v3943
    %v3961 = vpop.permute.xlu0 %3960
    %3964 = vset.pattern.permute.xlu0 46
    %3965 = vperm.xlu0 %3964, %v3944
    %v3966 = vpop.permute.xlu0 %3965
    %3969 = vset.pattern.permute.xlu0 46
    %3970 = vperm.xlu0 %3969, %v3945
    %v3971 = vpop.permute.xlu0 %3970
    %3974 = vset.pattern.permute.xlu0 46
    %3975 = vperm.xlu0 %3974, %v3946
    %v3976 = vpop.permute.xlu0 %3975
    %3979 = vset.pattern.permute.xlu0 46
    %3980 = vperm.xlu0 %3979, %v3947
    %v3981 = vpop.permute.xlu0 %3980
    %3984 = vset.pattern.permute.xlu0 46
    %3985 = vperm.xlu0 %3984, %v3948
    %v3986 = vpop.permute.xlu0 %3985
    %3989 = vset.pattern.permute.xlu0 46
    %3990 = vperm.xlu0 %3989, %v3949
    %v3991 = vpop.permute.xlu0 %3990
    %v3993 = vsel %vm3952, %v3956, 0.0
    %v3994 = vsel %vm3952, %v3961, 0.0
    %v3995 = vsel %vm3952, %v3966, 0.0
    %v3996 = vsel %vm3952, %v3971, 0.0
    %v3997 = vsel %vm3952, %v3976, 0.0
    %v3998 = vsel %vm3952, %v3981, 0.0
    %v3999 = vsel %vm3952, %v3986, 0.0
    %v4000 = vsel %vm3952, %v3991, 0.0
    %v4001 = vadd.f32 %v3902, %v3993
    %v4002 = vadd.f32 %v3903, %v3994
    %v4003 = vadd.f32 %v3904, %v3995
    %v4004 = vadd.f32 %v3905, %v3996
    %v4005 = vadd.f32 %v3906, %v3997
    %v4006 = vadd.f32 %v3907, %v3998
    %v4007 = vadd.f32 %v3908, %v3999
    %v4008 = vadd.f32 %v3909, %v4000
    %4017 = vrot.lane.b32.xlu0 %v2894, 44
    %v4018 = vpop.permute.xlu0 %4017
    %4019 = vrot.lane.b32.xlu0 %v2895, 44
    %v4020 = vpop.permute.xlu0 %4019
    %4021 = vrot.lane.b32.xlu0 %v2896, 44
    %v4022 = vpop.permute.xlu0 %4021
    %4023 = vrot.lane.b32.xlu0 %v2897, 44
    %v4024 = vpop.permute.xlu0 %4023
    %4025 = vrot.lane.b32.xlu0 %v2898, 44
    %v4026 = vpop.permute.xlu0 %4025
    %4027 = vrot.lane.b32.xlu0 %v2899, 44
    %v4028 = vpop.permute.xlu0 %4027
    %4029 = vrot.lane.b32.xlu0 %v2900, 44
    %v4030 = vpop.permute.xlu0 %4029
    %4031 = vrot.lane.b32.xlu0 %v2901, 44
    %v4032 = vpop.permute.xlu0 %4031
    %v4041 = vmul.f32 %v3782, %v4018
    %v4042 = vmul.f32 %v3783, %v4020
    %v4043 = vmul.f32 %v3784, %v4022
    %v4044 = vmul.f32 %v3785, %v4024
    %v4045 = vmul.f32 %v3786, %v4026
    %v4046 = vmul.f32 %v3787, %v4028
    %v4047 = vmul.f32 %v3788, %v4030
    %v4048 = vmul.f32 %v3789, %v4032
    %4057 = vrot.lane.b32.xlu0 %v4041, 127
    %v4058 = vpop.permute.xlu0 %4057
    %4059 = vrot.lane.b32.xlu0 %v4042, 127
    %v4060 = vpop.permute.xlu0 %4059
    %4061 = vrot.lane.b32.xlu0 %v4043, 127
    %v4062 = vpop.permute.xlu0 %4061
    %4063 = vrot.lane.b32.xlu0 %v4044, 127
    %v4064 = vpop.permute.xlu0 %4063
    %4065 = vrot.lane.b32.xlu0 %v4045, 127
    %v4066 = vpop.permute.xlu0 %4065
    %4067 = vrot.lane.b32.xlu0 %v4046, 127
    %v4068 = vpop.permute.xlu0 %4067
    %4069 = vrot.lane.b32.xlu0 %v4047, 127
    %v4070 = vpop.permute.xlu0 %4069
    %4071 = vrot.lane.b32.xlu0 %v4048, 127
    %v4072 = vpop.permute.xlu0 %4071
    %v4081 = vadd.f32 %v4041, %v4058
    %v4082 = vadd.f32 %v4042, %v4060
    %v4083 = vadd.f32 %v4043, %v4062
    %v4084 = vadd.f32 %v4044, %v4064
    %v4085 = vadd.f32 %v4045, %v4066
    %v4086 = vadd.f32 %v4046, %v4068
    %v4087 = vadd.f32 %v4047, %v4070
    %v4088 = vadd.f32 %v4048, %v4072
    %vm4089 = vcmp.eq.s32.totalorder %v3791, 3
    %v4090 = vsel %vm4089, 1, 0
    %vm4091 = vcmp.eq.s32.totalorder %v4090, 1
    %4093 = vset.pattern.permute.xlu0 46
    %4094 = vperm.xlu0 %4093, %v4081
    %v4095 = vpop.permute.xlu0 %4094
    %4098 = vset.pattern.permute.xlu0 46
    %4099 = vperm.xlu0 %4098, %v4082
    %v4100 = vpop.permute.xlu0 %4099
    %4103 = vset.pattern.permute.xlu0 46
    %4104 = vperm.xlu0 %4103, %v4083
    %v4105 = vpop.permute.xlu0 %4104
    %4108 = vset.pattern.permute.xlu0 46
    %4109 = vperm.xlu0 %4108, %v4084
    %v4110 = vpop.permute.xlu0 %4109
    %4113 = vset.pattern.permute.xlu0 46
    %4114 = vperm.xlu0 %4113, %v4085
    %v4115 = vpop.permute.xlu0 %4114
    %4118 = vset.pattern.permute.xlu0 46
    %4119 = vperm.xlu0 %4118, %v4086
    %v4120 = vpop.permute.xlu0 %4119
    %4123 = vset.pattern.permute.xlu0 46
    %4124 = vperm.xlu0 %4123, %v4087
    %v4125 = vpop.permute.xlu0 %4124
    %4128 = vset.pattern.permute.xlu0 46
    %4129 = vperm.xlu0 %4128, %v4088
    %v4130 = vpop.permute.xlu0 %4129
    %v4132 = vsel %vm4091, %v4095, 0.0
    %v4133 = vsel %vm4091, %v4100, 0.0
    %v4134 = vsel %vm4091, %v4105, 0.0
    %v4135 = vsel %vm4091, %v4110, 0.0
    %v4136 = vsel %vm4091, %v4115, 0.0
    %v4137 = vsel %vm4091, %v4120, 0.0
    %v4138 = vsel %vm4091, %v4125, 0.0
    %v4139 = vsel %vm4091, %v4130, 0.0
    %v4140 = vadd.f32 %v4001, %v4132
    %v4141 = vadd.f32 %v4002, %v4133
    %v4142 = vadd.f32 %v4003, %v4134
    %v4143 = vadd.f32 %v4004, %v4135
    %v4144 = vadd.f32 %v4005, %v4136
    %v4145 = vadd.f32 %v4006, %v4137
    %v4146 = vadd.f32 %v4007, %v4138
    %v4147 = vadd.f32 %v4008, %v4139
    %4156 = vrot.lane.b32.xlu0 %v2902, 44
    %v4157 = vpop.permute.xlu0 %4156
    %4158 = vrot.lane.b32.xlu0 %v2903, 44
    %v4159 = vpop.permute.xlu0 %4158
    %4160 = vrot.lane.b32.xlu0 %v2904, 44
    %v4161 = vpop.permute.xlu0 %4160
    %4162 = vrot.lane.b32.xlu0 %v2905, 44
    %v4163 = vpop.permute.xlu0 %4162
    %4164 = vrot.lane.b32.xlu0 %v2906, 44
    %v4165 = vpop.permute.xlu0 %4164
    %4166 = vrot.lane.b32.xlu0 %v2907, 44
    %v4167 = vpop.permute.xlu0 %4166
    %4168 = vrot.lane.b32.xlu0 %v2908, 44
    %v4169 = vpop.permute.xlu0 %4168
    %4170 = vrot.lane.b32.xlu0 %v2909, 44
    %v4171 = vpop.permute.xlu0 %4170
    %v4180 = vmul.f32 %v3782, %v4157
    %v4181 = vmul.f32 %v3783, %v4159
    %v4182 = vmul.f32 %v3784, %v4161
    %v4183 = vmul.f32 %v3785, %v4163
    %v4184 = vmul.f32 %v3786, %v4165
    %v4185 = vmul.f32 %v3787, %v4167
    %v4186 = vmul.f32 %v3788, %v4169
    %v4187 = vmul.f32 %v3789, %v4171
    %4196 = vrot.lane.b32.xlu0 %v4180, 127
    %v4197 = vpop.permute.xlu0 %4196
    %4198 = vrot.lane.b32.xlu0 %v4181, 127
    %v4199 = vpop.permute.xlu0 %4198
    %4200 = vrot.lane.b32.xlu0 %v4182, 127
    %v4201 = vpop.permute.xlu0 %4200
    %4202 = vrot.lane.b32.xlu0 %v4183, 127
    %v4203 = vpop.permute.xlu0 %4202
    %4204 = vrot.lane.b32.xlu0 %v4184, 127
    %v4205 = vpop.permute.xlu0 %4204
    %4206 = vrot.lane.b32.xlu0 %v4185, 127
    %v4207 = vpop.permute.xlu0 %4206
    %4208 = vrot.lane.b32.xlu0 %v4186, 127
    %v4209 = vpop.permute.xlu0 %4208
    %4210 = vrot.lane.b32.xlu0 %v4187, 127
    %v4211 = vpop.permute.xlu0 %4210
    %v4220 = vadd.f32 %v4180, %v4197
    %v4221 = vadd.f32 %v4181, %v4199
    %v4222 = vadd.f32 %v4182, %v4201
    %v4223 = vadd.f32 %v4183, %v4203
    %v4224 = vadd.f32 %v4184, %v4205
    %v4225 = vadd.f32 %v4185, %v4207
    %v4226 = vadd.f32 %v4186, %v4209
    %v4227 = vadd.f32 %v4187, %v4211
    %vm4228 = vcmp.eq.s32.totalorder %v3791, 4
    %v4229 = vsel %vm4228, 1, 0
    %vm4230 = vcmp.eq.s32.totalorder %v4229, 1
    %4232 = vset.pattern.permute.xlu0 46
    %4233 = vperm.xlu0 %4232, %v4220
    %v4234 = vpop.permute.xlu0 %4233
    %4237 = vset.pattern.permute.xlu0 46
    %4238 = vperm.xlu0 %4237, %v4221
    %v4239 = vpop.permute.xlu0 %4238
    %4242 = vset.pattern.permute.xlu0 46
    %4243 = vperm.xlu0 %4242, %v4222
    %v4244 = vpop.permute.xlu0 %4243
    %4247 = vset.pattern.permute.xlu0 46
    %4248 = vperm.xlu0 %4247, %v4223
    %v4249 = vpop.permute.xlu0 %4248
    %4252 = vset.pattern.permute.xlu0 46
    %4253 = vperm.xlu0 %4252, %v4224
    %v4254 = vpop.permute.xlu0 %4253
    %4257 = vset.pattern.permute.xlu0 46
    %4258 = vperm.xlu0 %4257, %v4225
    %v4259 = vpop.permute.xlu0 %4258
    %4262 = vset.pattern.permute.xlu0 46
    %4263 = vperm.xlu0 %4262, %v4226
    %v4264 = vpop.permute.xlu0 %4263
    %4267 = vset.pattern.permute.xlu0 46
    %4268 = vperm.xlu0 %4267, %v4227
    %v4269 = vpop.permute.xlu0 %4268
    %v4271 = vsel %vm4230, %v4234, 0.0
    %v4272 = vsel %vm4230, %v4239, 0.0
    %v4273 = vsel %vm4230, %v4244, 0.0
    %v4274 = vsel %vm4230, %v4249, 0.0
    %v4275 = vsel %vm4230, %v4254, 0.0
    %v4276 = vsel %vm4230, %v4259, 0.0
    %v4277 = vsel %vm4230, %v4264, 0.0
    %v4278 = vsel %vm4230, %v4269, 0.0
    %v4279 = vadd.f32 %v4140, %v4271
    %v4280 = vadd.f32 %v4141, %v4272
    %v4281 = vadd.f32 %v4142, %v4273
    %v4282 = vadd.f32 %v4143, %v4274
    %v4283 = vadd.f32 %v4144, %v4275
    %v4284 = vadd.f32 %v4145, %v4276
    %v4285 = vadd.f32 %v4146, %v4277
    %v4286 = vadd.f32 %v4147, %v4278
    %4295 = vrot.lane.b32.xlu0 %v3694, 44
    %v4296 = vpop.permute.xlu0 %4295
    %4297 = vrot.lane.b32.xlu0 %v3695, 44
    %v4298 = vpop.permute.xlu0 %4297
    %4299 = vrot.lane.b32.xlu0 %v3696, 44
    %v4300 = vpop.permute.xlu0 %4299
    %4301 = vrot.lane.b32.xlu0 %v3697, 44
    %v4302 = vpop.permute.xlu0 %4301
    %4303 = vrot.lane.b32.xlu0 %v3698, 44
    %v4304 = vpop.permute.xlu0 %4303
    %4305 = vrot.lane.b32.xlu0 %v3699, 44
    %v4306 = vpop.permute.xlu0 %4305
    %4307 = vrot.lane.b32.xlu0 %v3700, 44
    %v4308 = vpop.permute.xlu0 %4307
    %4309 = vrot.lane.b32.xlu0 %v3701, 44
    %v4310 = vpop.permute.xlu0 %4309
    %v4319 = vmul.f32 %v3782, %v4296
    %v4320 = vmul.f32 %v3783, %v4298
    %v4321 = vmul.f32 %v3784, %v4300
    %v4322 = vmul.f32 %v3785, %v4302
    %v4323 = vmul.f32 %v3786, %v4304
    %v4324 = vmul.f32 %v3787, %v4306
    %v4325 = vmul.f32 %v3788, %v4308
    %v4326 = vmul.f32 %v3789, %v4310
    %4335 = vrot.lane.b32.xlu0 %v4319, 127
    %v4336 = vpop.permute.xlu0 %4335
    %4337 = vrot.lane.b32.xlu0 %v4320, 127
    %v4338 = vpop.permute.xlu0 %4337
    %4339 = vrot.lane.b32.xlu0 %v4321, 127
    %v4340 = vpop.permute.xlu0 %4339
    %4341 = vrot.lane.b32.xlu0 %v4322, 127
    %v4342 = vpop.permute.xlu0 %4341
    %4343 = vrot.lane.b32.xlu0 %v4323, 127
    %v4344 = vpop.permute.xlu0 %4343
    %4345 = vrot.lane.b32.xlu0 %v4324, 127
    %v4346 = vpop.permute.xlu0 %4345
    %4347 = vrot.lane.b32.xlu0 %v4325, 127
    %v4348 = vpop.permute.xlu0 %4347
    %4349 = vrot.lane.b32.xlu0 %v4326, 127
    %v4350 = vpop.permute.xlu0 %4349
    %v4359 = vadd.f32 %v4319, %v4336
    %v4360 = vadd.f32 %v4320, %v4338
    %v4361 = vadd.f32 %v4321, %v4340
    %v4362 = vadd.f32 %v4322, %v4342
    %v4363 = vadd.f32 %v4323, %v4344
    %v4364 = vadd.f32 %v4324, %v4346
    %v4365 = vadd.f32 %v4325, %v4348
    %v4366 = vadd.f32 %v4326, %v4350
    %vm4367 = vcmp.eq.s32.totalorder %v3791, 5
    %v4368 = vsel %vm4367, 1, 0
    %vm4369 = vcmp.eq.s32.totalorder %v4368, 1
    %4371 = vset.pattern.permute.xlu0 46
    %4372 = vperm.xlu0 %4371, %v4359
    %v4373 = vpop.permute.xlu0 %4372
    %4376 = vset.pattern.permute.xlu0 46
    %4377 = vperm.xlu0 %4376, %v4360
    %v4378 = vpop.permute.xlu0 %4377
    %4381 = vset.pattern.permute.xlu0 46
    %4382 = vperm.xlu0 %4381, %v4361
    %v4383 = vpop.permute.xlu0 %4382
    %4386 = vset.pattern.permute.xlu0 46
    %4387 = vperm.xlu0 %4386, %v4362
    %v4388 = vpop.permute.xlu0 %4387
    %4391 = vset.pattern.permute.xlu0 46
    %4392 = vperm.xlu0 %4391, %v4363
    %v4393 = vpop.permute.xlu0 %4392
    %4396 = vset.pattern.permute.xlu0 46
    %4397 = vperm.xlu0 %4396, %v4364
    %v4398 = vpop.permute.xlu0 %4397
    %4401 = vset.pattern.permute.xlu0 46
    %4402 = vperm.xlu0 %4401, %v4365
    %v4403 = vpop.permute.xlu0 %4402
    %4406 = vset.pattern.permute.xlu0 46
    %4407 = vperm.xlu0 %4406, %v4366
    %v4408 = vpop.permute.xlu0 %4407
    %v4410 = vsel %vm4369, %v4373, 0.0
    %v4411 = vsel %vm4369, %v4378, 0.0
    %v4412 = vsel %vm4369, %v4383, 0.0
    %v4413 = vsel %vm4369, %v4388, 0.0
    %v4414 = vsel %vm4369, %v4393, 0.0
    %v4415 = vsel %vm4369, %v4398, 0.0
    %v4416 = vsel %vm4369, %v4403, 0.0
    %v4417 = vsel %vm4369, %v4408, 0.0
    %v4418 = vadd.f32 %v4279, %v4410
    %v4419 = vadd.f32 %v4280, %v4411
    %v4420 = vadd.f32 %v4281, %v4412
    %v4421 = vadd.f32 %v4282, %v4413
    %v4422 = vadd.f32 %v4283, %v4414
    %v4423 = vadd.f32 %v4284, %v4415
    %v4424 = vadd.f32 %v4285, %v4416
    %v4425 = vadd.f32 %v4286, %v4417
    %4434 = vrot.lane.b32.xlu0 %v3742, 44
    %v4435 = vpop.permute.xlu0 %4434
    %4436 = vrot.lane.b32.xlu0 %v3743, 44
    %v4437 = vpop.permute.xlu0 %4436
    %4438 = vrot.lane.b32.xlu0 %v3744, 44
    %v4439 = vpop.permute.xlu0 %4438
    %4440 = vrot.lane.b32.xlu0 %v3745, 44
    %v4441 = vpop.permute.xlu0 %4440
    %4442 = vrot.lane.b32.xlu0 %v3746, 44
    %v4443 = vpop.permute.xlu0 %4442
    %4444 = vrot.lane.b32.xlu0 %v3747, 44
    %v4445 = vpop.permute.xlu0 %4444
    %4446 = vrot.lane.b32.xlu0 %v3748, 44
    %v4447 = vpop.permute.xlu0 %4446
    %4448 = vrot.lane.b32.xlu0 %v3749, 44
    %v4449 = vpop.permute.xlu0 %4448
    %v4458 = vmul.f32 %v3782, %v4435
    %v4459 = vmul.f32 %v3783, %v4437
    %v4460 = vmul.f32 %v3784, %v4439
    %v4461 = vmul.f32 %v3785, %v4441
    %v4462 = vmul.f32 %v3786, %v4443
    %v4463 = vmul.f32 %v3787, %v4445
    %v4464 = vmul.f32 %v3788, %v4447
    %v4465 = vmul.f32 %v3789, %v4449
    %4474 = vrot.lane.b32.xlu0 %v4458, 127
    %v4475 = vpop.permute.xlu0 %4474
    %4476 = vrot.lane.b32.xlu0 %v4459, 127
    %v4477 = vpop.permute.xlu0 %4476
    %4478 = vrot.lane.b32.xlu0 %v4460, 127
    %v4479 = vpop.permute.xlu0 %4478
    %4480 = vrot.lane.b32.xlu0 %v4461, 127
    %v4481 = vpop.permute.xlu0 %4480
    %4482 = vrot.lane.b32.xlu0 %v4462, 127
    %v4483 = vpop.permute.xlu0 %4482
    %4484 = vrot.lane.b32.xlu0 %v4463, 127
    %v4485 = vpop.permute.xlu0 %4484
    %4486 = vrot.lane.b32.xlu0 %v4464, 127
    %v4487 = vpop.permute.xlu0 %4486
    %4488 = vrot.lane.b32.xlu0 %v4465, 127
    %v4489 = vpop.permute.xlu0 %4488
    %v4498 = vadd.f32 %v4458, %v4475
    %v4499 = vadd.f32 %v4459, %v4477
    %v4500 = vadd.f32 %v4460, %v4479
    %v4501 = vadd.f32 %v4461, %v4481
    %v4502 = vadd.f32 %v4462, %v4483
    %v4503 = vadd.f32 %v4463, %v4485
    %v4504 = vadd.f32 %v4464, %v4487
    %v4505 = vadd.f32 %v4465, %v4489
    %vm4506 = vcmp.eq.s32.totalorder %v3791, 6
    %v4507 = vsel %vm4506, 1, 0
    %vm4508 = vcmp.eq.s32.totalorder %v4507, 1
    %4510 = vset.pattern.permute.xlu0 46
    %4511 = vperm.xlu0 %4510, %v4498
    %v4512 = vpop.permute.xlu0 %4511
    %4515 = vset.pattern.permute.xlu0 46
    %4516 = vperm.xlu0 %4515, %v4499
    %v4517 = vpop.permute.xlu0 %4516
    %4520 = vset.pattern.permute.xlu0 46
    %4521 = vperm.xlu0 %4520, %v4500
    %v4522 = vpop.permute.xlu0 %4521
    %4525 = vset.pattern.permute.xlu0 46
    %4526 = vperm.xlu0 %4525, %v4501
    %v4527 = vpop.permute.xlu0 %4526
    %4530 = vset.pattern.permute.xlu0 46
    %4531 = vperm.xlu0 %4530, %v4502
    %v4532 = vpop.permute.xlu0 %4531
    %4535 = vset.pattern.permute.xlu0 46
    %4536 = vperm.xlu0 %4535, %v4503
    %v4537 = vpop.permute.xlu0 %4536
    %4540 = vset.pattern.permute.xlu0 46
    %4541 = vperm.xlu0 %4540, %v4504
    %v4542 = vpop.permute.xlu0 %4541
    %4545 = vset.pattern.permute.xlu0 46
    %4546 = vperm.xlu0 %4545, %v4505
    %v4547 = vpop.permute.xlu0 %4546
    %v4549 = vsel %vm4508, %v4512, 0.0
    %v4550 = vsel %vm4508, %v4517, 0.0
    %v4551 = vsel %vm4508, %v4522, 0.0
    %v4552 = vsel %vm4508, %v4527, 0.0
    %v4553 = vsel %vm4508, %v4532, 0.0
    %v4554 = vsel %vm4508, %v4537, 0.0
    %v4555 = vsel %vm4508, %v4542, 0.0
    %v4556 = vsel %vm4508, %v4547, 0.0
    %v4557 = vadd.f32 %v4418, %v4549
    %v4558 = vadd.f32 %v4419, %v4550
    %v4559 = vadd.f32 %v4420, %v4551
    %v4560 = vadd.f32 %v4421, %v4552
    %v4561 = vadd.f32 %v4422, %v4553
    %v4562 = vadd.f32 %v4423, %v4554
    %v4563 = vadd.f32 %v4424, %v4555
    %v4564 = vadd.f32 %v4425, %v4556
    %v4565 = vsel %vm492, %v4557, 0.0
    %v4566 = vsel %vm492, %v4558, 0.0
    %v4567 = vadd.f32 %v4565, %v4566
    %v4568 = vsel %vm492, %v4559, 0.0
    %v4569 = vadd.f32 %v4567, %v4568
    %v4570 = vsel %vm492, %v4560, 0.0
    %v4571 = vadd.f32 %v4569, %v4570
    %v4572 = vsel %vm492, %v4561, 0.0
    %v4573 = vadd.f32 %v4571, %v4572
    %v4574 = vsel %vm492, %v4562, 0.0
    %v4575 = vadd.f32 %v4573, %v4574
    %v4576 = vsel %vm492, %v4563, 0.0
    %v4577 = vadd.f32 %v4575, %v4576
    %v4578 = vsel %vm492, %v4564, 0.0
    %v4579 = vadd.f32 %v4577, %v4578
    %v4580 = vrot.slane %v4579, 4
    %v4581 = vadd.f32 %v4579, %v4580
    %v4582 = vrot.slane %v4581, 2
    %v4583 = vadd.f32 %v4581, %v4582
    %v4584 = vrot.slane %v4583, 1
    %v4585 = vadd.f32 %v4583, %v4584
    %4586 = vst [vmem:[#allocation5] sm:$0xff] 0.0
    %4587 = vst [vmem:[#allocation5 + $0x8] sm:$0xff] 0.0
    %4588 = vst [vmem:[#allocation5 + $0x10] sm:$0xff] 0.0
    %4589 = vst [vmem:[#allocation5 + $0x18] sm:$0xff] 0.0
    %4590 = vst [vmem:[#allocation5 + $0x20] sm:$0xff] 0.0
    %4591 = vst [vmem:[#allocation5 + $0x28] sm:$0xff] 0.0
    %4592 = vst [vmem:[#allocation5 + $0x30] sm:$0xff] 0.0
    %4593 = vst [vmem:[#allocation5 + $0x38] sm:$0xff] 0.0
    %vm4594 = vcmask 15360
    %4595 = vst.msk [vmem:[#allocation5] sm:$0xff] %vm4594, %v2598
    %4596 = vst.msk [vmem:[#allocation5 + $0x8] sm:$0xff] %vm4594, %v2599
    %4597 = vst.msk [vmem:[#allocation5 + $0x10] sm:$0xff] %vm4594, %v2600
    %4598 = vst.msk [vmem:[#allocation5 + $0x18] sm:$0xff] %vm4594, %v2601
    %4599 = vst.msk [vmem:[#allocation5 + $0x20] sm:$0xff] %vm4594, %v2602
    %4600 = vst.msk [vmem:[#allocation5 + $0x28] sm:$0xff] %vm4594, %v2603
    %4601 = vst.msk [vmem:[#allocation5 + $0x30] sm:$0xff] %vm4594, %v2604
    %4602 = vst.msk [vmem:[#allocation5 + $0x38] sm:$0xff] %vm4594, %v2605
    %vm4603 = vcmask 64528
    %4604 = vst.msk [vmem:[#allocation5] sm:$0xff] %vm4603, %v2488
    %4605 = vst.msk [vmem:[#allocation5 + $0x8] sm:$0xff] %vm4603, %v2493
    %4606 = vst.msk [vmem:[#allocation5 + $0x10] sm:$0xff] %vm4603, %v2498
    %4607 = vst.msk [vmem:[#allocation5 + $0x18] sm:$0xff] %vm4603, %v2503
    %4608 = vst.msk [vmem:[#allocation5 + $0x20] sm:$0xff] %vm4603, %v2508
    %4609 = vst.msk [vmem:[#allocation5 + $0x28] sm:$0xff] %vm4603, %v2513
    %4610 = vst.msk [vmem:[#allocation5 + $0x30] sm:$0xff] %vm4603, %v2518
    %4611 = vst.msk [vmem:[#allocation5 + $0x38] sm:$0xff] %vm4603, %v2523
    %4613 = vrot.lane.b32.xlu0 %v4585, 8
    %v4614 = vpop.permute.xlu0 %4613
    %vm4616 = vcmask 122944
    %4617 = vst.msk [vmem:[#allocation5] sm:$0x1] %vm4616, %v4614
    // Predicated region
    $region18: #{tpu_custom_call.1} parent=1 // pred_check
      _
    $region19: #{tpu_custom_call.1} parent=1 // pred_check_branch
      %4619 = sbr.rel (0) target = $region21
    $region20: #{tpu_custom_call.1} parent=1 // pred_region
      %s4621 = ssub.s32 1024, 1024
      %4622 = vsyncadd [#allocation4], %s4621
      %s4623 = sshll.u32 [#allocation5], 4
      %s4624 = int_to_ptr.vmem [resolvable:$true] %s4623
      %4629 = dma.vmem_to_hbm [thread:$0]  %s4624, 1024, %s3, [#allocation4], 128, 128, 8
    $region21: #{tpu_custom_call.1} parent=1 // pred_fallthru
      _
    // Predicated region
    $region22: #{tpu_custom_call.1} parent=1 // pred_check
      _
    $region23: #{tpu_custom_call.1} parent=1 // pred_check_branch
      %4631 = sbr.rel (0) target = $region25
    $region24: #{tpu_custom_call.1} parent=1 // pred_region
      %4632 = dma.done [#allocation4], 1024
    $region25: #{tpu_custom_call.1} parent=1 // pred_fallthru
      _
    %4633 = vsyncpa [#allocation3], 1
    %4634 = vsyncpa [#allocation4], 1

</llo_original>
